<compile_context>
chip_gen: v7x
topology: tpu7x:2x2x1
jax: 0.10.0
libtpu: 0.0.40
codegen_flags: <defaults>
</compile_context>

<pallas_src>
import functools
import math

import numpy as np
import jax
import jax.numpy as jnp
from jax.experimental import pallas as pl
from jax.experimental.pallas import tpu as pltpu

# ----------------- small, module-consistent configuration -------------------
BATCH = 2          # batch size
SEQ = 8            # number of sliding windows per sample (LSTM seq length)
WINDOW = 16        # window_size (temporal length of a window)
NUM_JOINTS = 4     # conv in-channels
NUM_ATTRIBS = 3    # per-joint attributes
CNN_OUT_CH = 8     # cnn_out_channel
EMBED = 32         # feature_embed_size (== lstm_hidden_size for the MHA)
HIDDEN = 32        # lstm_hidden_size
N_HEAD = 4
KSIZE = 3
NUM_LSTM_LAYERS = 2


# =========================== fused Pallas kernel =============================
def _fused_kernel(x_ref, cwt_ref, cb_ref, fcw_ref, fcb_ref,
                  wih0_ref, whh0_ref, b0_ref, wih1_ref, whh1_ref, b1_ref,
                  inw_ref, inb_ref, outw_ref, outb_ref, mbias_ref,
                  out_ref, attnw_ref, *, B, S):
    """Whole SK_WE forward for one (B, S) batch, everything resident in VMEM.

    x_ref     : (S*B, WINDOW*J*A)  time-major flattened windows
    cwt_ref   : (WINDOW*J*A, P*Co) conv-as-Toeplitz weight (bf16), P = WINDOW*A
    fcw_ref   : (P*Co, E)          NHWC-permuted fc weight (bf16)
    mbias_ref : (B, S)             additive key-padding bias (-1e9 on padded keys)
    out_ref   : (B, E)             ReLU(sum_t attn_out)
    attnw_ref : (B, S, S)          head-averaged attention weights
    """
    f32 = jnp.float32
    H = HIDDEN
    E = EMBED
    nh = N_HEAD
    hd = E // nh
    scale = 1.0 / math.sqrt(hd)

    # ---------------- CNN feature extractor (conv -> ReLU -> Linear) --------
    # TODO(synk): the CNN submodule is not defined in the reference source; a
    # faithful stand-in is used: Conv2d(J, Co, k, pad=k//2) -> ReLU -> flatten
    # -> Linear(E). The conv is a single GEMM against a Toeplitz weight.
    x = x_ref[...].astype(jnp.bfloat16)                              # (S*B, 192)
    conv = jnp.dot(x, cwt_ref[...], preferred_element_type=f32) + cb_ref[...]
    conv = jnp.maximum(conv, 0.0)                                    # (S*B, 384) NHWC-flat
    embed = jnp.dot(conv.astype(jnp.bfloat16), fcw_ref[...],
                    preferred_element_type=f32) + fcb_ref[...]       # (S*B, E) time-major

    # ---------------- 2-layer LSTM (gate order i, f, g, o) ------------------
    # Layer-0 input contribution for all time steps as one GEMM.
    xg0 = jnp.dot(embed, wih0_ref[...], preferred_element_type=f32) + b0_ref[...]

    whh0 = whh0_ref[...]
    wih1 = wih1_ref[...]
    whh1 = whh1_ref[...]
    b1 = b1_ref[...]

    def gates_to_hc(g, c_prev):
        i = jax.nn.sigmoid(g[:, 0 * H:1 * H])
        f = jax.nn.sigmoid(g[:, 1 * H:2 * H])
        gg = jnp.tanh(g[:, 2 * H:3 * H])
        o = jax.nn.sigmoid(g[:, 3 * H:4 * H])
        c = f * c_prev + i * gg
        h = o * jnp.tanh(c)
        return h, c

    h0 = jnp.zeros((B, H), f32)
    c0 = jnp.zeros((B, H), f32)
    h1 = jnp.zeros((B, H), f32)
    c1 = jnp.zeros((B, H), f32)
    h1_list = []
    # Fully unrolled recurrence (S is small and static) — the true critical
    # path; unrolling lets the scheduler overlap MXU gate GEMMs with EUP work.
    for t in range(S):
        g0 = xg0[t * B:(t + 1) * B, :] + jnp.dot(h0, whh0,
                                                 preferred_element_type=f32)
        h0, c0 = gates_to_hc(g0, c0)
        g1 = (jnp.dot(h0, wih1, preferred_element_type=f32) + b1
              + jnp.dot(h1, whh1, preferred_element_type=f32))
        h1, c1 = gates_to_hc(g1, c1)
        h1_list.append(h1)
    # TODO(synk): inter-layer lstm_dropout omitted (inference / eval mode).

    # ------- multi-head self-attention + time-sum + out-proj + ReLU ---------
    # Batch-major hidden states (row b*S + t) so per-batch rows are contiguous.
    h_bm = jnp.concatenate(
        [h1_list[t][b:b + 1, :] for b in range(B) for t in range(S)], axis=0)  # (B*S, H)
    # One QKV projection GEMM for all (batch, time) rows.
    qkv_all = jnp.dot(h_bm, inw_ref[...], preferred_element_type=f32) + inb_ref[...]

    outw = outw_ref[...]
    mbias = mbias_ref[...]                                           # (B, S)

    ctx_rows = []
    for b in range(B):
        qkv = qkv_all[b * S:(b + 1) * S, :]                          # (S, 3E)
        mb = mbias[b:b + 1, :]                                       # (1, S)
        p_sum = jnp.zeros((S, S), f32)
        head_ctx = []
        for hh in range(nh):
            q = qkv[:, hh * hd:(hh + 1) * hd]
            k = qkv[:, E + hh * hd:E + (hh + 1) * hd]
            v = qkv[:, 2 * E + hh * hd:2 * E + (hh + 1) * hd]
            s = jnp.dot(q, k.T, preferred_element_type=f32) * scale + mb
            s = s - jnp.max(s, axis=-1, keepdims=True)
            p = jnp.exp(s)
            p = p * pl.reciprocal(jnp.sum(p, axis=-1, keepdims=True), approx=True)
            p_sum = p_sum + p
            ctx = jnp.dot(p, v, preferred_element_type=f32)          # (S, hd)
            # sum over time commutes with the (linear) out-projection
            head_ctx.append(jnp.sum(ctx, axis=0, keepdims=True))     # (1, hd)
        attnw_ref[b] = p_sum * (1.0 / nh)    # PyTorch averages heads
        ctx_rows.append(jnp.concatenate(head_ctx, axis=1))           # (1, E)

    ctx_sums = jnp.concatenate(ctx_rows, axis=0)                     # (B, E)
    # Single out-projection GEMM for all batches; bias is summed S times by
    # the time-sum.
    out = (jnp.dot(ctx_sums, outw, preferred_element_type=f32)
           + jnp.float32(S) * outb_ref[...])
    out_ref[...] = jnp.maximum(out, 0.0)


# =============================== forward =====================================
def sk_we_forward(prep, inp, input_mask, input_len):
    """inp: (B, S, window_size, num_joints, num_attribs). Single pallas_call."""
    B, S = inp.shape[0], inp.shape[1]
    # Time-major rows; per-window flattening stays in natural (window, joint,
    # attrib) order — the Toeplitz conv weight absorbs the NCHW transpose.
    x2d = jnp.transpose(inp, (1, 0, 2, 3, 4)).reshape(
        S * B, WINDOW * NUM_JOINTS * NUM_ATTRIBS)
    mask_bias = input_mask[:, :S].astype(jnp.float32) * jnp.float32(-1e9)

    out, attn_w = pl.pallas_call(
        functools.partial(_fused_kernel, B=B, S=S),
        out_shape=(jax.ShapeDtypeStruct((B, EMBED), jnp.float32),
                   jax.ShapeDtypeStruct((B, S, S), jnp.float32)),
        # No grid: one invocation, all operands as full-array VMEM refs
        # (total live data < 1 MB, far under VMEM on v5e/v6e/v7x).
    )(x2d, prep["conv_wt"], prep["conv_b_w"], prep["fc_w_t"], prep["fc_b"],
      prep["w_ih0_t"], prep["w_hh0_t"], prep["b0"],
      prep["w_ih1_t"], prep["w_hh1_t"], prep["b1"],
      prep["in_w_t"], prep["in_b"], prep["out_w_t"], prep["out_b"],
      mask_bias)
    return out, attn_w


# ======================= one-time parameter preparation ======================
def prepare_params(p):
    """Host-side, run once: pre-transpose weights, build the conv-as-Toeplitz
    matrix and NHWC-permuted fc weight so the forward needs no per-call
    transposes and runs as a single Pallas kernel."""
    Co, C, k = CNN_OUT_CH, NUM_JOINTS, KSIZE
    Hs, Ws = WINDOW, NUM_ATTRIBS            # conv spatial dims (H=window, W=attribs)
    pad = k // 2
    wnp = np.asarray(p["conv_w"], dtype=np.float32)          # (Co, C, k, k)

    # Toeplitz matrix: rows index the flattened per-window input in natural
    # (window, joint, attrib) order; cols index the NHWC-flat conv output.
    toep = np.zeros((Hs * C * Ws, Hs * Ws * Co), dtype=np.float32)
    for c in range(C):
        for dh in range(k):
            for dw in range(k):
                w_tap = wnp[:, c, dh, dw]                    # (Co,)
                for oh in range(Hs):
                    ih = oh + dh - pad
                    if not 0 <= ih < Hs:
                        continue
                    for ow in range(Ws):
                        iw = ow + dw - pad
                        if not 0 <= iw < Ws:
                            continue
                        row = ih * (C * Ws) + c * Ws + iw
                        col = (oh * Ws + ow) * Co
                        toep[row, col:col + Co] = w_tap

    conv_b_wide = np.tile(np.asarray(p["conv_b"], np.float32), Hs * Ws)[None, :]

    # fc weight permuted from NCHW-flat columns to NHWC-flat rows.
    fc_w = np.asarray(p["fc_w"], np.float32).reshape(EMBED, Co, Hs, Ws)
    fc_w_t = fc_w.transpose(2, 3, 1, 0).reshape(Hs * Ws * Co, EMBED)

    f32 = jnp.float32
    return {
        "conv_wt": jnp.asarray(toep, jnp.bfloat16),
        "conv_b_w": jnp.asarray(conv_b_wide, f32),
        "fc_w_t": jnp.asarray(fc_w_t, jnp.bfloat16),
        "fc_b": jnp.asarray(p["fc_b"], f32)[None, :],
        "w_ih0_t": jnp.asarray(p["w_ih0"], f32).T,
        "w_hh0_t": jnp.asarray(p["w_hh0"], f32).T,
        "b0": (jnp.asarray(p["b_ih0"], f32) + jnp.asarray(p["b_hh0"], f32))[None, :],
        "w_ih1_t": jnp.asarray(p["w_ih1"], f32).T,
        "w_hh1_t": jnp.asarray(p["w_hh1"], f32).T,
        "b1": (jnp.asarray(p["b_ih1"], f32) + jnp.asarray(p["b_hh1"], f32))[None, :],
        "in_w_t": jnp.asarray(p["in_proj_w"], f32).T,
        "in_b": jnp.asarray(p["in_proj_b"], f32)[None, :],
        "out_w_t": jnp.asarray(p["out_proj_w"], f32).T,
        "out_b": jnp.asarray(p["out_proj_b"], f32)[None, :],
    }


# ============================ parameter init =================================
def init_params(key):
    ks = jax.random.split(key, 16)
    n = lambda k, shp, s=0.1: (s * jax.random.normal(k, shp)).astype(jnp.float32)
    flat = CNN_OUT_CH * WINDOW * NUM_ATTRIBS
    return {
        # CNN (stand-in, PyTorch layouts)
        "conv_w": n(ks[0], (CNN_OUT_CH, NUM_JOINTS, KSIZE, KSIZE)),
        "conv_b": n(ks[1], (CNN_OUT_CH,)),
        "fc_w": n(ks[2], (EMBED, flat)),
        "fc_b": n(ks[3], (EMBED,)),
        # LSTM layer 0
        "w_ih0": n(ks[4], (4 * HIDDEN, EMBED)),
        "w_hh0": n(ks[5], (4 * HIDDEN, HIDDEN)),
        "b_ih0": n(ks[6], (4 * HIDDEN,)),
        "b_hh0": n(ks[7], (4 * HIDDEN,)),
        # LSTM layer 1
        "w_ih1": n(ks[8], (4 * HIDDEN, HIDDEN)),
        "w_hh1": n(ks[9], (4 * HIDDEN, HIDDEN)),
        "b_ih1": n(ks[10], (4 * HIDDEN,)),
        "b_hh1": n(ks[11], (4 * HIDDEN,)),
        # MultiheadAttention
        "in_proj_w": n(ks[12], (3 * HIDDEN, HIDDEN)),
        "in_proj_b": n(ks[13], (3 * HIDDEN,)),
        "out_proj_w": n(ks[14], (HIDDEN, HIDDEN)),
        "out_proj_b": n(ks[15], (HIDDEN,)),
    }


if __name__ == "__main__":
    key = jax.random.PRNGKey(0)
    k_param, k_x = jax.random.split(key)
    params = init_params(k_param)
    prep = prepare_params(params)          # one-time weight preprocessing

    x = jax.random.normal(
        k_x, (BATCH, SEQ, WINDOW, NUM_JOINTS, NUM_ATTRIBS), dtype=jnp.float32)
    input_mask = jnp.zeros((BATCH, SEQ), dtype=bool).at[0, -2:].set(True)
    input_len = jnp.array([SEQ, SEQ - 2], dtype=jnp.int32)  # unused by forward

    fwd = jax.jit(sk_we_forward)
    attn_output, attn_weight = fwd(prep, x, input_mask, input_len)
    jax.block_until_ready((attn_output, attn_weight))

    assert attn_output.shape == (BATCH, EMBED)
    assert attn_weight.shape == (BATCH, SEQ, SEQ)
    assert bool(jnp.all(jnp.isfinite(attn_output)))
    assert bool(jnp.all(attn_output >= 0.0))  # post-ReLU
    assert bool(jnp.all(jnp.isfinite(attn_weight)))
    # masked keys (batch 0, last 2 windows) must carry ~zero attention weight
    assert bool(jnp.all(attn_weight[0, :, -2:] < 1e-6))
    print("KERNEL_OK")
</pallas_src>

<mosaic_0001>
module attributes {stable_mosaic.version = 11 : i64} {
  func.func @_fused_kernel(%arg0: memref<16x192xf32, #tpu.memory_space<vmem>>, %arg1: memref<192x384xbf16, #tpu.memory_space<vmem>>, %arg2: memref<1x384xf32, #tpu.memory_space<vmem>>, %arg3: memref<384x32xbf16, #tpu.memory_space<vmem>>, %arg4: memref<1x32xf32, #tpu.memory_space<vmem>>, %arg5: memref<32x128xf32, #tpu.memory_space<vmem>>, %arg6: memref<32x128xf32, #tpu.memory_space<vmem>>, %arg7: memref<1x128xf32, #tpu.memory_space<vmem>>, %arg8: memref<32x128xf32, #tpu.memory_space<vmem>>, %arg9: memref<32x128xf32, #tpu.memory_space<vmem>>, %arg10: memref<1x128xf32, #tpu.memory_space<vmem>>, %arg11: memref<32x96xf32, #tpu.memory_space<vmem>>, %arg12: memref<1x96xf32, #tpu.memory_space<vmem>>, %arg13: memref<32x32xf32, #tpu.memory_space<vmem>>, %arg14: memref<1x32xf32, #tpu.memory_space<vmem>>, %arg15: memref<2x8xf32, #tpu.memory_space<vmem>>, %arg16: memref<2x32xf32, #tpu.memory_space<vmem>>, %arg17: memref<2x8x8xf32, #tpu.memory_space<vmem>>) attributes {dimension_semantics = [], scalar_prefetch = 0 : i64, scratch_operands = 0 : i64, tpu.core_type = #tpu.core_type<tc>} {
    %c0 = arith.constant 0 : index
    %c0_0 = arith.constant 0 : index
    %0 = vector.load %arg0[%c0, %c0_0] : memref<16x192xf32, #tpu.memory_space<vmem>>, vector<16x192xf32>
    %1 = arith.truncf %0 : vector<16x192xf32> to vector<16x192xbf16>
    %c0_1 = arith.constant 0 : index
    %c0_2 = arith.constant 0 : index
    %2 = vector.load %arg1[%c0_1, %c0_2] : memref<192x384xbf16, #tpu.memory_space<vmem>>, vector<192x384xbf16>
    %cst = arith.constant dense<0.000000e+00> : vector<16x384xf32>
    %3 = tpu.matmul %1, %2, %cst {dimension_numbers = #tpu.dot_dimension_numbers<[1], [0], [0], [1], [0, 0, 1, 1], [], []>} : vector<16x192xbf16>, vector<192x384xbf16>, vector<16x384xf32> -> vector<16x384xf32>
    %c0_3 = arith.constant 0 : index
    %c0_4 = arith.constant 0 : index
    %4 = vector.load %arg2[%c0_3, %c0_4] : memref<1x384xf32, #tpu.memory_space<vmem>>, vector<1x384xf32>
    %5 = vector.broadcast %4 : vector<1x384xf32> to vector<16x384xf32>
    %6 = arith.addf %3, %5 : vector<16x384xf32>
    %cst_5 = arith.constant 0.000000e+00 : f32
    %7 = vector.broadcast %cst_5 : f32 to vector<16x384xf32>
    %8 = arith.maximumf %6, %7 : vector<16x384xf32>
    %9 = arith.truncf %8 : vector<16x384xf32> to vector<16x384xbf16>
    %c0_6 = arith.constant 0 : index
    %c0_7 = arith.constant 0 : index
    %10 = vector.load %arg3[%c0_6, %c0_7] : memref<384x32xbf16, #tpu.memory_space<vmem>>, vector<384x32xbf16>
    %cst_8 = arith.constant dense<0.000000e+00> : vector<16x32xf32>
    %11 = tpu.matmul %9, %10, %cst_8 {dimension_numbers = #tpu.dot_dimension_numbers<[1], [0], [0], [1], [0, 0, 1, 1], [], []>} : vector<16x384xbf16>, vector<384x32xbf16>, vector<16x32xf32> -> vector<16x32xf32>
    %c0_9 = arith.constant 0 : index
    %c0_10 = arith.constant 0 : index
    %12 = vector.load %arg4[%c0_9, %c0_10] : memref<1x32xf32, #tpu.memory_space<vmem>>, vector<1x32xf32>
    %13 = vector.broadcast %12 : vector<1x32xf32> to vector<16x32xf32>
    %14 = arith.addf %11, %13 : vector<16x32xf32>
    %c0_11 = arith.constant 0 : index
    %c0_12 = arith.constant 0 : index
    %15 = vector.load %arg5[%c0_11, %c0_12] : memref<32x128xf32, #tpu.memory_space<vmem>>, vector<32x128xf32>
    %cst_13 = arith.constant dense<0.000000e+00> : vector<16x128xf32>
    %16 = tpu.matmul %14, %15, %cst_13 {dimension_numbers = #tpu.dot_dimension_numbers<[1], [0], [0], [1], [0, 0, 1, 1], [], []>} : vector<16x32xf32>, vector<32x128xf32>, vector<16x128xf32> -> vector<16x128xf32>
    %c0_14 = arith.constant 0 : index
    %c0_15 = arith.constant 0 : index
    %17 = vector.load %arg7[%c0_14, %c0_15] : memref<1x128xf32, #tpu.memory_space<vmem>>, vector<1x128xf32>
    %18 = vector.broadcast %17 : vector<1x128xf32> to vector<16x128xf32>
    %19 = arith.addf %16, %18 : vector<16x128xf32>
    %c0_16 = arith.constant 0 : index
    %c0_17 = arith.constant 0 : index
    %20 = vector.load %arg6[%c0_16, %c0_17] : memref<32x128xf32, #tpu.memory_space<vmem>>, vector<32x128xf32>
    %c0_18 = arith.constant 0 : index
    %c0_19 = arith.constant 0 : index
    %21 = vector.load %arg8[%c0_18, %c0_19] : memref<32x128xf32, #tpu.memory_space<vmem>>, vector<32x128xf32>
    %c0_20 = arith.constant 0 : index
    %c0_21 = arith.constant 0 : index
    %22 = vector.load %arg9[%c0_20, %c0_21] : memref<32x128xf32, #tpu.memory_space<vmem>>, vector<32x128xf32>
    %c0_22 = arith.constant 0 : index
    %c0_23 = arith.constant 0 : index
    %23 = vector.load %arg10[%c0_22, %c0_23] : memref<1x128xf32, #tpu.memory_space<vmem>>, vector<1x128xf32>
    %cst_24 = arith.constant 0.000000e+00 : f32
    %24 = vector.broadcast %cst_24 : f32 to vector<2x32xf32>
    %cst_25 = arith.constant 0.000000e+00 : f32
    %25 = vector.broadcast %cst_25 : f32 to vector<2x32xf32>
    %cst_26 = arith.constant 0.000000e+00 : f32
    %26 = vector.broadcast %cst_26 : f32 to vector<2x32xf32>
    %cst_27 = arith.constant 0.000000e+00 : f32
    %27 = vector.broadcast %cst_27 : f32 to vector<2x32xf32>
    %28 = vector.extract_strided_slice %19 {offsets = [0, 0], sizes = [2, 128], strides = [1, 1]} : vector<16x128xf32> to vector<2x128xf32>
    %cst_28 = arith.constant dense<0.000000e+00> : vector<2x128xf32>
    %29 = tpu.matmul %24, %20, %cst_28 {dimension_numbers = #tpu.dot_dimension_numbers<[1], [0], [0], [1], [0, 0, 1, 1], [], []>} : vector<2x32xf32>, vector<32x128xf32>, vector<2x128xf32> -> vector<2x128xf32>
    %30 = arith.addf %28, %29 : vector<2x128xf32>
    %31 = vector.extract_strided_slice %30 {offsets = [0, 0], sizes = [2, 32], strides = [1, 1]} : vector<2x128xf32> to vector<2x32xf32>
    %32 = arith.negf %31 : vector<2x32xf32>
    %33 = math.exp %32 : vector<2x32xf32>
    %cst_29 = arith.constant 1.000000e+00 : f32
    %34 = vector.broadcast %cst_29 : f32 to vector<2x32xf32>
    %35 = arith.addf %34, %33 : vector<2x32xf32>
    %36 = arith.divf %34, %35 : vector<2x32xf32>
    %37 = vector.extract_strided_slice %30 {offsets = [0, 32], sizes = [2, 32], strides = [1, 1]} : vector<2x128xf32> to vector<2x32xf32>
    %38 = arith.negf %37 : vector<2x32xf32>
    %39 = math.exp %38 : vector<2x32xf32>
    %cst_30 = arith.constant 1.000000e+00 : f32
    %40 = vector.broadcast %cst_30 : f32 to vector<2x32xf32>
    %41 = arith.addf %40, %39 : vector<2x32xf32>
    %42 = arith.divf %40, %41 : vector<2x32xf32>
    %43 = vector.extract_strided_slice %30 {offsets = [0, 64], sizes = [2, 32], strides = [1, 1]} : vector<2x128xf32> to vector<2x32xf32>
    %44 = math.tanh %43 : vector<2x32xf32>
    %45 = vector.extract_strided_slice %30 {offsets = [0, 96], sizes = [2, 32], strides = [1, 1]} : vector<2x128xf32> to vector<2x32xf32>
    %46 = arith.negf %45 : vector<2x32xf32>
    %47 = math.exp %46 : vector<2x32xf32>
    %cst_31 = arith.constant 1.000000e+00 : f32
    %48 = vector.broadcast %cst_31 : f32 to vector<2x32xf32>
    %49 = arith.addf %48, %47 : vector<2x32xf32>
    %50 = arith.divf %48, %49 : vector<2x32xf32>
    %51 = arith.mulf %42, %25 : vector<2x32xf32>
    %52 = arith.mulf %36, %44 : vector<2x32xf32>
    %53 = arith.addf %51, %52 : vector<2x32xf32>
    %54 = math.tanh %53 : vector<2x32xf32>
    %55 = arith.mulf %50, %54 : vector<2x32xf32>
    %cst_32 = arith.constant dense<0.000000e+00> : vector<2x128xf32>
    %56 = tpu.matmul %55, %21, %cst_32 {dimension_numbers = #tpu.dot_dimension_numbers<[1], [0], [0], [1], [0, 0, 1, 1], [], []>} : vector<2x32xf32>, vector<32x128xf32>, vector<2x128xf32> -> vector<2x128xf32>
    %57 = vector.broadcast %23 : vector<1x128xf32> to vector<2x128xf32>
    %58 = arith.addf %56, %57 : vector<2x128xf32>
    %cst_33 = arith.constant dense<0.000000e+00> : vector<2x128xf32>
    %59 = tpu.matmul %26, %22, %cst_33 {dimension_numbers = #tpu.dot_dimension_numbers<[1], [0], [0], [1], [0, 0, 1, 1], [], []>} : vector<2x32xf32>, vector<32x128xf32>, vector<2x128xf32> -> vector<2x128xf32>
    %60 = arith.addf %58, %59 : vector<2x128xf32>
    %61 = vector.extract_strided_slice %60 {offsets = [0, 0], sizes = [2, 32], strides = [1, 1]} : vector<2x128xf32> to vector<2x32xf32>
    %62 = arith.negf %61 : vector<2x32xf32>
    %63 = math.exp %62 : vector<2x32xf32>
    %cst_34 = arith.constant 1.000000e+00 : f32
    %64 = vector.broadcast %cst_34 : f32 to vector<2x32xf32>
    %65 = arith.addf %64, %63 : vector<2x32xf32>
    %66 = arith.divf %64, %65 : vector<2x32xf32>
    %67 = vector.extract_strided_slice %60 {offsets = [0, 32], sizes = [2, 32], strides = [1, 1]} : vector<2x128xf32> to vector<2x32xf32>
    %68 = arith.negf %67 : vector<2x32xf32>
    %69 = math.exp %68 : vector<2x32xf32>
    %cst_35 = arith.constant 1.000000e+00 : f32
    %70 = vector.broadcast %cst_35 : f32 to vector<2x32xf32>
    %71 = arith.addf %70, %69 : vector<2x32xf32>
    %72 = arith.divf %70, %71 : vector<2x32xf32>
    %73 = vector.extract_strided_slice %60 {offsets = [0, 64], sizes = [2, 32], strides = [1, 1]} : vector<2x128xf32> to vector<2x32xf32>
    %74 = math.tanh %73 : vector<2x32xf32>
    %75 = vector.extract_strided_slice %60 {offsets = [0, 96], sizes = [2, 32], strides = [1, 1]} : vector<2x128xf32> to vector<2x32xf32>
    %76 = arith.negf %75 : vector<2x32xf32>
    %77 = math.exp %76 : vector<2x32xf32>
    %cst_36 = arith.constant 1.000000e+00 : f32
    %78 = vector.broadcast %cst_36 : f32 to vector<2x32xf32>
    %79 = arith.addf %78, %77 : vector<2x32xf32>
    %80 = arith.divf %78, %79 : vector<2x32xf32>
    %81 = arith.mulf %72, %27 : vector<2x32xf32>
    %82 = arith.mulf %66, %74 : vector<2x32xf32>
    %83 = arith.addf %81, %82 : vector<2x32xf32>
    %84 = math.tanh %83 : vector<2x32xf32>
    %85 = arith.mulf %80, %84 : vector<2x32xf32>
    %86 = vector.extract_strided_slice %19 {offsets = [2, 0], sizes = [2, 128], strides = [1, 1]} : vector<16x128xf32> to vector<2x128xf32>
    %cst_37 = arith.constant dense<0.000000e+00> : vector<2x128xf32>
    %87 = tpu.matmul %55, %20, %cst_37 {dimension_numbers = #tpu.dot_dimension_numbers<[1], [0], [0], [1], [0, 0, 1, 1], [], []>} : vector<2x32xf32>, vector<32x128xf32>, vector<2x128xf32> -> vector<2x128xf32>
    %88 = arith.addf %86, %87 : vector<2x128xf32>
    %89 = vector.extract_strided_slice %88 {offsets = [0, 0], sizes = [2, 32], strides = [1, 1]} : vector<2x128xf32> to vector<2x32xf32>
    %90 = arith.negf %89 : vector<2x32xf32>
    %91 = math.exp %90 : vector<2x32xf32>
    %cst_38 = arith.constant 1.000000e+00 : f32
    %92 = vector.broadcast %cst_38 : f32 to vector<2x32xf32>
    %93 = arith.addf %92, %91 : vector<2x32xf32>
    %94 = arith.divf %92, %93 : vector<2x32xf32>
    %95 = vector.extract_strided_slice %88 {offsets = [0, 32], sizes = [2, 32], strides = [1, 1]} : vector<2x128xf32> to vector<2x32xf32>
    %96 = arith.negf %95 : vector<2x32xf32>
    %97 = math.exp %96 : vector<2x32xf32>
    %cst_39 = arith.constant 1.000000e+00 : f32
    %98 = vector.broadcast %cst_39 : f32 to vector<2x32xf32>
    %99 = arith.addf %98, %97 : vector<2x32xf32>
    %100 = arith.divf %98, %99 : vector<2x32xf32>
    %101 = vector.extract_strided_slice %88 {offsets = [0, 64], sizes = [2, 32], strides = [1, 1]} : vector<2x128xf32> to vector<2x32xf32>
    %102 = math.tanh %101 : vector<2x32xf32>
    %103 = vector.extract_strided_slice %88 {offsets = [0, 96], sizes = [2, 32], strides = [1, 1]} : vector<2x128xf32> to vector<2x32xf32>
    %104 = arith.negf %103 : vector<2x32xf32>
    %105 = math.exp %104 : vector<2x32xf32>
    %cst_40 = arith.constant 1.000000e+00 : f32
    %106 = vector.broadcast %cst_40 : f32 to vector<2x32xf32>
    %107 = arith.addf %106, %105 : vector<2x32xf32>
    %108 = arith.divf %106, %107 : vector<2x32xf32>
    %109 = arith.mulf %100, %53 : vector<2x32xf32>
    %110 = arith.mulf %94, %102 : vector<2x32xf32>
    %111 = arith.addf %109, %110 : vector<2x32xf32>
    %112 = math.tanh %111 : vector<2x32xf32>
    %113 = arith.mulf %108, %112 : vector<2x32xf32>
    %cst_41 = arith.constant dense<0.000000e+00> : vector<2x128xf32>
    %114 = tpu.matmul %113, %21, %cst_41 {dimension_numbers = #tpu.dot_dimension_numbers<[1], [0], [0], [1], [0, 0, 1, 1], [], []>} : vector<2x32xf32>, vector<32x128xf32>, vector<2x128xf32> -> vector<2x128xf32>
    %115 = vector.broadcast %23 : vector<1x128xf32> to vector<2x128xf32>
    %116 = arith.addf %114, %115 : vector<2x128xf32>
    %cst_42 = arith.constant dense<0.000000e+00> : vector<2x128xf32>
    %117 = tpu.matmul %85, %22, %cst_42 {dimension_numbers = #tpu.dot_dimension_numbers<[1], [0], [0], [1], [0, 0, 1, 1], [], []>} : vector<2x32xf32>, vector<32x128xf32>, vector<2x128xf32> -> vector<2x128xf32>
    %118 = arith.addf %116, %117 : vector<2x128xf32>
    %119 = vector.extract_strided_slice %118 {offsets = [0, 0], sizes = [2, 32], strides = [1, 1]} : vector<2x128xf32> to vector<2x32xf32>
    %120 = arith.negf %119 : vector<2x32xf32>
    %121 = math.exp %120 : vector<2x32xf32>
    %cst_43 = arith.constant 1.000000e+00 : f32
    %122 = vector.broadcast %cst_43 : f32 to vector<2x32xf32>
    %123 = arith.addf %122, %121 : vector<2x32xf32>
    %124 = arith.divf %122, %123 : vector<2x32xf32>
    %125 = vector.extract_strided_slice %118 {offsets = [0, 32], sizes = [2, 32], strides = [1, 1]} : vector<2x128xf32> to vector<2x32xf32>
    %126 = arith.negf %125 : vector<2x32xf32>
    %127 = math.exp %126 : vector<2x32xf32>
    %cst_44 = arith.constant 1.000000e+00 : f32
    %128 = vector.broadcast %cst_44 : f32 to vector<2x32xf32>
    %129 = arith.addf %128, %127 : vector<2x32xf32>
    %130 = arith.divf %128, %129 : vector<2x32xf32>
    %131 = vector.extract_strided_slice %118 {offsets = [0, 64], sizes = [2, 32], strides = [1, 1]} : vector<2x128xf32> to vector<2x32xf32>
    %132 = math.tanh %131 : vector<2x32xf32>
    %133 = vector.extract_strided_slice %118 {offsets = [0, 96], sizes = [2, 32], strides = [1, 1]} : vector<2x128xf32> to vector<2x32xf32>
    %134 = arith.negf %133 : vector<2x32xf32>
    %135 = math.exp %134 : vector<2x32xf32>
    %cst_45 = arith.constant 1.000000e+00 : f32
    %136 = vector.broadcast %cst_45 : f32 to vector<2x32xf32>
    %137 = arith.addf %136, %135 : vector<2x32xf32>
    %138 = arith.divf %136, %137 : vector<2x32xf32>
    %139 = arith.mulf %130, %83 : vector<2x32xf32>
    %140 = arith.mulf %124, %132 : vector<2x32xf32>
    %141 = arith.addf %139, %140 : vector<2x32xf32>
    %142 = math.tanh %141 : vector<2x32xf32>
    %143 = arith.mulf %138, %142 : vector<2x32xf32>
    %144 = vector.extract_strided_slice %19 {offsets = [4, 0], sizes = [2, 128], strides = [1, 1]} : vector<16x128xf32> to vector<2x128xf32>
    %cst_46 = arith.constant dense<0.000000e+00> : vector<2x128xf32>
    %145 = tpu.matmul %113, %20, %cst_46 {dimension_numbers = #tpu.dot_dimension_numbers<[1], [0], [0], [1], [0, 0, 1, 1], [], []>} : vector<2x32xf32>, vector<32x128xf32>, vector<2x128xf32> -> vector<2x128xf32>
    %146 = arith.addf %144, %145 : vector<2x128xf32>
    %147 = vector.extract_strided_slice %146 {offsets = [0, 0], sizes = [2, 32], strides = [1, 1]} : vector<2x128xf32> to vector<2x32xf32>
    %148 = arith.negf %147 : vector<2x32xf32>
    %149 = math.exp %148 : vector<2x32xf32>
    %cst_47 = arith.constant 1.000000e+00 : f32
    %150 = vector.broadcast %cst_47 : f32 to vector<2x32xf32>
    %151 = arith.addf %150, %149 : vector<2x32xf32>
    %152 = arith.divf %150, %151 : vector<2x32xf32>
    %153 = vector.extract_strided_slice %146 {offsets = [0, 32], sizes = [2, 32], strides = [1, 1]} : vector<2x128xf32> to vector<2x32xf32>
    %154 = arith.negf %153 : vector<2x32xf32>
    %155 = math.exp %154 : vector<2x32xf32>
    %cst_48 = arith.constant 1.000000e+00 : f32
    %156 = vector.broadcast %cst_48 : f32 to vector<2x32xf32>
    %157 = arith.addf %156, %155 : vector<2x32xf32>
    %158 = arith.divf %156, %157 : vector<2x32xf32>
    %159 = vector.extract_strided_slice %146 {offsets = [0, 64], sizes = [2, 32], strides = [1, 1]} : vector<2x128xf32> to vector<2x32xf32>
    %160 = math.tanh %159 : vector<2x32xf32>
    %161 = vector.extract_strided_slice %146 {offsets = [0, 96], sizes = [2, 32], strides = [1, 1]} : vector<2x128xf32> to vector<2x32xf32>
    %162 = arith.negf %161 : vector<2x32xf32>
    %163 = math.exp %162 : vector<2x32xf32>
    %cst_49 = arith.constant 1.000000e+00 : f32
    %164 = vector.broadcast %cst_49 : f32 to vector<2x32xf32>
    %165 = arith.addf %164, %163 : vector<2x32xf32>
    %166 = arith.divf %164, %165 : vector<2x32xf32>
    %167 = arith.mulf %158, %111 : vector<2x32xf32>
    %168 = arith.mulf %152, %160 : vector<2x32xf32>
    %169 = arith.addf %167, %168 : vector<2x32xf32>
    %170 = math.tanh %169 : vector<2x32xf32>
    %171 = arith.mulf %166, %170 : vector<2x32xf32>
    %cst_50 = arith.constant dense<0.000000e+00> : vector<2x128xf32>
    %172 = tpu.matmul %171, %21, %cst_50 {dimension_numbers = #tpu.dot_dimension_numbers<[1], [0], [0], [1], [0, 0, 1, 1], [], []>} : vector<2x32xf32>, vector<32x128xf32>, vector<2x128xf32> -> vector<2x128xf32>
    %173 = vector.broadcast %23 : vector<1x128xf32> to vector<2x128xf32>
    %174 = arith.addf %172, %173 : vector<2x128xf32>
    %cst_51 = arith.constant dense<0.000000e+00> : vector<2x128xf32>
    %175 = tpu.matmul %143, %22, %cst_51 {dimension_numbers = #tpu.dot_dimension_numbers<[1], [0], [0], [1], [0, 0, 1, 1], [], []>} : vector<2x32xf32>, vector<32x128xf32>, vector<2x128xf32> -> vector<2x128xf32>
    %176 = arith.addf %174, %175 : vector<2x128xf32>
    %177 = vector.extract_strided_slice %176 {offsets = [0, 0], sizes = [2, 32], strides = [1, 1]} : vector<2x128xf32> to vector<2x32xf32>
    %178 = arith.negf %177 : vector<2x32xf32>
    %179 = math.exp %178 : vector<2x32xf32>
    %cst_52 = arith.constant 1.000000e+00 : f32
    %180 = vector.broadcast %cst_52 : f32 to vector<2x32xf32>
    %181 = arith.addf %180, %179 : vector<2x32xf32>
    %182 = arith.divf %180, %181 : vector<2x32xf32>
    %183 = vector.extract_strided_slice %176 {offsets = [0, 32], sizes = [2, 32], strides = [1, 1]} : vector<2x128xf32> to vector<2x32xf32>
    %184 = arith.negf %183 : vector<2x32xf32>
    %185 = math.exp %184 : vector<2x32xf32>
    %cst_53 = arith.constant 1.000000e+00 : f32
    %186 = vector.broadcast %cst_53 : f32 to vector<2x32xf32>
    %187 = arith.addf %186, %185 : vector<2x32xf32>
    %188 = arith.divf %186, %187 : vector<2x32xf32>
    %189 = vector.extract_strided_slice %176 {offsets = [0, 64], sizes = [2, 32], strides = [1, 1]} : vector<2x128xf32> to vector<2x32xf32>
    %190 = math.tanh %189 : vector<2x32xf32>
    %191 = vector.extract_strided_slice %176 {offsets = [0, 96], sizes = [2, 32], strides = [1, 1]} : vector<2x128xf32> to vector<2x32xf32>
    %192 = arith.negf %191 : vector<2x32xf32>
    %193 = math.exp %192 : vector<2x32xf32>
    %cst_54 = arith.constant 1.000000e+00 : f32
    %194 = vector.broadcast %cst_54 : f32 to vector<2x32xf32>
    %195 = arith.addf %194, %193 : vector<2x32xf32>
    %196 = arith.divf %194, %195 : vector<2x32xf32>
    %197 = arith.mulf %188, %141 : vector<2x32xf32>
    %198 = arith.mulf %182, %190 : vector<2x32xf32>
    %199 = arith.addf %197, %198 : vector<2x32xf32>
    %200 = math.tanh %199 : vector<2x32xf32>
    %201 = arith.mulf %196, %200 : vector<2x32xf32>
    %202 = vector.extract_strided_slice %19 {offsets = [6, 0], sizes = [2, 128], strides = [1, 1]} : vector<16x128xf32> to vector<2x128xf32>
    %cst_55 = arith.constant dense<0.000000e+00> : vector<2x128xf32>
    %203 = tpu.matmul %171, %20, %cst_55 {dimension_numbers = #tpu.dot_dimension_numbers<[1], [0], [0], [1], [0, 0, 1, 1], [], []>} : vector<2x32xf32>, vector<32x128xf32>, vector<2x128xf32> -> vector<2x128xf32>
    %204 = arith.addf %202, %203 : vector<2x128xf32>
    %205 = vector.extract_strided_slice %204 {offsets = [0, 0], sizes = [2, 32], strides = [1, 1]} : vector<2x128xf32> to vector<2x32xf32>
    %206 = arith.negf %205 : vector<2x32xf32>
    %207 = math.exp %206 : vector<2x32xf32>
    %cst_56 = arith.constant 1.000000e+00 : f32
    %208 = vector.broadcast %cst_56 : f32 to vector<2x32xf32>
    %209 = arith.addf %208, %207 : vector<2x32xf32>
    %210 = arith.divf %208, %209 : vector<2x32xf32>
    %211 = vector.extract_strided_slice %204 {offsets = [0, 32], sizes = [2, 32], strides = [1, 1]} : vector<2x128xf32> to vector<2x32xf32>
    %212 = arith.negf %211 : vector<2x32xf32>
    %213 = math.exp %212 : vector<2x32xf32>
    %cst_57 = arith.constant 1.000000e+00 : f32
    %214 = vector.broadcast %cst_57 : f32 to vector<2x32xf32>
    %215 = arith.addf %214, %213 : vector<2x32xf32>
    %216 = arith.divf %214, %215 : vector<2x32xf32>
    %217 = vector.extract_strided_slice %204 {offsets = [0, 64], sizes = [2, 32], strides = [1, 1]} : vector<2x128xf32> to vector<2x32xf32>
    %218 = math.tanh %217 : vector<2x32xf32>
    %219 = vector.extract_strided_slice %204 {offsets = [0, 96], sizes = [2, 32], strides = [1, 1]} : vector<2x128xf32> to vector<2x32xf32>
    %220 = arith.negf %219 : vector<2x32xf32>
    %221 = math.exp %220 : vector<2x32xf32>
    %cst_58 = arith.constant 1.000000e+00 : f32
    %222 = vector.broadcast %cst_58 : f32 to vector<2x32xf32>
    %223 = arith.addf %222, %221 : vector<2x32xf32>
    %224 = arith.divf %222, %223 : vector<2x32xf32>
    %225 = arith.mulf %216, %169 : vector<2x32xf32>
    %226 = arith.mulf %210, %218 : vector<2x32xf32>
    %227 = arith.addf %225, %226 : vector<2x32xf32>
    %228 = math.tanh %227 : vector<2x32xf32>
    %229 = arith.mulf %224, %228 : vector<2x32xf32>
    %cst_59 = arith.constant dense<0.000000e+00> : vector<2x128xf32>
    %230 = tpu.matmul %229, %21, %cst_59 {dimension_numbers = #tpu.dot_dimension_numbers<[1], [0], [0], [1], [0, 0, 1, 1], [], []>} : vector<2x32xf32>, vector<32x128xf32>, vector<2x128xf32> -> vector<2x128xf32>
    %231 = vector.broadcast %23 : vector<1x128xf32> to vector<2x128xf32>
    %232 = arith.addf %230, %231 : vector<2x128xf32>
    %cst_60 = arith.constant dense<0.000000e+00> : vector<2x128xf32>
    %233 = tpu.matmul %201, %22, %cst_60 {dimension_numbers = #tpu.dot_dimension_numbers<[1], [0], [0], [1], [0, 0, 1, 1], [], []>} : vector<2x32xf32>, vector<32x128xf32>, vector<2x128xf32> -> vector<2x128xf32>
    %234 = arith.addf %232, %233 : vector<2x128xf32>
    %235 = vector.extract_strided_slice %234 {offsets = [0, 0], sizes = [2, 32], strides = [1, 1]} : vector<2x128xf32> to vector<2x32xf32>
    %236 = arith.negf %235 : vector<2x32xf32>
    %237 = math.exp %236 : vector<2x32xf32>
    %cst_61 = arith.constant 1.000000e+00 : f32
    %238 = vector.broadcast %cst_61 : f32 to vector<2x32xf32>
    %239 = arith.addf %238, %237 : vector<2x32xf32>
    %240 = arith.divf %238, %239 : vector<2x32xf32>
    %241 = vector.extract_strided_slice %234 {offsets = [0, 32], sizes = [2, 32], strides = [1, 1]} : vector<2x128xf32> to vector<2x32xf32>
    %242 = arith.negf %241 : vector<2x32xf32>
    %243 = math.exp %242 : vector<2x32xf32>
    %cst_62 = arith.constant 1.000000e+00 : f32
    %244 = vector.broadcast %cst_62 : f32 to vector<2x32xf32>
    %245 = arith.addf %244, %243 : vector<2x32xf32>
    %246 = arith.divf %244, %245 : vector<2x32xf32>
    %247 = vector.extract_strided_slice %234 {offsets = [0, 64], sizes = [2, 32], strides = [1, 1]} : vector<2x128xf32> to vector<2x32xf32>
    %248 = math.tanh %247 : vector<2x32xf32>
    %249 = vector.extract_strided_slice %234 {offsets = [0, 96], sizes = [2, 32], strides = [1, 1]} : vector<2x128xf32> to vector<2x32xf32>
    %250 = arith.negf %249 : vector<2x32xf32>
    %251 = math.exp %250 : vector<2x32xf32>
    %cst_63 = arith.constant 1.000000e+00 : f32
    %252 = vector.broadcast %cst_63 : f32 to vector<2x32xf32>
    %253 = arith.addf %252, %251 : vector<2x32xf32>
    %254 = arith.divf %252, %253 : vector<2x32xf32>
    %255 = arith.mulf %246, %199 : vector<2x32xf32>
    %256 = arith.mulf %240, %248 : vector<2x32xf32>
    %257 = arith.addf %255, %256 : vector<2x32xf32>
    %258 = math.tanh %257 : vector<2x32xf32>
    %259 = arith.mulf %254, %258 : vector<2x32xf32>
    %260 = vector.extract_strided_slice %19 {offsets = [8, 0], sizes = [2, 128], strides = [1, 1]} : vector<16x128xf32> to vector<2x128xf32>
    %cst_64 = arith.constant dense<0.000000e+00> : vector<2x128xf32>
    %261 = tpu.matmul %229, %20, %cst_64 {dimension_numbers = #tpu.dot_dimension_numbers<[1], [0], [0], [1], [0, 0, 1, 1], [], []>} : vector<2x32xf32>, vector<32x128xf32>, vector<2x128xf32> -> vector<2x128xf32>
    %262 = arith.addf %260, %261 : vector<2x128xf32>
    %263 = vector.extract_strided_slice %262 {offsets = [0, 0], sizes = [2, 32], strides = [1, 1]} : vector<2x128xf32> to vector<2x32xf32>
    %264 = arith.negf %263 : vector<2x32xf32>
    %265 = math.exp %264 : vector<2x32xf32>
    %cst_65 = arith.constant 1.000000e+00 : f32
    %266 = vector.broadcast %cst_65 : f32 to vector<2x32xf32>
    %267 = arith.addf %266, %265 : vector<2x32xf32>
    %268 = arith.divf %266, %267 : vector<2x32xf32>
    %269 = vector.extract_strided_slice %262 {offsets = [0, 32], sizes = [2, 32], strides = [1, 1]} : vector<2x128xf32> to vector<2x32xf32>
    %270 = arith.negf %269 : vector<2x32xf32>
    %271 = math.exp %270 : vector<2x32xf32>
    %cst_66 = arith.constant 1.000000e+00 : f32
    %272 = vector.broadcast %cst_66 : f32 to vector<2x32xf32>
    %273 = arith.addf %272, %271 : vector<2x32xf32>
    %274 = arith.divf %272, %273 : vector<2x32xf32>
    %275 = vector.extract_strided_slice %262 {offsets = [0, 64], sizes = [2, 32], strides = [1, 1]} : vector<2x128xf32> to vector<2x32xf32>
    %276 = math.tanh %275 : vector<2x32xf32>
    %277 = vector.extract_strided_slice %262 {offsets = [0, 96], sizes = [2, 32], strides = [1, 1]} : vector<2x128xf32> to vector<2x32xf32>
    %278 = arith.negf %277 : vector<2x32xf32>
    %279 = math.exp %278 : vector<2x32xf32>
    %cst_67 = arith.constant 1.000000e+00 : f32
    %280 = vector.broadcast %cst_67 : f32 to vector<2x32xf32>
    %281 = arith.addf %280, %279 : vector<2x32xf32>
    %282 = arith.divf %280, %281 : vector<2x32xf32>
    %283 = arith.mulf %274, %227 : vector<2x32xf32>
    %284 = arith.mulf %268, %276 : vector<2x32xf32>
    %285 = arith.addf %283, %284 : vector<2x32xf32>
    %286 = math.tanh %285 : vector<2x32xf32>
    %287 = arith.mulf %282, %286 : vector<2x32xf32>
    %cst_68 = arith.constant dense<0.000000e+00> : vector<2x128xf32>
    %288 = tpu.matmul %287, %21, %cst_68 {dimension_numbers = #tpu.dot_dimension_numbers<[1], [0], [0], [1], [0, 0, 1, 1], [], []>} : vector<2x32xf32>, vector<32x128xf32>, vector<2x128xf32> -> vector<2x128xf32>
    %289 = vector.broadcast %23 : vector<1x128xf32> to vector<2x128xf32>
    %290 = arith.addf %288, %289 : vector<2x128xf32>
    %cst_69 = arith.constant dense<0.000000e+00> : vector<2x128xf32>
    %291 = tpu.matmul %259, %22, %cst_69 {dimension_numbers = #tpu.dot_dimension_numbers<[1], [0], [0], [1], [0, 0, 1, 1], [], []>} : vector<2x32xf32>, vector<32x128xf32>, vector<2x128xf32> -> vector<2x128xf32>
    %292 = arith.addf %290, %291 : vector<2x128xf32>
    %293 = vector.extract_strided_slice %292 {offsets = [0, 0], sizes = [2, 32], strides = [1, 1]} : vector<2x128xf32> to vector<2x32xf32>
    %294 = arith.negf %293 : vector<2x32xf32>
    %295 = math.exp %294 : vector<2x32xf32>
    %cst_70 = arith.constant 1.000000e+00 : f32
    %296 = vector.broadcast %cst_70 : f32 to vector<2x32xf32>
    %297 = arith.addf %296, %295 : vector<2x32xf32>
    %298 = arith.divf %296, %297 : vector<2x32xf32>
    %299 = vector.extract_strided_slice %292 {offsets = [0, 32], sizes = [2, 32], strides = [1, 1]} : vector<2x128xf32> to vector<2x32xf32>
    %300 = arith.negf %299 : vector<2x32xf32>
    %301 = math.exp %300 : vector<2x32xf32>
    %cst_71 = arith.constant 1.000000e+00 : f32
    %302 = vector.broadcast %cst_71 : f32 to vector<2x32xf32>
    %303 = arith.addf %302, %301 : vector<2x32xf32>
    %304 = arith.divf %302, %303 : vector<2x32xf32>
    %305 = vector.extract_strided_slice %292 {offsets = [0, 64], sizes = [2, 32], strides = [1, 1]} : vector<2x128xf32> to vector<2x32xf32>
    %306 = math.tanh %305 : vector<2x32xf32>
    %307 = vector.extract_strided_slice %292 {offsets = [0, 96], sizes = [2, 32], strides = [1, 1]} : vector<2x128xf32> to vector<2x32xf32>
    %308 = arith.negf %307 : vector<2x32xf32>
    %309 = math.exp %308 : vector<2x32xf32>
    %cst_72 = arith.constant 1.000000e+00 : f32
    %310 = vector.broadcast %cst_72 : f32 to vector<2x32xf32>
    %311 = arith.addf %310, %309 : vector<2x32xf32>
    %312 = arith.divf %310, %311 : vector<2x32xf32>
    %313 = arith.mulf %304, %257 : vector<2x32xf32>
    %314 = arith.mulf %298, %306 : vector<2x32xf32>
    %315 = arith.addf %313, %314 : vector<2x32xf32>
    %316 = math.tanh %315 : vector<2x32xf32>
    %317 = arith.mulf %312, %316 : vector<2x32xf32>
    %318 = vector.extract_strided_slice %19 {offsets = [10, 0], sizes = [2, 128], strides = [1, 1]} : vector<16x128xf32> to vector<2x128xf32>
    %cst_73 = arith.constant dense<0.000000e+00> : vector<2x128xf32>
    %319 = tpu.matmul %287, %20, %cst_73 {dimension_numbers = #tpu.dot_dimension_numbers<[1], [0], [0], [1], [0, 0, 1, 1], [], []>} : vector<2x32xf32>, vector<32x128xf32>, vector<2x128xf32> -> vector<2x128xf32>
    %320 = arith.addf %318, %319 : vector<2x128xf32>
    %321 = vector.extract_strided_slice %320 {offsets = [0, 0], sizes = [2, 32], strides = [1, 1]} : vector<2x128xf32> to vector<2x32xf32>
    %322 = arith.negf %321 : vector<2x32xf32>
    %323 = math.exp %322 : vector<2x32xf32>
    %cst_74 = arith.constant 1.000000e+00 : f32
    %324 = vector.broadcast %cst_74 : f32 to vector<2x32xf32>
    %325 = arith.addf %324, %323 : vector<2x32xf32>
    %326 = arith.divf %324, %325 : vector<2x32xf32>
    %327 = vector.extract_strided_slice %320 {offsets = [0, 32], sizes = [2, 32], strides = [1, 1]} : vector<2x128xf32> to vector<2x32xf32>
    %328 = arith.negf %327 : vector<2x32xf32>
    %329 = math.exp %328 : vector<2x32xf32>
    %cst_75 = arith.constant 1.000000e+00 : f32
    %330 = vector.broadcast %cst_75 : f32 to vector<2x32xf32>
    %331 = arith.addf %330, %329 : vector<2x32xf32>
    %332 = arith.divf %330, %331 : vector<2x32xf32>
    %333 = vector.extract_strided_slice %320 {offsets = [0, 64], sizes = [2, 32], strides = [1, 1]} : vector<2x128xf32> to vector<2x32xf32>
    %334 = math.tanh %333 : vector<2x32xf32>
    %335 = vector.extract_strided_slice %320 {offsets = [0, 96], sizes = [2, 32], strides = [1, 1]} : vector<2x128xf32> to vector<2x32xf32>
    %336 = arith.negf %335 : vector<2x32xf32>
    %337 = math.exp %336 : vector<2x32xf32>
    %cst_76 = arith.constant 1.000000e+00 : f32
    %338 = vector.broadcast %cst_76 : f32 to vector<2x32xf32>
    %339 = arith.addf %338, %337 : vector<2x32xf32>
    %340 = arith.divf %338, %339 : vector<2x32xf32>
    %341 = arith.mulf %332, %285 : vector<2x32xf32>
    %342 = arith.mulf %326, %334 : vector<2x32xf32>
    %343 = arith.addf %341, %342 : vector<2x32xf32>
    %344 = math.tanh %343 : vector<2x32xf32>
    %345 = arith.mulf %340, %344 : vector<2x32xf32>
    %cst_77 = arith.constant dense<0.000000e+00> : vector<2x128xf32>
    %346 = tpu.matmul %345, %21, %cst_77 {dimension_numbers = #tpu.dot_dimension_numbers<[1], [0], [0], [1], [0, 0, 1, 1], [], []>} : vector<2x32xf32>, vector<32x128xf32>, vector<2x128xf32> -> vector<2x128xf32>
    %347 = vector.broadcast %23 : vector<1x128xf32> to vector<2x128xf32>
    %348 = arith.addf %346, %347 : vector<2x128xf32>
    %cst_78 = arith.constant dense<0.000000e+00> : vector<2x128xf32>
    %349 = tpu.matmul %317, %22, %cst_78 {dimension_numbers = #tpu.dot_dimension_numbers<[1], [0], [0], [1], [0, 0, 1, 1], [], []>} : vector<2x32xf32>, vector<32x128xf32>, vector<2x128xf32> -> vector<2x128xf32>
    %350 = arith.addf %348, %349 : vector<2x128xf32>
    %351 = vector.extract_strided_slice %350 {offsets = [0, 0], sizes = [2, 32], strides = [1, 1]} : vector<2x128xf32> to vector<2x32xf32>
    %352 = arith.negf %351 : vector<2x32xf32>
    %353 = math.exp %352 : vector<2x32xf32>
    %cst_79 = arith.constant 1.000000e+00 : f32
    %354 = vector.broadcast %cst_79 : f32 to vector<2x32xf32>
    %355 = arith.addf %354, %353 : vector<2x32xf32>
    %356 = arith.divf %354, %355 : vector<2x32xf32>
    %357 = vector.extract_strided_slice %350 {offsets = [0, 32], sizes = [2, 32], strides = [1, 1]} : vector<2x128xf32> to vector<2x32xf32>
    %358 = arith.negf %357 : vector<2x32xf32>
    %359 = math.exp %358 : vector<2x32xf32>
    %cst_80 = arith.constant 1.000000e+00 : f32
    %360 = vector.broadcast %cst_80 : f32 to vector<2x32xf32>
    %361 = arith.addf %360, %359 : vector<2x32xf32>
    %362 = arith.divf %360, %361 : vector<2x32xf32>
    %363 = vector.extract_strided_slice %350 {offsets = [0, 64], sizes = [2, 32], strides = [1, 1]} : vector<2x128xf32> to vector<2x32xf32>
    %364 = math.tanh %363 : vector<2x32xf32>
    %365 = vector.extract_strided_slice %350 {offsets = [0, 96], sizes = [2, 32], strides = [1, 1]} : vector<2x128xf32> to vector<2x32xf32>
    %366 = arith.negf %365 : vector<2x32xf32>
    %367 = math.exp %366 : vector<2x32xf32>
    %cst_81 = arith.constant 1.000000e+00 : f32
    %368 = vector.broadcast %cst_81 : f32 to vector<2x32xf32>
    %369 = arith.addf %368, %367 : vector<2x32xf32>
    %370 = arith.divf %368, %369 : vector<2x32xf32>
    %371 = arith.mulf %362, %315 : vector<2x32xf32>
    %372 = arith.mulf %356, %364 : vector<2x32xf32>
    %373 = arith.addf %371, %372 : vector<2x32xf32>
    %374 = math.tanh %373 : vector<2x32xf32>
    %375 = arith.mulf %370, %374 : vector<2x32xf32>
    %376 = vector.extract_strided_slice %19 {offsets = [12, 0], sizes = [2, 128], strides = [1, 1]} : vector<16x128xf32> to vector<2x128xf32>
    %cst_82 = arith.constant dense<0.000000e+00> : vector<2x128xf32>
    %377 = tpu.matmul %345, %20, %cst_82 {dimension_numbers = #tpu.dot_dimension_numbers<[1], [0], [0], [1], [0, 0, 1, 1], [], []>} : vector<2x32xf32>, vector<32x128xf32>, vector<2x128xf32> -> vector<2x128xf32>
    %378 = arith.addf %376, %377 : vector<2x128xf32>
    %379 = vector.extract_strided_slice %378 {offsets = [0, 0], sizes = [2, 32], strides = [1, 1]} : vector<2x128xf32> to vector<2x32xf32>
    %380 = arith.negf %379 : vector<2x32xf32>
    %381 = math.exp %380 : vector<2x32xf32>
    %cst_83 = arith.constant 1.000000e+00 : f32
    %382 = vector.broadcast %cst_83 : f32 to vector<2x32xf32>
    %383 = arith.addf %382, %381 : vector<2x32xf32>
    %384 = arith.divf %382, %383 : vector<2x32xf32>
    %385 = vector.extract_strided_slice %378 {offsets = [0, 32], sizes = [2, 32], strides = [1, 1]} : vector<2x128xf32> to vector<2x32xf32>
    %386 = arith.negf %385 : vector<2x32xf32>
    %387 = math.exp %386 : vector<2x32xf32>
    %cst_84 = arith.constant 1.000000e+00 : f32
    %388 = vector.broadcast %cst_84 : f32 to vector<2x32xf32>
    %389 = arith.addf %388, %387 : vector<2x32xf32>
    %390 = arith.divf %388, %389 : vector<2x32xf32>
    %391 = vector.extract_strided_slice %378 {offsets = [0, 64], sizes = [2, 32], strides = [1, 1]} : vector<2x128xf32> to vector<2x32xf32>
    %392 = math.tanh %391 : vector<2x32xf32>
    %393 = vector.extract_strided_slice %378 {offsets = [0, 96], sizes = [2, 32], strides = [1, 1]} : vector<2x128xf32> to vector<2x32xf32>
    %394 = arith.negf %393 : vector<2x32xf32>
    %395 = math.exp %394 : vector<2x32xf32>
    %cst_85 = arith.constant 1.000000e+00 : f32
    %396 = vector.broadcast %cst_85 : f32 to vector<2x32xf32>
    %397 = arith.addf %396, %395 : vector<2x32xf32>
    %398 = arith.divf %396, %397 : vector<2x32xf32>
    %399 = arith.mulf %390, %343 : vector<2x32xf32>
    %400 = arith.mulf %384, %392 : vector<2x32xf32>
    %401 = arith.addf %399, %400 : vector<2x32xf32>
    %402 = math.tanh %401 : vector<2x32xf32>
    %403 = arith.mulf %398, %402 : vector<2x32xf32>
    %cst_86 = arith.constant dense<0.000000e+00> : vector<2x128xf32>
    %404 = tpu.matmul %403, %21, %cst_86 {dimension_numbers = #tpu.dot_dimension_numbers<[1], [0], [0], [1], [0, 0, 1, 1], [], []>} : vector<2x32xf32>, vector<32x128xf32>, vector<2x128xf32> -> vector<2x128xf32>
    %405 = vector.broadcast %23 : vector<1x128xf32> to vector<2x128xf32>
    %406 = arith.addf %404, %405 : vector<2x128xf32>
    %cst_87 = arith.constant dense<0.000000e+00> : vector<2x128xf32>
    %407 = tpu.matmul %375, %22, %cst_87 {dimension_numbers = #tpu.dot_dimension_numbers<[1], [0], [0], [1], [0, 0, 1, 1], [], []>} : vector<2x32xf32>, vector<32x128xf32>, vector<2x128xf32> -> vector<2x128xf32>
    %408 = arith.addf %406, %407 : vector<2x128xf32>
    %409 = vector.extract_strided_slice %408 {offsets = [0, 0], sizes = [2, 32], strides = [1, 1]} : vector<2x128xf32> to vector<2x32xf32>
    %410 = arith.negf %409 : vector<2x32xf32>
    %411 = math.exp %410 : vector<2x32xf32>
    %cst_88 = arith.constant 1.000000e+00 : f32
    %412 = vector.broadcast %cst_88 : f32 to vector<2x32xf32>
    %413 = arith.addf %412, %411 : vector<2x32xf32>
    %414 = arith.divf %412, %413 : vector<2x32xf32>
    %415 = vector.extract_strided_slice %408 {offsets = [0, 32], sizes = [2, 32], strides = [1, 1]} : vector<2x128xf32> to vector<2x32xf32>
    %416 = arith.negf %415 : vector<2x32xf32>
    %417 = math.exp %416 : vector<2x32xf32>
    %cst_89 = arith.constant 1.000000e+00 : f32
    %418 = vector.broadcast %cst_89 : f32 to vector<2x32xf32>
    %419 = arith.addf %418, %417 : vector<2x32xf32>
    %420 = arith.divf %418, %419 : vector<2x32xf32>
    %421 = vector.extract_strided_slice %408 {offsets = [0, 64], sizes = [2, 32], strides = [1, 1]} : vector<2x128xf32> to vector<2x32xf32>
    %422 = math.tanh %421 : vector<2x32xf32>
    %423 = vector.extract_strided_slice %408 {offsets = [0, 96], sizes = [2, 32], strides = [1, 1]} : vector<2x128xf32> to vector<2x32xf32>
    %424 = arith.negf %423 : vector<2x32xf32>
    %425 = math.exp %424 : vector<2x32xf32>
    %cst_90 = arith.constant 1.000000e+00 : f32
    %426 = vector.broadcast %cst_90 : f32 to vector<2x32xf32>
    %427 = arith.addf %426, %425 : vector<2x32xf32>
    %428 = arith.divf %426, %427 : vector<2x32xf32>
    %429 = arith.mulf %420, %373 : vector<2x32xf32>
    %430 = arith.mulf %414, %422 : vector<2x32xf32>
    %431 = arith.addf %429, %430 : vector<2x32xf32>
    %432 = math.tanh %431 : vector<2x32xf32>
    %433 = arith.mulf %428, %432 : vector<2x32xf32>
    %434 = vector.extract_strided_slice %19 {offsets = [14, 0], sizes = [2, 128], strides = [1, 1]} : vector<16x128xf32> to vector<2x128xf32>
    %cst_91 = arith.constant dense<0.000000e+00> : vector<2x128xf32>
    %435 = tpu.matmul %403, %20, %cst_91 {dimension_numbers = #tpu.dot_dimension_numbers<[1], [0], [0], [1], [0, 0, 1, 1], [], []>} : vector<2x32xf32>, vector<32x128xf32>, vector<2x128xf32> -> vector<2x128xf32>
    %436 = arith.addf %434, %435 : vector<2x128xf32>
    %437 = vector.extract_strided_slice %436 {offsets = [0, 0], sizes = [2, 32], strides = [1, 1]} : vector<2x128xf32> to vector<2x32xf32>
    %438 = arith.negf %437 : vector<2x32xf32>
    %439 = math.exp %438 : vector<2x32xf32>
    %cst_92 = arith.constant 1.000000e+00 : f32
    %440 = vector.broadcast %cst_92 : f32 to vector<2x32xf32>
    %441 = arith.addf %440, %439 : vector<2x32xf32>
    %442 = arith.divf %440, %441 : vector<2x32xf32>
    %443 = vector.extract_strided_slice %436 {offsets = [0, 32], sizes = [2, 32], strides = [1, 1]} : vector<2x128xf32> to vector<2x32xf32>
    %444 = arith.negf %443 : vector<2x32xf32>
    %445 = math.exp %444 : vector<2x32xf32>
    %cst_93 = arith.constant 1.000000e+00 : f32
    %446 = vector.broadcast %cst_93 : f32 to vector<2x32xf32>
    %447 = arith.addf %446, %445 : vector<2x32xf32>
    %448 = arith.divf %446, %447 : vector<2x32xf32>
    %449 = vector.extract_strided_slice %436 {offsets = [0, 64], sizes = [2, 32], strides = [1, 1]} : vector<2x128xf32> to vector<2x32xf32>
    %450 = math.tanh %449 : vector<2x32xf32>
    %451 = vector.extract_strided_slice %436 {offsets = [0, 96], sizes = [2, 32], strides = [1, 1]} : vector<2x128xf32> to vector<2x32xf32>
    %452 = arith.negf %451 : vector<2x32xf32>
    %453 = math.exp %452 : vector<2x32xf32>
    %cst_94 = arith.constant 1.000000e+00 : f32
    %454 = vector.broadcast %cst_94 : f32 to vector<2x32xf32>
    %455 = arith.addf %454, %453 : vector<2x32xf32>
    %456 = arith.divf %454, %455 : vector<2x32xf32>
    %457 = arith.mulf %448, %401 : vector<2x32xf32>
    %458 = arith.mulf %442, %450 : vector<2x32xf32>
    %459 = arith.addf %457, %458 : vector<2x32xf32>
    %460 = math.tanh %459 : vector<2x32xf32>
    %461 = arith.mulf %456, %460 : vector<2x32xf32>
    %cst_95 = arith.constant dense<0.000000e+00> : vector<2x128xf32>
    %462 = tpu.matmul %461, %21, %cst_95 {dimension_numbers = #tpu.dot_dimension_numbers<[1], [0], [0], [1], [0, 0, 1, 1], [], []>} : vector<2x32xf32>, vector<32x128xf32>, vector<2x128xf32> -> vector<2x128xf32>
    %463 = vector.broadcast %23 : vector<1x128xf32> to vector<2x128xf32>
    %464 = arith.addf %462, %463 : vector<2x128xf32>
    %cst_96 = arith.constant dense<0.000000e+00> : vector<2x128xf32>
    %465 = tpu.matmul %433, %22, %cst_96 {dimension_numbers = #tpu.dot_dimension_numbers<[1], [0], [0], [1], [0, 0, 1, 1], [], []>} : vector<2x32xf32>, vector<32x128xf32>, vector<2x128xf32> -> vector<2x128xf32>
    %466 = arith.addf %464, %465 : vector<2x128xf32>
    %467 = vector.extract_strided_slice %466 {offsets = [0, 0], sizes = [2, 32], strides = [1, 1]} : vector<2x128xf32> to vector<2x32xf32>
    %468 = arith.negf %467 : vector<2x32xf32>
    %469 = math.exp %468 : vector<2x32xf32>
    %cst_97 = arith.constant 1.000000e+00 : f32
    %470 = vector.broadcast %cst_97 : f32 to vector<2x32xf32>
    %471 = arith.addf %470, %469 : vector<2x32xf32>
    %472 = arith.divf %470, %471 : vector<2x32xf32>
    %473 = vector.extract_strided_slice %466 {offsets = [0, 32], sizes = [2, 32], strides = [1, 1]} : vector<2x128xf32> to vector<2x32xf32>
    %474 = arith.negf %473 : vector<2x32xf32>
    %475 = math.exp %474 : vector<2x32xf32>
    %cst_98 = arith.constant 1.000000e+00 : f32
    %476 = vector.broadcast %cst_98 : f32 to vector<2x32xf32>
    %477 = arith.addf %476, %475 : vector<2x32xf32>
    %478 = arith.divf %476, %477 : vector<2x32xf32>
    %479 = vector.extract_strided_slice %466 {offsets = [0, 64], sizes = [2, 32], strides = [1, 1]} : vector<2x128xf32> to vector<2x32xf32>
    %480 = math.tanh %479 : vector<2x32xf32>
    %481 = vector.extract_strided_slice %466 {offsets = [0, 96], sizes = [2, 32], strides = [1, 1]} : vector<2x128xf32> to vector<2x32xf32>
    %482 = arith.negf %481 : vector<2x32xf32>
    %483 = math.exp %482 : vector<2x32xf32>
    %cst_99 = arith.constant 1.000000e+00 : f32
    %484 = vector.broadcast %cst_99 : f32 to vector<2x32xf32>
    %485 = arith.addf %484, %483 : vector<2x32xf32>
    %486 = arith.divf %484, %485 : vector<2x32xf32>
    %487 = arith.mulf %478, %431 : vector<2x32xf32>
    %488 = arith.mulf %472, %480 : vector<2x32xf32>
    %489 = arith.addf %487, %488 : vector<2x32xf32>
    %490 = math.tanh %489 : vector<2x32xf32>
    %491 = arith.mulf %486, %490 : vector<2x32xf32>
    %492 = vector.extract_strided_slice %85 {offsets = [0, 0], sizes = [1, 32], strides = [1, 1]} : vector<2x32xf32> to vector<1x32xf32>
    %493 = vector.extract_strided_slice %143 {offsets = [0, 0], sizes = [1, 32], strides = [1, 1]} : vector<2x32xf32> to vector<1x32xf32>
    %494 = vector.extract_strided_slice %201 {offsets = [0, 0], sizes = [1, 32], strides = [1, 1]} : vector<2x32xf32> to vector<1x32xf32>
    %495 = vector.extract_strided_slice %259 {offsets = [0, 0], sizes = [1, 32], strides = [1, 1]} : vector<2x32xf32> to vector<1x32xf32>
    %496 = vector.extract_strided_slice %317 {offsets = [0, 0], sizes = [1, 32], strides = [1, 1]} : vector<2x32xf32> to vector<1x32xf32>
    %497 = vector.extract_strided_slice %375 {offsets = [0, 0], sizes = [1, 32], strides = [1, 1]} : vector<2x32xf32> to vector<1x32xf32>
    %498 = vector.extract_strided_slice %433 {offsets = [0, 0], sizes = [1, 32], strides = [1, 1]} : vector<2x32xf32> to vector<1x32xf32>
    %499 = vector.extract_strided_slice %491 {offsets = [0, 0], sizes = [1, 32], strides = [1, 1]} : vector<2x32xf32> to vector<1x32xf32>
    %500 = vector.extract_strided_slice %85 {offsets = [1, 0], sizes = [1, 32], strides = [1, 1]} : vector<2x32xf32> to vector<1x32xf32>
    %501 = vector.extract_strided_slice %143 {offsets = [1, 0], sizes = [1, 32], strides = [1, 1]} : vector<2x32xf32> to vector<1x32xf32>
    %502 = vector.extract_strided_slice %201 {offsets = [1, 0], sizes = [1, 32], strides = [1, 1]} : vector<2x32xf32> to vector<1x32xf32>
    %503 = vector.extract_strided_slice %259 {offsets = [1, 0], sizes = [1, 32], strides = [1, 1]} : vector<2x32xf32> to vector<1x32xf32>
    %504 = vector.extract_strided_slice %317 {offsets = [1, 0], sizes = [1, 32], strides = [1, 1]} : vector<2x32xf32> to vector<1x32xf32>
    %505 = vector.extract_strided_slice %375 {offsets = [1, 0], sizes = [1, 32], strides = [1, 1]} : vector<2x32xf32> to vector<1x32xf32>
    %506 = vector.extract_strided_slice %433 {offsets = [1, 0], sizes = [1, 32], strides = [1, 1]} : vector<2x32xf32> to vector<1x32xf32>
    %507 = vector.extract_strided_slice %491 {offsets = [1, 0], sizes = [1, 32], strides = [1, 1]} : vector<2x32xf32> to vector<1x32xf32>
    %508 = tpu.concatenate %492, %493, %494, %495, %496, %497, %498, %499, %500, %501, %502, %503, %504, %505, %506, %507 in 0 : vector<1x32xf32>, vector<1x32xf32>, vector<1x32xf32>, vector<1x32xf32>, vector<1x32xf32>, vector<1x32xf32>, vector<1x32xf32>, vector<1x32xf32>, vector<1x32xf32>, vector<1x32xf32>, vector<1x32xf32>, vector<1x32xf32>, vector<1x32xf32>, vector<1x32xf32>, vector<1x32xf32>, vector<1x32xf32> -> vector<16x32xf32>
    %c0_100 = arith.constant 0 : index
    %c0_101 = arith.constant 0 : index
    %509 = vector.load %arg11[%c0_100, %c0_101] : memref<32x96xf32, #tpu.memory_space<vmem>>, vector<32x96xf32>
    %cst_102 = arith.constant dense<0.000000e+00> : vector<16x96xf32>
    %510 = tpu.matmul %508, %509, %cst_102 {dimension_numbers = #tpu.dot_dimension_numbers<[1], [0], [0], [1], [0, 0, 1, 1], [], []>} : vector<16x32xf32>, vector<32x96xf32>, vector<16x96xf32> -> vector<16x96xf32>
    %c0_103 = arith.constant 0 : index
    %c0_104 = arith.constant 0 : index
    %511 = vector.load %arg12[%c0_103, %c0_104] : memref<1x96xf32, #tpu.memory_space<vmem>>, vector<1x96xf32>
    %512 = vector.broadcast %511 : vector<1x96xf32> to vector<16x96xf32>
    %513 = arith.addf %510, %512 : vector<16x96xf32>
    %c0_105 = arith.constant 0 : index
    %c0_106 = arith.constant 0 : index
    %514 = vector.load %arg13[%c0_105, %c0_106] : memref<32x32xf32, #tpu.memory_space<vmem>>, vector<32x32xf32>
    %c0_107 = arith.constant 0 : index
    %c0_108 = arith.constant 0 : index
    %515 = vector.load %arg15[%c0_107, %c0_108] : memref<2x8xf32, #tpu.memory_space<vmem>>, vector<2x8xf32>
    %516 = vector.extract_strided_slice %513 {offsets = [0, 0], sizes = [8, 96], strides = [1, 1]} : vector<16x96xf32> to vector<8x96xf32>
    %517 = vector.extract_strided_slice %515 {offsets = [0, 0], sizes = [1, 8], strides = [1, 1]} : vector<2x8xf32> to vector<1x8xf32>
    %cst_109 = arith.constant 0.000000e+00 : f32
    %518 = vector.broadcast %cst_109 : f32 to vector<8x8xf32>
    %519 = vector.extract_strided_slice %516 {offsets = [0, 0], sizes = [8, 8], strides = [1, 1]} : vector<8x96xf32> to vector<8x8xf32>
    %520 = vector.extract_strided_slice %516 {offsets = [0, 32], sizes = [8, 8], strides = [1, 1]} : vector<8x96xf32> to vector<8x8xf32>
    %521 = vector.extract_strided_slice %516 {offsets = [0, 64], sizes = [8, 8], strides = [1, 1]} : vector<8x96xf32> to vector<8x8xf32>
    %522 = tpu.transpose %520, [1, 0] : vector<8x8xf32> -> vector<8x8xf32>
    %cst_110 = arith.constant dense<0.000000e+00> : vector<8x8xf32>
    %523 = tpu.matmul %519, %522, %cst_110 {dimension_numbers = #tpu.dot_dimension_numbers<[1], [0], [0], [1], [0, 0, 1, 1], [], []>} : vector<8x8xf32>, vector<8x8xf32>, vector<8x8xf32> -> vector<8x8xf32>
    %cst_111 = arith.constant 0.353553385 : f32
    %524 = vector.broadcast %cst_111 : f32 to vector<8x8xf32>
    %525 = arith.mulf %523, %524 : vector<8x8xf32>
    %526 = vector.broadcast %517 : vector<1x8xf32> to vector<8x8xf32>
    %527 = arith.addf %525, %526 : vector<8x8xf32>
    %cst_112 = arith.constant dense<0xFF800000> : vector<8xf32>
    %528 = vector.multi_reduction <maximumf>, %527, %cst_112 [1] : vector<8x8xf32> to vector<8xf32>
    %529 = vector.shape_cast %528 : vector<8xf32> to vector<8x1xf32>
    %530 = vector.broadcast %529 : vector<8x1xf32> to vector<8x8xf32>
    %531 = arith.subf %527, %530 : vector<8x8xf32>
    %532 = math.exp %531 : vector<8x8xf32>
    %cst_113 = arith.constant dense<0.000000e+00> : vector<8xf32>
    %533 = vector.multi_reduction <add>, %532, %cst_113 [1] : vector<8x8xf32> to vector<8xf32>
    %534 = vector.shape_cast %533 : vector<8xf32> to vector<8x1xf32>
    %535 = tpu.reciprocal %534 {approx = true} : vector<8x1xf32> -> vector<8x1xf32>
    %536 = vector.broadcast %535 : vector<8x1xf32> to vector<8x8xf32>
    %537 = arith.mulf %532, %536 : vector<8x8xf32>
    %538 = arith.addf %518, %537 : vector<8x8xf32>
    %cst_114 = arith.constant dense<0.000000e+00> : vector<8x8xf32>
    %539 = tpu.matmul %537, %521, %cst_114 {dimension_numbers = #tpu.dot_dimension_numbers<[1], [0], [0], [1], [0, 0, 1, 1], [], []>} : vector<8x8xf32>, vector<8x8xf32>, vector<8x8xf32> -> vector<8x8xf32>
    %cst_115 = arith.constant dense<0.000000e+00> : vector<8xf32>
    %540 = vector.multi_reduction <add>, %539, %cst_115 [0] : vector<8x8xf32> to vector<8xf32>
    %541 = vector.shape_cast %540 : vector<8xf32> to vector<1x8xf32>
    %542 = vector.extract_strided_slice %516 {offsets = [0, 8], sizes = [8, 8], strides = [1, 1]} : vector<8x96xf32> to vector<8x8xf32>
    %543 = vector.extract_strided_slice %516 {offsets = [0, 40], sizes = [8, 8], strides = [1, 1]} : vector<8x96xf32> to vector<8x8xf32>
    %544 = vector.extract_strided_slice %516 {offsets = [0, 72], sizes = [8, 8], strides = [1, 1]} : vector<8x96xf32> to vector<8x8xf32>
    %545 = tpu.transpose %543, [1, 0] : vector<8x8xf32> -> vector<8x8xf32>
    %cst_116 = arith.constant dense<0.000000e+00> : vector<8x8xf32>
    %546 = tpu.matmul %542, %545, %cst_116 {dimension_numbers = #tpu.dot_dimension_numbers<[1], [0], [0], [1], [0, 0, 1, 1], [], []>} : vector<8x8xf32>, vector<8x8xf32>, vector<8x8xf32> -> vector<8x8xf32>
    %cst_117 = arith.constant 0.353553385 : f32
    %547 = vector.broadcast %cst_117 : f32 to vector<8x8xf32>
    %548 = arith.mulf %546, %547 : vector<8x8xf32>
    %549 = vector.broadcast %517 : vector<1x8xf32> to vector<8x8xf32>
    %550 = arith.addf %548, %549 : vector<8x8xf32>
    %cst_118 = arith.constant dense<0xFF800000> : vector<8xf32>
    %551 = vector.multi_reduction <maximumf>, %550, %cst_118 [1] : vector<8x8xf32> to vector<8xf32>
    %552 = vector.shape_cast %551 : vector<8xf32> to vector<8x1xf32>
    %553 = vector.broadcast %552 : vector<8x1xf32> to vector<8x8xf32>
    %554 = arith.subf %550, %553 : vector<8x8xf32>
    %555 = math.exp %554 : vector<8x8xf32>
    %cst_119 = arith.constant dense<0.000000e+00> : vector<8xf32>
    %556 = vector.multi_reduction <add>, %555, %cst_119 [1] : vector<8x8xf32> to vector<8xf32>
    %557 = vector.shape_cast %556 : vector<8xf32> to vector<8x1xf32>
    %558 = tpu.reciprocal %557 {approx = true} : vector<8x1xf32> -> vector<8x1xf32>
    %559 = vector.broadcast %558 : vector<8x1xf32> to vector<8x8xf32>
    %560 = arith.mulf %555, %559 : vector<8x8xf32>
    %561 = arith.addf %538, %560 : vector<8x8xf32>
    %cst_120 = arith.constant dense<0.000000e+00> : vector<8x8xf32>
    %562 = tpu.matmul %560, %544, %cst_120 {dimension_numbers = #tpu.dot_dimension_numbers<[1], [0], [0], [1], [0, 0, 1, 1], [], []>} : vector<8x8xf32>, vector<8x8xf32>, vector<8x8xf32> -> vector<8x8xf32>
    %cst_121 = arith.constant dense<0.000000e+00> : vector<8xf32>
    %563 = vector.multi_reduction <add>, %562, %cst_121 [0] : vector<8x8xf32> to vector<8xf32>
    %564 = vector.shape_cast %563 : vector<8xf32> to vector<1x8xf32>
    %565 = vector.extract_strided_slice %516 {offsets = [0, 16], sizes = [8, 8], strides = [1, 1]} : vector<8x96xf32> to vector<8x8xf32>
    %566 = vector.extract_strided_slice %516 {offsets = [0, 48], sizes = [8, 8], strides = [1, 1]} : vector<8x96xf32> to vector<8x8xf32>
    %567 = vector.extract_strided_slice %516 {offsets = [0, 80], sizes = [8, 8], strides = [1, 1]} : vector<8x96xf32> to vector<8x8xf32>
    %568 = tpu.transpose %566, [1, 0] : vector<8x8xf32> -> vector<8x8xf32>
    %cst_122 = arith.constant dense<0.000000e+00> : vector<8x8xf32>
    %569 = tpu.matmul %565, %568, %cst_122 {dimension_numbers = #tpu.dot_dimension_numbers<[1], [0], [0], [1], [0, 0, 1, 1], [], []>} : vector<8x8xf32>, vector<8x8xf32>, vector<8x8xf32> -> vector<8x8xf32>
    %cst_123 = arith.constant 0.353553385 : f32
    %570 = vector.broadcast %cst_123 : f32 to vector<8x8xf32>
    %571 = arith.mulf %569, %570 : vector<8x8xf32>
    %572 = vector.broadcast %517 : vector<1x8xf32> to vector<8x8xf32>
    %573 = arith.addf %571, %572 : vector<8x8xf32>
    %cst_124 = arith.constant dense<0xFF800000> : vector<8xf32>
    %574 = vector.multi_reduction <maximumf>, %573, %cst_124 [1] : vector<8x8xf32> to vector<8xf32>
    %575 = vector.shape_cast %574 : vector<8xf32> to vector<8x1xf32>
    %576 = vector.broadcast %575 : vector<8x1xf32> to vector<8x8xf32>
    %577 = arith.subf %573, %576 : vector<8x8xf32>
    %578 = math.exp %577 : vector<8x8xf32>
    %cst_125 = arith.constant dense<0.000000e+00> : vector<8xf32>
    %579 = vector.multi_reduction <add>, %578, %cst_125 [1] : vector<8x8xf32> to vector<8xf32>
    %580 = vector.shape_cast %579 : vector<8xf32> to vector<8x1xf32>
    %581 = tpu.reciprocal %580 {approx = true} : vector<8x1xf32> -> vector<8x1xf32>
    %582 = vector.broadcast %581 : vector<8x1xf32> to vector<8x8xf32>
    %583 = arith.mulf %578, %582 : vector<8x8xf32>
    %584 = arith.addf %561, %583 : vector<8x8xf32>
    %cst_126 = arith.constant dense<0.000000e+00> : vector<8x8xf32>
    %585 = tpu.matmul %583, %567, %cst_126 {dimension_numbers = #tpu.dot_dimension_numbers<[1], [0], [0], [1], [0, 0, 1, 1], [], []>} : vector<8x8xf32>, vector<8x8xf32>, vector<8x8xf32> -> vector<8x8xf32>
    %cst_127 = arith.constant dense<0.000000e+00> : vector<8xf32>
    %586 = vector.multi_reduction <add>, %585, %cst_127 [0] : vector<8x8xf32> to vector<8xf32>
    %587 = vector.shape_cast %586 : vector<8xf32> to vector<1x8xf32>
    %588 = vector.extract_strided_slice %516 {offsets = [0, 24], sizes = [8, 8], strides = [1, 1]} : vector<8x96xf32> to vector<8x8xf32>
    %589 = vector.extract_strided_slice %516 {offsets = [0, 56], sizes = [8, 8], strides = [1, 1]} : vector<8x96xf32> to vector<8x8xf32>
    %590 = vector.extract_strided_slice %516 {offsets = [0, 88], sizes = [8, 8], strides = [1, 1]} : vector<8x96xf32> to vector<8x8xf32>
    %591 = tpu.transpose %589, [1, 0] : vector<8x8xf32> -> vector<8x8xf32>
    %cst_128 = arith.constant dense<0.000000e+00> : vector<8x8xf32>
    %592 = tpu.matmul %588, %591, %cst_128 {dimension_numbers = #tpu.dot_dimension_numbers<[1], [0], [0], [1], [0, 0, 1, 1], [], []>} : vector<8x8xf32>, vector<8x8xf32>, vector<8x8xf32> -> vector<8x8xf32>
    %cst_129 = arith.constant 0.353553385 : f32
    %593 = vector.broadcast %cst_129 : f32 to vector<8x8xf32>
    %594 = arith.mulf %592, %593 : vector<8x8xf32>
    %595 = vector.broadcast %517 : vector<1x8xf32> to vector<8x8xf32>
    %596 = arith.addf %594, %595 : vector<8x8xf32>
    %cst_130 = arith.constant dense<0xFF800000> : vector<8xf32>
    %597 = vector.multi_reduction <maximumf>, %596, %cst_130 [1] : vector<8x8xf32> to vector<8xf32>
    %598 = vector.shape_cast %597 : vector<8xf32> to vector<8x1xf32>
    %599 = vector.broadcast %598 : vector<8x1xf32> to vector<8x8xf32>
    %600 = arith.subf %596, %599 : vector<8x8xf32>
    %601 = math.exp %600 : vector<8x8xf32>
    %cst_131 = arith.constant dense<0.000000e+00> : vector<8xf32>
    %602 = vector.multi_reduction <add>, %601, %cst_131 [1] : vector<8x8xf32> to vector<8xf32>
    %603 = vector.shape_cast %602 : vector<8xf32> to vector<8x1xf32>
    %604 = tpu.reciprocal %603 {approx = true} : vector<8x1xf32> -> vector<8x1xf32>
    %605 = vector.broadcast %604 : vector<8x1xf32> to vector<8x8xf32>
    %606 = arith.mulf %601, %605 : vector<8x8xf32>
    %607 = arith.addf %584, %606 : vector<8x8xf32>
    %cst_132 = arith.constant dense<0.000000e+00> : vector<8x8xf32>
    %608 = tpu.matmul %606, %590, %cst_132 {dimension_numbers = #tpu.dot_dimension_numbers<[1], [0], [0], [1], [0, 0, 1, 1], [], []>} : vector<8x8xf32>, vector<8x8xf32>, vector<8x8xf32> -> vector<8x8xf32>
    %cst_133 = arith.constant dense<0.000000e+00> : vector<8xf32>
    %609 = vector.multi_reduction <add>, %608, %cst_133 [0] : vector<8x8xf32> to vector<8xf32>
    %610 = vector.shape_cast %609 : vector<8xf32> to vector<1x8xf32>
    %cst_134 = arith.constant 2.500000e-01 : f32
    %611 = vector.broadcast %cst_134 : f32 to vector<8x8xf32>
    %612 = arith.mulf %607, %611 : vector<8x8xf32>
    %c0_135 = arith.constant 0 : index
    %c0_136 = arith.constant 0 : index
    %c0_137 = arith.constant 0 : index
    %613 = vector.load %arg17[%c0_135, %c0_136, %c0_137] : memref<2x8x8xf32, #tpu.memory_space<vmem>>, vector<1x8x8xf32>
    %614 = vector.shape_cast %613 : vector<1x8x8xf32> to vector<8x8xf32>
    %615 = vector.shape_cast %612 : vector<8x8xf32> to vector<1x8x8xf32>
    tpu.vector_store %arg17[%c0_135, %c0_136, %c0_137], %615 {strides = array<i32>} : memref<2x8x8xf32, #tpu.memory_space<vmem>>, vector<1x8x8xf32>,
    %616 = tpu.concatenate %541, %564, %587, %610 in 1 : vector<1x8xf32>, vector<1x8xf32>, vector<1x8xf32>, vector<1x8xf32> -> vector<1x32xf32>
    %617 = vector.extract_strided_slice %513 {offsets = [8, 0], sizes = [8, 96], strides = [1, 1]} : vector<16x96xf32> to vector<8x96xf32>
    %618 = vector.extract_strided_slice %515 {offsets = [1, 0], sizes = [1, 8], strides = [1, 1]} : vector<2x8xf32> to vector<1x8xf32>
    %cst_138 = arith.constant 0.000000e+00 : f32
    %619 = vector.broadcast %cst_138 : f32 to vector<8x8xf32>
    %620 = vector.extract_strided_slice %617 {offsets = [0, 0], sizes = [8, 8], strides = [1, 1]} : vector<8x96xf32> to vector<8x8xf32>
    %621 = vector.extract_strided_slice %617 {offsets = [0, 32], sizes = [8, 8], strides = [1, 1]} : vector<8x96xf32> to vector<8x8xf32>
    %622 = vector.extract_strided_slice %617 {offsets = [0, 64], sizes = [8, 8], strides = [1, 1]} : vector<8x96xf32> to vector<8x8xf32>
    %623 = tpu.transpose %621, [1, 0] : vector<8x8xf32> -> vector<8x8xf32>
    %cst_139 = arith.constant dense<0.000000e+00> : vector<8x8xf32>
    %624 = tpu.matmul %620, %623, %cst_139 {dimension_numbers = #tpu.dot_dimension_numbers<[1], [0], [0], [1], [0, 0, 1, 1], [], []>} : vector<8x8xf32>, vector<8x8xf32>, vector<8x8xf32> -> vector<8x8xf32>
    %cst_140 = arith.constant 0.353553385 : f32
    %625 = vector.broadcast %cst_140 : f32 to vector<8x8xf32>
    %626 = arith.mulf %624, %625 : vector<8x8xf32>
    %627 = vector.broadcast %618 : vector<1x8xf32> to vector<8x8xf32>
    %628 = arith.addf %626, %627 : vector<8x8xf32>
    %cst_141 = arith.constant dense<0xFF800000> : vector<8xf32>
    %629 = vector.multi_reduction <maximumf>, %628, %cst_141 [1] : vector<8x8xf32> to vector<8xf32>
    %630 = vector.shape_cast %629 : vector<8xf32> to vector<8x1xf32>
    %631 = vector.broadcast %630 : vector<8x1xf32> to vector<8x8xf32>
    %632 = arith.subf %628, %631 : vector<8x8xf32>
    %633 = math.exp %632 : vector<8x8xf32>
    %cst_142 = arith.constant dense<0.000000e+00> : vector<8xf32>
    %634 = vector.multi_reduction <add>, %633, %cst_142 [1] : vector<8x8xf32> to vector<8xf32>
    %635 = vector.shape_cast %634 : vector<8xf32> to vector<8x1xf32>
    %636 = tpu.reciprocal %635 {approx = true} : vector<8x1xf32> -> vector<8x1xf32>
    %637 = vector.broadcast %636 : vector<8x1xf32> to vector<8x8xf32>
    %638 = arith.mulf %633, %637 : vector<8x8xf32>
    %639 = arith.addf %619, %638 : vector<8x8xf32>
    %cst_143 = arith.constant dense<0.000000e+00> : vector<8x8xf32>
    %640 = tpu.matmul %638, %622, %cst_143 {dimension_numbers = #tpu.dot_dimension_numbers<[1], [0], [0], [1], [0, 0, 1, 1], [], []>} : vector<8x8xf32>, vector<8x8xf32>, vector<8x8xf32> -> vector<8x8xf32>
    %cst_144 = arith.constant dense<0.000000e+00> : vector<8xf32>
    %641 = vector.multi_reduction <add>, %640, %cst_144 [0] : vector<8x8xf32> to vector<8xf32>
    %642 = vector.shape_cast %641 : vector<8xf32> to vector<1x8xf32>
    %643 = vector.extract_strided_slice %617 {offsets = [0, 8], sizes = [8, 8], strides = [1, 1]} : vector<8x96xf32> to vector<8x8xf32>
    %644 = vector.extract_strided_slice %617 {offsets = [0, 40], sizes = [8, 8], strides = [1, 1]} : vector<8x96xf32> to vector<8x8xf32>
    %645 = vector.extract_strided_slice %617 {offsets = [0, 72], sizes = [8, 8], strides = [1, 1]} : vector<8x96xf32> to vector<8x8xf32>
    %646 = tpu.transpose %644, [1, 0] : vector<8x8xf32> -> vector<8x8xf32>
    %cst_145 = arith.constant dense<0.000000e+00> : vector<8x8xf32>
    %647 = tpu.matmul %643, %646, %cst_145 {dimension_numbers = #tpu.dot_dimension_numbers<[1], [0], [0], [1], [0, 0, 1, 1], [], []>} : vector<8x8xf32>, vector<8x8xf32>, vector<8x8xf32> -> vector<8x8xf32>
    %cst_146 = arith.constant 0.353553385 : f32
    %648 = vector.broadcast %cst_146 : f32 to vector<8x8xf32>
    %649 = arith.mulf %647, %648 : vector<8x8xf32>
    %650 = vector.broadcast %618 : vector<1x8xf32> to vector<8x8xf32>
    %651 = arith.addf %649, %650 : vector<8x8xf32>
    %cst_147 = arith.constant dense<0xFF800000> : vector<8xf32>
    %652 = vector.multi_reduction <maximumf>, %651, %cst_147 [1] : vector<8x8xf32> to vector<8xf32>
    %653 = vector.shape_cast %652 : vector<8xf32> to vector<8x1xf32>
    %654 = vector.broadcast %653 : vector<8x1xf32> to vector<8x8xf32>
    %655 = arith.subf %651, %654 : vector<8x8xf32>
    %656 = math.exp %655 : vector<8x8xf32>
    %cst_148 = arith.constant dense<0.000000e+00> : vector<8xf32>
    %657 = vector.multi_reduction <add>, %656, %cst_148 [1] : vector<8x8xf32> to vector<8xf32>
    %658 = vector.shape_cast %657 : vector<8xf32> to vector<8x1xf32>
    %659 = tpu.reciprocal %658 {approx = true} : vector<8x1xf32> -> vector<8x1xf32>
    %660 = vector.broadcast %659 : vector<8x1xf32> to vector<8x8xf32>
    %661 = arith.mulf %656, %660 : vector<8x8xf32>
    %662 = arith.addf %639, %661 : vector<8x8xf32>
    %cst_149 = arith.constant dense<0.000000e+00> : vector<8x8xf32>
    %663 = tpu.matmul %661, %645, %cst_149 {dimension_numbers = #tpu.dot_dimension_numbers<[1], [0], [0], [1], [0, 0, 1, 1], [], []>} : vector<8x8xf32>, vector<8x8xf32>, vector<8x8xf32> -> vector<8x8xf32>
    %cst_150 = arith.constant dense<0.000000e+00> : vector<8xf32>
    %664 = vector.multi_reduction <add>, %663, %cst_150 [0] : vector<8x8xf32> to vector<8xf32>
    %665 = vector.shape_cast %664 : vector<8xf32> to vector<1x8xf32>
    %666 = vector.extract_strided_slice %617 {offsets = [0, 16], sizes = [8, 8], strides = [1, 1]} : vector<8x96xf32> to vector<8x8xf32>
    %667 = vector.extract_strided_slice %617 {offsets = [0, 48], sizes = [8, 8], strides = [1, 1]} : vector<8x96xf32> to vector<8x8xf32>
    %668 = vector.extract_strided_slice %617 {offsets = [0, 80], sizes = [8, 8], strides = [1, 1]} : vector<8x96xf32> to vector<8x8xf32>
    %669 = tpu.transpose %667, [1, 0] : vector<8x8xf32> -> vector<8x8xf32>
    %cst_151 = arith.constant dense<0.000000e+00> : vector<8x8xf32>
    %670 = tpu.matmul %666, %669, %cst_151 {dimension_numbers = #tpu.dot_dimension_numbers<[1], [0], [0], [1], [0, 0, 1, 1], [], []>} : vector<8x8xf32>, vector<8x8xf32>, vector<8x8xf32> -> vector<8x8xf32>
    %cst_152 = arith.constant 0.353553385 : f32
    %671 = vector.broadcast %cst_152 : f32 to vector<8x8xf32>
    %672 = arith.mulf %670, %671 : vector<8x8xf32>
    %673 = vector.broadcast %618 : vector<1x8xf32> to vector<8x8xf32>
    %674 = arith.addf %672, %673 : vector<8x8xf32>
    %cst_153 = arith.constant dense<0xFF800000> : vector<8xf32>
    %675 = vector.multi_reduction <maximumf>, %674, %cst_153 [1] : vector<8x8xf32> to vector<8xf32>
    %676 = vector.shape_cast %675 : vector<8xf32> to vector<8x1xf32>
    %677 = vector.broadcast %676 : vector<8x1xf32> to vector<8x8xf32>
    %678 = arith.subf %674, %677 : vector<8x8xf32>
    %679 = math.exp %678 : vector<8x8xf32>
    %cst_154 = arith.constant dense<0.000000e+00> : vector<8xf32>
    %680 = vector.multi_reduction <add>, %679, %cst_154 [1] : vector<8x8xf32> to vector<8xf32>
    %681 = vector.shape_cast %680 : vector<8xf32> to vector<8x1xf32>
    %682 = tpu.reciprocal %681 {approx = true} : vector<8x1xf32> -> vector<8x1xf32>
    %683 = vector.broadcast %682 : vector<8x1xf32> to vector<8x8xf32>
    %684 = arith.mulf %679, %683 : vector<8x8xf32>
    %685 = arith.addf %662, %684 : vector<8x8xf32>
    %cst_155 = arith.constant dense<0.000000e+00> : vector<8x8xf32>
    %686 = tpu.matmul %684, %668, %cst_155 {dimension_numbers = #tpu.dot_dimension_numbers<[1], [0], [0], [1], [0, 0, 1, 1], [], []>} : vector<8x8xf32>, vector<8x8xf32>, vector<8x8xf32> -> vector<8x8xf32>
    %cst_156 = arith.constant dense<0.000000e+00> : vector<8xf32>
    %687 = vector.multi_reduction <add>, %686, %cst_156 [0] : vector<8x8xf32> to vector<8xf32>
    %688 = vector.shape_cast %687 : vector<8xf32> to vector<1x8xf32>
    %689 = vector.extract_strided_slice %617 {offsets = [0, 24], sizes = [8, 8], strides = [1, 1]} : vector<8x96xf32> to vector<8x8xf32>
    %690 = vector.extract_strided_slice %617 {offsets = [0, 56], sizes = [8, 8], strides = [1, 1]} : vector<8x96xf32> to vector<8x8xf32>
    %691 = vector.extract_strided_slice %617 {offsets = [0, 88], sizes = [8, 8], strides = [1, 1]} : vector<8x96xf32> to vector<8x8xf32>
    %692 = tpu.transpose %690, [1, 0] : vector<8x8xf32> -> vector<8x8xf32>
    %cst_157 = arith.constant dense<0.000000e+00> : vector<8x8xf32>
    %693 = tpu.matmul %689, %692, %cst_157 {dimension_numbers = #tpu.dot_dimension_numbers<[1], [0], [0], [1], [0, 0, 1, 1], [], []>} : vector<8x8xf32>, vector<8x8xf32>, vector<8x8xf32> -> vector<8x8xf32>
    %cst_158 = arith.constant 0.353553385 : f32
    %694 = vector.broadcast %cst_158 : f32 to vector<8x8xf32>
    %695 = arith.mulf %693, %694 : vector<8x8xf32>
    %696 = vector.broadcast %618 : vector<1x8xf32> to vector<8x8xf32>
    %697 = arith.addf %695, %696 : vector<8x8xf32>
    %cst_159 = arith.constant dense<0xFF800000> : vector<8xf32>
    %698 = vector.multi_reduction <maximumf>, %697, %cst_159 [1] : vector<8x8xf32> to vector<8xf32>
    %699 = vector.shape_cast %698 : vector<8xf32> to vector<8x1xf32>
    %700 = vector.broadcast %699 : vector<8x1xf32> to vector<8x8xf32>
    %701 = arith.subf %697, %700 : vector<8x8xf32>
    %702 = math.exp %701 : vector<8x8xf32>
    %cst_160 = arith.constant dense<0.000000e+00> : vector<8xf32>
    %703 = vector.multi_reduction <add>, %702, %cst_160 [1] : vector<8x8xf32> to vector<8xf32>
    %704 = vector.shape_cast %703 : vector<8xf32> to vector<8x1xf32>
    %705 = tpu.reciprocal %704 {approx = true} : vector<8x1xf32> -> vector<8x1xf32>
    %706 = vector.broadcast %705 : vector<8x1xf32> to vector<8x8xf32>
    %707 = arith.mulf %702, %706 : vector<8x8xf32>
    %708 = arith.addf %685, %707 : vector<8x8xf32>
    %cst_161 = arith.constant dense<0.000000e+00> : vector<8x8xf32>
    %709 = tpu.matmul %707, %691, %cst_161 {dimension_numbers = #tpu.dot_dimension_numbers<[1], [0], [0], [1], [0, 0, 1, 1], [], []>} : vector<8x8xf32>, vector<8x8xf32>, vector<8x8xf32> -> vector<8x8xf32>
    %cst_162 = arith.constant dense<0.000000e+00> : vector<8xf32>
    %710 = vector.multi_reduction <add>, %709, %cst_162 [0] : vector<8x8xf32> to vector<8xf32>
    %711 = vector.shape_cast %710 : vector<8xf32> to vector<1x8xf32>
    %cst_163 = arith.constant 2.500000e-01 : f32
    %712 = vector.broadcast %cst_163 : f32 to vector<8x8xf32>
    %713 = arith.mulf %708, %712 : vector<8x8xf32>
    %c1 = arith.constant 1 : index
    %c0_164 = arith.constant 0 : index
    %c0_165 = arith.constant 0 : index
    %714 = vector.load %arg17[%c1, %c0_164, %c0_165] : memref<2x8x8xf32, #tpu.memory_space<vmem>>, vector<1x8x8xf32>
    %715 = vector.shape_cast %714 : vector<1x8x8xf32> to vector<8x8xf32>
    %716 = vector.shape_cast %713 : vector<8x8xf32> to vector<1x8x8xf32>
    tpu.vector_store %arg17[%c1, %c0_164, %c0_165], %716 {strides = array<i32>} : memref<2x8x8xf32, #tpu.memory_space<vmem>>, vector<1x8x8xf32>,
    %717 = tpu.concatenate %642, %665, %688, %711 in 1 : vector<1x8xf32>, vector<1x8xf32>, vector<1x8xf32>, vector<1x8xf32> -> vector<1x32xf32>
    %718 = tpu.concatenate %616, %717 in 0 : vector<1x32xf32>, vector<1x32xf32> -> vector<2x32xf32>
    %cst_166 = arith.constant dense<0.000000e+00> : vector<2x32xf32>
    %719 = tpu.matmul %718, %514, %cst_166 {dimension_numbers = #tpu.dot_dimension_numbers<[1], [0], [0], [1], [0, 0, 1, 1], [], []>} : vector<2x32xf32>, vector<32x32xf32>, vector<2x32xf32> -> vector<2x32xf32>
    %c0_167 = arith.constant 0 : index
    %c0_168 = arith.constant 0 : index
    %720 = vector.load %arg14[%c0_167, %c0_168] : memref<1x32xf32, #tpu.memory_space<vmem>>, vector<1x32xf32>
    %cst_169 = arith.constant 8.000000e+00 : f32
    %721 = vector.broadcast %cst_169 : f32 to vector<1x32xf32>
    %722 = arith.mulf %721, %720 : vector<1x32xf32>
    %723 = vector.broadcast %722 : vector<1x32xf32> to vector<2x32xf32>
    %724 = arith.addf %719, %723 : vector<2x32xf32>
    %cst_170 = arith.constant 0.000000e+00 : f32
    %725 = vector.broadcast %cst_170 : f32 to vector<2x32xf32>
    %726 = arith.maximumf %724, %725 : vector<2x32xf32>
    %c0_171 = arith.constant 0 : index
    %c0_172 = arith.constant 0 : index
    %727 = vector.load %arg16[%c0_171, %c0_172] : memref<2x32xf32, #tpu.memory_space<vmem>>, vector<2x32xf32>
    tpu.vector_store %arg16[%c0_171, %c0_172], %726 {strides = array<i32>} : memref<2x32xf32, #tpu.memory_space<vmem>>, vector<2x32xf32>,
    return
  }
}

</mosaic_0001>

<llo_original>
// kernel: sk_we_forward.1
$region0: #{sk_we_forward.1}
  #allocation0 [shape = 'u32[]', space=smem, size = 0x4, offset = 0x4, fixed_abs, tag = 'smem constant byte address 0x4 - core index']
  #allocation1 [shape = 'u32[144,128]{1,0:T(1,128)}', space=vmem, size = 0x12000, scoped, tag = 'internal scratch']
  %s0 = inlined_call_operand.vmem [shape: f32[16,192], index: 0, kind: input, shape index: {}]
  %s1 = inlined_call_operand.vmem [shape: bf16[192,384], index: 1, kind: input, shape index: {}]
  %s2 = inlined_call_operand.vmem [shape: f32[1,384], index: 2, kind: input, shape index: {}]
  %s3 = inlined_call_operand.vmem [shape: bf16[384,32], index: 3, kind: input, shape index: {}]
  %s4 = inlined_call_operand.vmem [shape: f32[1,32], index: 4, kind: input, shape index: {}]
  %s5 = inlined_call_operand.vmem [shape: f32[32,128], index: 5, kind: input, shape index: {}]
  %s6 = inlined_call_operand.vmem [shape: f32[32,128], index: 6, kind: input, shape index: {}]
  %s7 = inlined_call_operand.vmem [shape: f32[1,128], index: 7, kind: input, shape index: {}]
  %s8 = inlined_call_operand.vmem [shape: f32[32,128], index: 8, kind: input, shape index: {}]
  %s9 = inlined_call_operand.vmem [shape: f32[32,128], index: 9, kind: input, shape index: {}]
  %s10 = inlined_call_operand.vmem [shape: f32[1,128], index: 10, kind: input, shape index: {}]
  %s11 = inlined_call_operand.vmem [shape: f32[32,96], index: 11, kind: input, shape index: {}]
  %s12 = inlined_call_operand.vmem [shape: f32[1,96], index: 12, kind: input, shape index: {}]
  %s13 = inlined_call_operand.vmem [shape: f32[32,32], index: 13, kind: input, shape index: {}]
  %s14 = inlined_call_operand.vmem [shape: f32[1,32], index: 14, kind: input, shape index: {}]
  %s15 = inlined_call_operand.vmem [shape: f32[2,8], index: 15, kind: input, shape index: {}]
  %s16 = inlined_call_operand.hbm [shape: f32[2,32], index: 16, kind: output, shape index: {0}]
  %s17 = inlined_call_operand.hbm [shape: f32[2,8,8], index: 17, kind: output, shape index: {1}]
  %18 = xla_tuple %s16, %s17
  %s19 = sld [smem:[#allocation0]]
  $region82: #{sk_we_forward.1} parent=0
    _
  %s21 = ssub.s32 1, %s19
  %s22 = scalar_select 0, %s21, %s19
  $region1: #{sk_we_forward.1} parent=0
    #allocation2 [shape = 'u8[1024]{0}', space=vmem, size = 0x400, scoped, tag = 'output window, operand 0, single buffered']
    #allocation3 [shape = 's32[1]{0}', space=sflag, size = 0x4, scoped, tag = 'scoped memory for sk_we_forward.1']
    #allocation4 [shape = 'u8[8192]{0}', space=vmem, size = 0x2000, scoped, tag = 'output window, operand 1, single buffered']
    #allocation5 [shape = 's32[1]{0}', space=sflag, size = 0x4, scoped, tag = 'scoped memory for sk_we_forward.1']
    %23 = vsyncpa [#allocation3], 0
    %24 = vsyncpa [#allocation5], 0
    // Predicated region
    $region2: #{sk_we_forward.1} parent=1 // pred_check
      _
    $region3: #{sk_we_forward.1} parent=1 // pred_check_branch
      %26 = sbr.rel (0) target = $region5
    $region4: #{sk_we_forward.1} parent=1 // pred_region
      _
    $region5: #{sk_we_forward.1} parent=1 // pred_fallthru
      _
    // Predicated region
    $region6: #{sk_we_forward.1} parent=1 // pred_check
      _
    $region7: #{sk_we_forward.1} parent=1 // pred_check_branch
      %28 = sbr.rel (0) target = $region9
    $region8: #{sk_we_forward.1} parent=1 // pred_region
      _
    $region9: #{sk_we_forward.1} parent=1 // pred_fallthru
      _
    // Predicated region
    $region10: #{sk_we_forward.1} parent=1 // pred_check
      _
    $region11: #{sk_we_forward.1} parent=1 // pred_check_branch
      %30 = sbr.rel (0) target = $region13
    $region12: #{sk_we_forward.1} parent=1 // pred_region
      _
    $region13: #{sk_we_forward.1} parent=1 // pred_fallthru
      _
    // Predicated region
    $region14: #{sk_we_forward.1} parent=1 // pred_check
      _
    $region15: #{sk_we_forward.1} parent=1 // pred_check_branch
      %32 = sbr.rel (0) target = $region17
    $region16: #{sk_we_forward.1} parent=1 // pred_region
      _
    $region17: #{sk_we_forward.1} parent=1 // pred_fallthru
      _
    // Predicated region
    $region18: #{sk_we_forward.1} parent=1 // pred_check
      _
    $region19: #{sk_we_forward.1} parent=1 // pred_check_branch
      %34 = sbr.rel (0) target = $region21
    $region20: #{sk_we_forward.1} parent=1 // pred_region
      _
    $region21: #{sk_we_forward.1} parent=1 // pred_fallthru
      _
    // Predicated region
    $region22: #{sk_we_forward.1} parent=1 // pred_check
      _
    $region23: #{sk_we_forward.1} parent=1 // pred_check_branch
      %36 = sbr.rel (0) target = $region25
    $region24: #{sk_we_forward.1} parent=1 // pred_region
      _
    $region25: #{sk_we_forward.1} parent=1 // pred_fallthru
      _
    // Predicated region
    $region26: #{sk_we_forward.1} parent=1 // pred_check
      _
    $region27: #{sk_we_forward.1} parent=1 // pred_check_branch
      %38 = sbr.rel (0) target = $region29
    $region28: #{sk_we_forward.1} parent=1 // pred_region
      _
    $region29: #{sk_we_forward.1} parent=1 // pred_fallthru
      _
    // Predicated region
    $region30: #{sk_we_forward.1} parent=1 // pred_check
      _
    $region31: #{sk_we_forward.1} parent=1 // pred_check_branch
      %40 = sbr.rel (0) target = $region33
    $region32: #{sk_we_forward.1} parent=1 // pred_region
      _
    $region33: #{sk_we_forward.1} parent=1 // pred_fallthru
      _
    // Predicated region
    $region34: #{sk_we_forward.1} parent=1 // pred_check
      _
    $region35: #{sk_we_forward.1} parent=1 // pred_check_branch
      %42 = sbr.rel (0) target = $region37
    $region36: #{sk_we_forward.1} parent=1 // pred_region
      _
    $region37: #{sk_we_forward.1} parent=1 // pred_fallthru
      _
    // Predicated region
    $region38: #{sk_we_forward.1} parent=1 // pred_check
      _
    $region39: #{sk_we_forward.1} parent=1 // pred_check_branch
      %44 = sbr.rel (0) target = $region41
    $region40: #{sk_we_forward.1} parent=1 // pred_region
      _
    $region41: #{sk_we_forward.1} parent=1 // pred_fallthru
      _
    // Predicated region
    $region42: #{sk_we_forward.1} parent=1 // pred_check
      _
    $region43: #{sk_we_forward.1} parent=1 // pred_check_branch
      %46 = sbr.rel (0) target = $region45
    $region44: #{sk_we_forward.1} parent=1 // pred_region
      _
    $region45: #{sk_we_forward.1} parent=1 // pred_fallthru
      _
    // Predicated region
    $region46: #{sk_we_forward.1} parent=1 // pred_check
      _
    $region47: #{sk_we_forward.1} parent=1 // pred_check_branch
      %48 = sbr.rel (0) target = $region49
    $region48: #{sk_we_forward.1} parent=1 // pred_region
      _
    $region49: #{sk_we_forward.1} parent=1 // pred_fallthru
      _
    // Predicated region
    $region50: #{sk_we_forward.1} parent=1 // pred_check
      _
    $region51: #{sk_we_forward.1} parent=1 // pred_check_branch
      %50 = sbr.rel (0) target = $region53
    $region52: #{sk_we_forward.1} parent=1 // pred_region
      _
    $region53: #{sk_we_forward.1} parent=1 // pred_fallthru
      _
    // Predicated region
    $region54: #{sk_we_forward.1} parent=1 // pred_check
      _
    $region55: #{sk_we_forward.1} parent=1 // pred_check_branch
      %52 = sbr.rel (0) target = $region57
    $region56: #{sk_we_forward.1} parent=1 // pred_region
      _
    $region57: #{sk_we_forward.1} parent=1 // pred_fallthru
      _
    // Predicated region
    $region58: #{sk_we_forward.1} parent=1 // pred_check
      _
    $region59: #{sk_we_forward.1} parent=1 // pred_check_branch
      %54 = sbr.rel (0) target = $region61
    $region60: #{sk_we_forward.1} parent=1 // pred_region
      _
    $region61: #{sk_we_forward.1} parent=1 // pred_fallthru
      _
    // Predicated region
    $region62: #{sk_we_forward.1} parent=1 // pred_check
      _
    $region63: #{sk_we_forward.1} parent=1 // pred_check_branch
      %56 = sbr.rel (0) target = $region65
    $region64: #{sk_we_forward.1} parent=1 // pred_region
      _
    $region65: #{sk_we_forward.1} parent=1 // pred_fallthru
      _
    %v58 = vld [vmem:[%s0] sm:$0xff]
    %v59 = vld [vmem:[%s0 + $0x8] sm:$0xff]
    %v60 = vld [vmem:[%s0 + $0x10] sm:$0xff]
    %v61 = vld [vmem:[%s0 + $0x18] sm:$0xff]
    %v62 = vpack.c.bf16 %v60, %v58
    %v63 = vpack.c.bf16 %v61, %v59
    %v64 = vld [vmem:[%s1] sm:$0xff]
    %v65 = vld [vmem:[%s1 + $0x8] sm:$0xf]
    %v66 = vld [vmem:[%s1 + $0xc] sm:$0xff]
    %v67 = vld [vmem:[%s1 + $0x14] sm:$0xf]
    %v68 = vld [vmem:[%s1 + $0x18] sm:$0xff]
    %v69 = vld [vmem:[%s1 + $0x20] sm:$0xf]
    %v70 = vld [vmem:[%s1 + $0x24] sm:$0xff]
    %v71 = vld [vmem:[%s1 + $0x2c] sm:$0xf]
    %v72 = vld [vmem:[%s1 + $0x30] sm:$0xff]
    %v73 = vld [vmem:[%s1 + $0x38] sm:$0xf]
    %v74 = vld [vmem:[%s1 + $0x3c] sm:$0xff]
    %v75 = vld [vmem:[%s1 + $0x44] sm:$0xf]
    %v76 = vld [vmem:[%s1 + $0x48] sm:$0xff]
    %v77 = vld [vmem:[%s1 + $0x50] sm:$0xf]
    %v78 = vld [vmem:[%s1 + $0x54] sm:$0xff]
    %v79 = vld [vmem:[%s1 + $0x5c] sm:$0xf]
    %v80 = vld [vmem:[%s1 + $0x60] sm:$0xff]
    %v81 = vld [vmem:[%s1 + $0x68] sm:$0xf]
    %v82 = vld [vmem:[%s1 + $0x6c] sm:$0xff]
    %v83 = vld [vmem:[%s1 + $0x74] sm:$0xf]
    %v84 = vld [vmem:[%s1 + $0x78] sm:$0xff]
    %v85 = vld [vmem:[%s1 + $0x80] sm:$0xf]
    %v86 = vld [vmem:[%s1 + $0x84] sm:$0xff]
    %v87 = vld [vmem:[%s1 + $0x8c] sm:$0xf]
    %v88 = vld [vmem:[%s1 + $0x90] sm:$0xff]
    %v89 = vld [vmem:[%s1 + $0x98] sm:$0xf]
    %v90 = vld [vmem:[%s1 + $0x9c] sm:$0xff]
    %v91 = vld [vmem:[%s1 + $0xa4] sm:$0xf]
    %v92 = vld [vmem:[%s1 + $0xa8] sm:$0xff]
    %v93 = vld [vmem:[%s1 + $0xb0] sm:$0xf]
    %v94 = vld [vmem:[%s1 + $0xb4] sm:$0xff]
    %v95 = vld [vmem:[%s1 + $0xbc] sm:$0xf]
    %v96 = vld [vmem:[%s1 + $0xc0] sm:$0xff]
    %v97 = vld [vmem:[%s1 + $0xc8] sm:$0xf]
    %v98 = vld [vmem:[%s1 + $0xcc] sm:$0xff]
    %v99 = vld [vmem:[%s1 + $0xd4] sm:$0xf]
    %v100 = vld [vmem:[%s1 + $0xd8] sm:$0xff]
    %v101 = vld [vmem:[%s1 + $0xe0] sm:$0xf]
    %v102 = vld [vmem:[%s1 + $0xe4] sm:$0xff]
    %v103 = vld [vmem:[%s1 + $0xec] sm:$0xf]
    %v104 = vld [vmem:[%s1 + $0xf0] sm:$0xff]
    %v105 = vld [vmem:[%s1 + $0xf8] sm:$0xf]
    %v106 = vld [vmem:[%s1 + $0xfc] sm:$0xff]
    %v107 = vld [vmem:[%s1 + $0x104] sm:$0xf]
    %v108 = vld [vmem:[%s1 + $0x108] sm:$0xff]
    %v109 = vld [vmem:[%s1 + $0x110] sm:$0xf]
    %v110 = vld [vmem:[%s1 + $0x114] sm:$0xff]
    %v111 = vld [vmem:[%s1 + $0x11c] sm:$0xf]
    %v112 = vld [vmem:[%s2] sm:$0x7]
    %v114 = vlaneseq
    %v115 = vshrl.u32 %v114, 7
    %v116 = vsub.s32 0, %v115
    %v117 = vrot.slane %v112, %v116
    %v118 = vlaneseq
    %v119 = vshrl.u32 %v118, 7
    %v120 = vsub.s32 1, %v119
    %v121 = vrot.slane %v112, %v120
    %v122 = vlaneseq
    %v123 = vshrl.u32 %v122, 7
    %v124 = vsub.s32 2, %v123
    %v125 = vrot.slane %v112, %v124
    %v177 = vunpack.c.l.b16 %v64
    %v178 = vunpack.c.h.b16 %v64
    %v179 = vunpack.c.l.b16 %v65
    %v180 = vunpack.c.l.b16 %v66
    %v181 = vunpack.c.h.b16 %v66
    %v182 = vunpack.c.l.b16 %v67
    %v183 = vunpack.c.l.b16 %v68
    %v184 = vunpack.c.h.b16 %v68
    %v185 = vunpack.c.l.b16 %v69
    %v186 = vunpack.c.l.b16 %v70
    %v187 = vunpack.c.h.b16 %v70
    %v188 = vunpack.c.l.b16 %v71
    %v189 = vunpack.c.l.b16 %v72
    %v190 = vunpack.c.h.b16 %v72
    %v191 = vunpack.c.l.b16 %v73
    %v192 = vunpack.c.l.b16 %v74
    %v193 = vunpack.c.h.b16 %v74
    %v194 = vunpack.c.l.b16 %v75
    %v195 = vunpack.c.l.b16 %v76
    %v196 = vunpack.c.h.b16 %v76
    %v197 = vunpack.c.l.b16 %v77
    %v198 = vunpack.c.l.b16 %v78
    %v199 = vunpack.c.h.b16 %v78
    %v200 = vunpack.c.l.b16 %v79
    %v201 = vunpack.c.l.b16 %v80
    %v202 = vunpack.c.h.b16 %v80
    %v203 = vunpack.c.l.b16 %v81
    %v204 = vunpack.c.l.b16 %v82
    %v205 = vunpack.c.h.b16 %v82
    %v206 = vunpack.c.l.b16 %v83
    %v207 = vunpack.c.l.b16 %v84
    %v208 = vunpack.c.h.b16 %v84
    %v209 = vunpack.c.l.b16 %v85
    %v210 = vunpack.c.l.b16 %v86
    %v211 = vunpack.c.h.b16 %v86
    %v212 = vunpack.c.l.b16 %v87
    %v213 = vunpack.c.l.b16 %v88
    %v214 = vunpack.c.h.b16 %v88
    %v215 = vunpack.c.l.b16 %v89
    %v216 = vunpack.c.l.b16 %v90
    %v217 = vunpack.c.h.b16 %v90
    %v218 = vunpack.c.l.b16 %v91
    %v219 = vunpack.c.l.b16 %v92
    %v220 = vunpack.c.h.b16 %v92
    %v221 = vunpack.c.l.b16 %v93
    %v222 = vunpack.c.l.b16 %v94
    %v223 = vunpack.c.h.b16 %v94
    %v224 = vunpack.c.l.b16 %v95
    %v225 = vunpack.c.l.b16 %v96
    %v226 = vunpack.c.h.b16 %v96
    %v227 = vunpack.c.l.b16 %v97
    %v228 = vunpack.c.l.b16 %v98
    %v229 = vunpack.c.h.b16 %v98
    %v230 = vunpack.c.l.b16 %v99
    %v231 = vunpack.c.l.b16 %v100
    %v232 = vunpack.c.h.b16 %v100
    %v233 = vunpack.c.l.b16 %v101
    %v234 = vunpack.c.l.b16 %v102
    %v235 = vunpack.c.h.b16 %v102
    %v236 = vunpack.c.l.b16 %v103
    %v237 = vunpack.c.l.b16 %v104
    %v238 = vunpack.c.h.b16 %v104
    %v239 = vunpack.c.l.b16 %v105
    %v240 = vunpack.c.l.b16 %v106
    %v241 = vunpack.c.h.b16 %v106
    %v242 = vunpack.c.l.b16 %v107
    %v243 = vunpack.c.l.b16 %v108
    %v244 = vunpack.c.h.b16 %v108
    %v245 = vunpack.c.l.b16 %v109
    %v246 = vunpack.c.l.b16 %v110
    %v247 = vunpack.c.h.b16 %v110
    %v248 = vunpack.c.l.b16 %v111
    %v249 = vpack.c.b16 %v180, %v177
    %v250 = vpack.c.b16 %v181, %v178
    %v251 = vpack.c.b16 %v182, %v179
    %v252 = vpack.c.b16 %v186, %v183
    %v253 = vpack.c.b16 %v187, %v184
    %v254 = vpack.c.b16 %v188, %v185
    %v255 = vpack.c.b16 %v192, %v189
    %v256 = vpack.c.b16 %v193, %v190
    %v257 = vpack.c.b16 %v194, %v191
    %v258 = vpack.c.b16 %v198, %v195
    %v259 = vpack.c.b16 %v199, %v196
    %v260 = vpack.c.b16 %v200, %v197
    %v261 = vpack.c.b16 %v204, %v201
    %v262 = vpack.c.b16 %v205, %v202
    %v263 = vpack.c.b16 %v206, %v203
    %v264 = vpack.c.b16 %v210, %v207
    %v265 = vpack.c.b16 %v211, %v208
    %v266 = vpack.c.b16 %v212, %v209
    %v267 = vpack.c.b16 %v216, %v213
    %v268 = vpack.c.b16 %v217, %v214
    %v269 = vpack.c.b16 %v218, %v215
    %v270 = vpack.c.b16 %v222, %v219
    %v271 = vpack.c.b16 %v223, %v220
    %v272 = vpack.c.b16 %v224, %v221
    %v273 = vpack.c.b16 %v228, %v225
    %v274 = vpack.c.b16 %v229, %v226
    %v275 = vpack.c.b16 %v230, %v227
    %v276 = vpack.c.b16 %v234, %v231
    %v277 = vpack.c.b16 %v235, %v232
    %v278 = vpack.c.b16 %v236, %v233
    %v279 = vpack.c.b16 %v240, %v237
    %v280 = vpack.c.b16 %v241, %v238
    %v281 = vpack.c.b16 %v242, %v239
    %v282 = vpack.c.b16 %v246, %v243
    %v283 = vpack.c.b16 %v247, %v244
    %v284 = vpack.c.b16 %v248, %v245
    %vm321 = vcmask 523264
    %v323 = vsel %vm321, %v63, 0
    %325 = vmatprep.subr.bf16.mxu0 %v250
    %326 = vmatpush1.bf16.msra.mxu0 %v249
    %327 = vmatprep.subr.bf16.mxu0 %v253
    %328 = vmatpush1.bf16.msra.mxu0 %v252
    %329 = vmatprep.subr.bf16.mxu0 %v256
    %330 = vmatpush1.bf16.msra.mxu0 %v255
    %331 = vmatprep.subr.bf16.mxu0 %v259
    %332 = vmatpush1.bf16.msra.mxu0 %v258
    %333 = vmatprep.subr.bf16.mxu0 %v262
    %334 = vmatpush1.bf16.msra.mxu0 %v261
    %335 = vmatprep.subr.bf16.mxu0 %v265
    %336 = vmatpush1.bf16.msra.mxu0 %v264
    %337 = vmatprep.subr.bf16.mxu0 %v268
    %338 = vmatpush1.bf16.msra.mxu0 %v267
    %339 = vmatprep.subr.bf16.mxu0 %v271
    %340 = vmatpush1.bf16.msra.mxu0 %v270
    %341 = vmatprep.subr.bf16.mxu0 %v274
    %342 = vmatpush1.bf16.msra.mxu0 %v273
    %343 = vmatprep.subr.bf16.mxu0 %v277
    %344 = vmatpush1.bf16.msra.mxu0 %v276
    %345 = vmatprep.subr.bf16.mxu0 %v280
    %346 = vmatpush1.bf16.msra.mxu0 %v279
    %347 = vmatprep.subr.bf16.mxu0 %v283
    %348 = vmatpush1.bf16.msra.mxu0 %v282
    %349 = vmatprep.subr.bf16.mxu0 0
    %350 = vmatpush1.bf16.msra.mxu0 0
    %351 = vmatprep.subr.bf16.mxu0 0
    %352 = vmatpush1.bf16.msra.mxu0 0
    %353 = vmatprep.subr.bf16.mxu0 0
    %354 = vmatpush1.bf16.msra.mxu0 0
    %355 = vmatprep.subr.bf16.mxu0 0
    %356 = vmatpush1.bf16.msra.mxu0 0
    %357 = vmatprep.mubr.bf16.mxu0 %v323
    %358 = vmatmul.mubr.bf16.gmra.mrb[0].mxu0 %v62
    %v359 = vpop.f32.mrb[0].mxu0
    %v360 = vadd.f32 %v117, %v359
    %v361 = vpop.f32.mrb[0].mxu0
    %v362 = vadd.f32 %v121, %v361
    %v363 = vpop.f32.mrb[0].mxu0
    %v364 = vadd.f32 %v117, %v363
    %v365 = vpop.f32.mrb[0].mxu0
    %v366 = vadd.f32 %v121, %v365
    %367 = vdwg.mxu0
    %368 = vmatprep.subr.bf16.mxu0 0
    %369 = vmatpush1.bf16.msra.mxu0 %v251
    %370 = vmatprep.subr.bf16.mxu0 0
    %371 = vmatpush1.bf16.msra.mxu0 %v254
    %372 = vmatprep.subr.bf16.mxu0 0
    %373 = vmatpush1.bf16.msra.mxu0 %v257
    %374 = vmatprep.subr.bf16.mxu0 0
    %375 = vmatpush1.bf16.msra.mxu0 %v260
    %376 = vmatprep.subr.bf16.mxu0 0
    %377 = vmatpush1.bf16.msra.mxu0 %v263
    %378 = vmatprep.subr.bf16.mxu0 0
    %379 = vmatpush1.bf16.msra.mxu0 %v266
    %380 = vmatprep.subr.bf16.mxu0 0
    %381 = vmatpush1.bf16.msra.mxu0 %v269
    %382 = vmatprep.subr.bf16.mxu0 0
    %383 = vmatpush1.bf16.msra.mxu0 %v272
    %384 = vmatprep.subr.bf16.mxu0 0
    %385 = vmatpush1.bf16.msra.mxu0 %v275
    %386 = vmatprep.subr.bf16.mxu0 0
    %387 = vmatpush1.bf16.msra.mxu0 %v278
    %388 = vmatprep.subr.bf16.mxu0 0
    %389 = vmatpush1.bf16.msra.mxu0 %v281
    %390 = vmatprep.subr.bf16.mxu0 0
    %391 = vmatpush1.bf16.msra.mxu0 %v284
    %392 = vmatprep.subr.bf16.mxu0 0
    %393 = vmatpush1.bf16.msra.mxu0 0
    %394 = vmatprep.subr.bf16.mxu0 0
    %395 = vmatpush1.bf16.msra.mxu0 0
    %396 = vmatprep.subr.bf16.mxu0 0
    %397 = vmatpush1.bf16.msra.mxu0 0
    %398 = vmatprep.subr.bf16.mxu0 0
    %399 = vmatpush1.bf16.msra.mxu0 0
    %400 = vmatprep.mubr.bf16.mxu0 %v323
    %401 = vmatmul.mubr.bf16.gmra.mrb[0].mxu0 %v62
    %v402 = vpop.f32.mrb[0].mxu0
    %v403 = vadd.f32 %v125, %v402
    %v404 = vpop.f32.mrb[0].mxu0
    %v405 = vpop.f32.mrb[0].mxu0
    %v406 = vadd.f32 %v125, %v405
    %v407 = vpop.f32.mrb[0].mxu0
    %408 = vdwg.mxu0
    %v409 = vmax.f32 %v360, 0.0
    %v410 = vmax.f32 %v362, 0.0
    %v411 = vmax.f32 %v403, 0.0
    %v412 = vmax.f32 %v364, 0.0
    %v413 = vmax.f32 %v366, 0.0
    %v414 = vmax.f32 %v406, 0.0
    %v415 = vpack.c.bf16 %v412, %v409
    %v416 = vpack.c.bf16 %v413, %v410
    %v417 = vpack.c.bf16 %v414, %v411
    %v418 = vld [vmem:[%s3] sm:$0xf]
    %v419 = vld [vmem:[%s3 + $0x4] sm:$0xf]
    %v420 = vld [vmem:[%s3 + $0x8] sm:$0xf]
    %v421 = vld [vmem:[%s3 + $0xc] sm:$0xf]
    %v422 = vld [vmem:[%s3 + $0x10] sm:$0xf]
    %v423 = vld [vmem:[%s3 + $0x14] sm:$0xf]
    %v424 = vld [vmem:[%s3 + $0x18] sm:$0xf]
    %v425 = vld [vmem:[%s3 + $0x1c] sm:$0xf]
    %v426 = vld [vmem:[%s3 + $0x20] sm:$0xf]
    %v427 = vld [vmem:[%s3 + $0x24] sm:$0xf]
    %v428 = vld [vmem:[%s3 + $0x28] sm:$0xf]
    %v429 = vld [vmem:[%s3 + $0x2c] sm:$0xf]
    %v430 = vld [vmem:[%s3 + $0x30] sm:$0xf]
    %v431 = vld [vmem:[%s3 + $0x34] sm:$0xf]
    %v432 = vld [vmem:[%s3 + $0x38] sm:$0xf]
    %v433 = vld [vmem:[%s3 + $0x3c] sm:$0xf]
    %v434 = vld [vmem:[%s3 + $0x40] sm:$0xf]
    %v435 = vld [vmem:[%s3 + $0x44] sm:$0xf]
    %v436 = vld [vmem:[%s3 + $0x48] sm:$0xf]
    %v437 = vld [vmem:[%s3 + $0x4c] sm:$0xf]
    %v438 = vld [vmem:[%s3 + $0x50] sm:$0xf]
    %v439 = vld [vmem:[%s3 + $0x54] sm:$0xf]
    %v440 = vld [vmem:[%s3 + $0x58] sm:$0xf]
    %v441 = vld [vmem:[%s3 + $0x5c] sm:$0xf]
    %v442 = vld [vmem:[%s3 + $0x60] sm:$0xf]
    %v443 = vld [vmem:[%s3 + $0x64] sm:$0xf]
    %v444 = vld [vmem:[%s3 + $0x68] sm:$0xf]
    %v445 = vld [vmem:[%s3 + $0x6c] sm:$0xf]
    %v446 = vld [vmem:[%s3 + $0x70] sm:$0xf]
    %v447 = vld [vmem:[%s3 + $0x74] sm:$0xf]
    %v448 = vld [vmem:[%s3 + $0x78] sm:$0xf]
    %v449 = vld [vmem:[%s3 + $0x7c] sm:$0xf]
    %v450 = vld [vmem:[%s3 + $0x80] sm:$0xf]
    %v451 = vld [vmem:[%s3 + $0x84] sm:$0xf]
    %v452 = vld [vmem:[%s3 + $0x88] sm:$0xf]
    %v453 = vld [vmem:[%s3 + $0x8c] sm:$0xf]
    %v454 = vld [vmem:[%s3 + $0x90] sm:$0xf]
    %v455 = vld [vmem:[%s3 + $0x94] sm:$0xf]
    %v456 = vld [vmem:[%s3 + $0x98] sm:$0xf]
    %v457 = vld [vmem:[%s3 + $0x9c] sm:$0xf]
    %v458 = vld [vmem:[%s3 + $0xa0] sm:$0xf]
    %v459 = vld [vmem:[%s3 + $0xa4] sm:$0xf]
    %v460 = vld [vmem:[%s3 + $0xa8] sm:$0xf]
    %v461 = vld [vmem:[%s3 + $0xac] sm:$0xf]
    %v462 = vld [vmem:[%s3 + $0xb0] sm:$0xf]
    %v463 = vld [vmem:[%s3 + $0xb4] sm:$0xf]
    %v464 = vld [vmem:[%s3 + $0xb8] sm:$0xf]
    %v465 = vld [vmem:[%s3 + $0xbc] sm:$0xf]
    %v466 = vld [vmem:[%s4] sm:$0x1]
    %v468 = vlaneseq
    %v469 = vshrl.u32 %v468, 7
    %v470 = vsub.s32 0, %v469
    %v471 = vrot.slane %v466, %v470
    %v521 = vunpack.c.l.b16 %v418
    %v522 = vunpack.c.l.b16 %v419
    %v523 = vunpack.c.l.b16 %v420
    %v524 = vunpack.c.l.b16 %v421
    %v525 = vunpack.c.l.b16 %v422
    %v526 = vunpack.c.l.b16 %v423
    %v527 = vunpack.c.l.b16 %v424
    %v528 = vunpack.c.l.b16 %v425
    %v529 = vunpack.c.l.b16 %v426
    %v530 = vunpack.c.l.b16 %v427
    %v531 = vunpack.c.l.b16 %v428
    %v532 = vunpack.c.l.b16 %v429
    %v533 = vunpack.c.l.b16 %v430
    %v534 = vunpack.c.l.b16 %v431
    %v535 = vunpack.c.l.b16 %v432
    %v536 = vunpack.c.l.b16 %v433
    %v537 = vunpack.c.l.b16 %v434
    %v538 = vunpack.c.l.b16 %v435
    %v539 = vunpack.c.l.b16 %v436
    %v540 = vunpack.c.l.b16 %v437
    %v541 = vunpack.c.l.b16 %v438
    %v542 = vunpack.c.l.b16 %v439
    %v543 = vunpack.c.l.b16 %v440
    %v544 = vunpack.c.l.b16 %v441
    %v545 = vunpack.c.l.b16 %v442
    %v546 = vunpack.c.l.b16 %v443
    %v547 = vunpack.c.l.b16 %v444
    %v548 = vunpack.c.l.b16 %v445
    %v549 = vunpack.c.l.b16 %v446
    %v550 = vunpack.c.l.b16 %v447
    %v551 = vunpack.c.l.b16 %v448
    %v552 = vunpack.c.l.b16 %v449
    %v553 = vunpack.c.l.b16 %v450
    %v554 = vunpack.c.l.b16 %v451
    %v555 = vunpack.c.l.b16 %v452
    %v556 = vunpack.c.l.b16 %v453
    %v557 = vunpack.c.l.b16 %v454
    %v558 = vunpack.c.l.b16 %v455
    %v559 = vunpack.c.l.b16 %v456
    %v560 = vunpack.c.l.b16 %v457
    %v561 = vunpack.c.l.b16 %v458
    %v562 = vunpack.c.l.b16 %v459
    %v563 = vunpack.c.l.b16 %v460
    %v564 = vunpack.c.l.b16 %v461
    %v565 = vunpack.c.l.b16 %v462
    %v566 = vunpack.c.l.b16 %v463
    %v567 = vunpack.c.l.b16 %v464
    %v568 = vunpack.c.l.b16 %v465
    %v569 = vpack.c.b16 %v522, %v521
    %v570 = vpack.c.b16 %v524, %v523
    %v571 = vpack.c.b16 %v526, %v525
    %v572 = vpack.c.b16 %v528, %v527
    %v573 = vpack.c.b16 %v530, %v529
    %v574 = vpack.c.b16 %v532, %v531
    %v575 = vpack.c.b16 %v534, %v533
    %v576 = vpack.c.b16 %v536, %v535
    %v577 = vpack.c.b16 %v538, %v537
    %v578 = vpack.c.b16 %v540, %v539
    %v579 = vpack.c.b16 %v542, %v541
    %v580 = vpack.c.b16 %v544, %v543
    %v581 = vpack.c.b16 %v546, %v545
    %v582 = vpack.c.b16 %v548, %v547
    %v583 = vpack.c.b16 %v550, %v549
    %v584 = vpack.c.b16 %v552, %v551
    %v585 = vpack.c.b16 %v554, %v553
    %v586 = vpack.c.b16 %v556, %v555
    %v587 = vpack.c.b16 %v558, %v557
    %v588 = vpack.c.b16 %v560, %v559
    %v589 = vpack.c.b16 %v562, %v561
    %v590 = vpack.c.b16 %v564, %v563
    %v591 = vpack.c.b16 %v566, %v565
    %v592 = vpack.c.b16 %v568, %v567
    %617 = vmatprep.subr.bf16.mxu0 0
    %618 = vmatpush1.bf16.msra.mxu0 %v569
    %619 = vmatprep.subr.bf16.mxu0 0
    %620 = vmatpush1.bf16.msra.mxu0 %v570
    %621 = vmatprep.subr.bf16.mxu0 0
    %622 = vmatpush1.bf16.msra.mxu0 %v571
    %623 = vmatprep.subr.bf16.mxu0 0
    %624 = vmatpush1.bf16.msra.mxu0 %v572
    %625 = vmatprep.subr.bf16.mxu0 0
    %626 = vmatpush1.bf16.msra.mxu0 %v573
    %627 = vmatprep.subr.bf16.mxu0 0
    %628 = vmatpush1.bf16.msra.mxu0 %v574
    %629 = vmatprep.subr.bf16.mxu0 0
    %630 = vmatpush1.bf16.msra.mxu0 %v575
    %631 = vmatprep.subr.bf16.mxu0 0
    %632 = vmatpush1.bf16.msra.mxu0 %v576
    %633 = vmatprep.subr.bf16.mxu0 0
    %634 = vmatpush1.bf16.msra.mxu0 %v577
    %635 = vmatprep.subr.bf16.mxu0 0
    %636 = vmatpush1.bf16.msra.mxu0 %v578
    %637 = vmatprep.subr.bf16.mxu0 0
    %638 = vmatpush1.bf16.msra.mxu0 %v579
    %639 = vmatprep.subr.bf16.mxu0 0
    %640 = vmatpush1.bf16.msra.mxu0 %v580
    %641 = vmatprep.subr.bf16.mxu0 0
    %642 = vmatpush1.bf16.msra.mxu0 %v581
    %643 = vmatprep.subr.bf16.mxu0 0
    %644 = vmatpush1.bf16.msra.mxu0 %v582
    %645 = vmatprep.subr.bf16.mxu0 0
    %646 = vmatpush1.bf16.msra.mxu0 %v583
    %647 = vmatprep.subr.bf16.mxu0 0
    %648 = vmatpush1.bf16.msra.mxu0 %v584
    %649 = vmatprep.mubr.bf16.mxu0 %v416
    %650 = vmatmul.mubr.bf16.gmra.mrb[0].mxu0 %v415
    %v651 = vpop.f32.mrb[0].mxu0
    %v652 = vadd.f32 %v471, %v651
    %v653 = vpop.f32.mrb[0].mxu0
    %v654 = vpop.f32.mrb[0].mxu0
    %v655 = vadd.f32 %v471, %v654
    %v656 = vpop.f32.mrb[0].mxu0
    %657 = vdwg.mxu0
    %658 = vmatprep.subr.bf16.mxu0 0
    %659 = vmatpush1.bf16.msra.mxu0 %v585
    %660 = vmatprep.subr.bf16.mxu0 0
    %661 = vmatpush1.bf16.msra.mxu0 %v586
    %662 = vmatprep.subr.bf16.mxu0 0
    %663 = vmatpush1.bf16.msra.mxu0 %v587
    %664 = vmatprep.subr.bf16.mxu0 0
    %665 = vmatpush1.bf16.msra.mxu0 %v588
    %666 = vmatprep.subr.bf16.mxu0 0
    %667 = vmatpush1.bf16.msra.mxu0 %v589
    %668 = vmatprep.subr.bf16.mxu0 0
    %669 = vmatpush1.bf16.msra.mxu0 %v590
    %670 = vmatprep.subr.bf16.mxu0 0
    %671 = vmatpush1.bf16.msra.mxu0 %v591
    %672 = vmatprep.subr.bf16.mxu0 0
    %673 = vmatpush1.bf16.msra.mxu0 %v592
    %674 = vmatprep.subr.bf16.mxu0 0
    %675 = vmatpush1.bf16.msra.mxu0 0
    %676 = vmatprep.subr.bf16.mxu0 0
    %677 = vmatpush1.bf16.msra.mxu0 0
    %678 = vmatprep.subr.bf16.mxu0 0
    %679 = vmatpush1.bf16.msra.mxu0 0
    %680 = vmatprep.subr.bf16.mxu0 0
    %681 = vmatpush1.bf16.msra.mxu0 0
    %682 = vmatprep.subr.bf16.mxu0 0
    %683 = vmatpush1.bf16.msra.mxu0 0
    %684 = vmatprep.subr.bf16.mxu0 0
    %685 = vmatpush1.bf16.msra.mxu0 0
    %686 = vmatprep.subr.bf16.mxu0 0
    %687 = vmatpush1.bf16.msra.mxu0 0
    %688 = vmatprep.subr.bf16.mxu0 0
    %689 = vmatpush1.bf16.msra.mxu0 0
    %690 = vmatprep.mubr.bf16.mxu0 0
    %691 = vmatmul.mubr.bf16.gmra.mrb[0].mxu0 %v417
    %v692 = vpop.f32.mrb[0].mxu0
    %v693 = vadd.f32 %v652, %v692
    %v694 = vpop.f32.mrb[0].mxu0
    %v695 = vpop.f32.mrb[0].mxu0
    %v696 = vadd.f32 %v655, %v695
    %v697 = vpop.f32.mrb[0].mxu0
    %698 = vdwg.mxu0
    %v699 = vld [vmem:[%s5] sm:$0xff]
    %v700 = vld [vmem:[%s5 + $0x8] sm:$0xff]
    %v701 = vld [vmem:[%s5 + $0x10] sm:$0xff]
    %v702 = vld [vmem:[%s5 + $0x18] sm:$0xff]
    %v703 = vld [vmem:[%s7] sm:$0x1]
    %v705 = vlaneseq
    %v706 = vshrl.u32 %v705, 7
    %v707 = vsub.s32 0, %v706
    %v708 = vrot.slane %v703, %v707
    %vm710 = vcmask 261120
    %v712 = vsel %vm710, %v693, 0
    %v715 = vsel %vm710, %v696, 0
    %717 = vmatprep.subr.mxu0 0.0
    %718 = vmatpush1.msra.mxu0 %v699
    %719 = vmatprep.subr.mxu0 0.0
    %720 = vmatpush1.msra.mxu0 %v700
    %721 = vmatprep.subr.mxu0 0.0
    %722 = vmatpush1.msra.mxu0 %v701
    %723 = vmatprep.subr.mxu0 0.0
    %724 = vmatpush1.msra.mxu0 %v702
    %725 = vmatprep.subr.mxu0 0.0
    %726 = vmatpush1.msra.mxu0 0.0
    %727 = vmatprep.subr.mxu0 0.0
    %728 = vmatpush1.msra.mxu0 0.0
    %729 = vmatprep.subr.mxu0 0.0
    %730 = vmatpush1.msra.mxu0 0.0
    %731 = vmatprep.subr.mxu0 0.0
    %732 = vmatpush1.msra.mxu0 0.0
    %733 = vmatprep.subr.mxu0 0.0
    %734 = vmatpush1.msra.mxu0 0.0
    %735 = vmatprep.subr.mxu0 0.0
    %736 = vmatpush1.msra.mxu0 0.0
    %737 = vmatprep.subr.mxu0 0.0
    %738 = vmatpush1.msra.mxu0 0.0
    %739 = vmatprep.subr.mxu0 0.0
    %740 = vmatpush1.msra.mxu0 0.0
    %741 = vmatprep.subr.mxu0 0.0
    %742 = vmatpush1.msra.mxu0 0.0
    %743 = vmatprep.subr.mxu0 0.0
    %744 = vmatpush1.msra.mxu0 0.0
    %745 = vmatprep.subr.mxu0 0.0
    %746 = vmatpush1.msra.mxu0 0.0
    %747 = vmatprep.subr.mxu0 0.0
    %748 = vmatpush1.msra.mxu0 0.0
    %749 = vmatprep.subr.mxu0 0.0
    %750 = vmatpush1.msra.mxu0 0.0
    %751 = vmatprep.subr.mxu0 0.0
    %752 = vmatpush1.msra.mxu0 0.0
    %753 = vmatprep.subr.mxu0 0.0
    %754 = vmatpush1.msra.mxu0 0.0
    %755 = vmatprep.subr.mxu0 0.0
    %756 = vmatpush1.msra.mxu0 0.0
    %757 = vmatprep.subr.mxu0 0.0
    %758 = vmatpush1.msra.mxu0 0.0
    %759 = vmatprep.subr.mxu0 0.0
    %760 = vmatpush1.msra.mxu0 0.0
    %761 = vmatprep.subr.mxu0 0.0
    %762 = vmatpush1.msra.mxu0 0.0
    %763 = vmatprep.subr.mxu0 0.0
    %764 = vmatpush1.msra.mxu0 0.0
    %765 = vmatprep.subr.mxu0 0.0
    %766 = vmatpush1.msra.mxu0 0.0
    %767 = vmatprep.subr.mxu0 0.0
    %768 = vmatpush1.msra.mxu0 0.0
    %769 = vmatprep.subr.mxu0 0.0
    %770 = vmatpush1.msra.mxu0 0.0
    %771 = vmatprep.subr.mxu0 0.0
    %772 = vmatpush1.msra.mxu0 0.0
    %773 = vmatprep.subr.mxu0 0.0
    %774 = vmatpush1.msra.mxu0 0.0
    %775 = vmatprep.subr.mxu0 0.0
    %776 = vmatpush1.msra.mxu0 0.0
    %777 = vmatprep.subr.mxu0 0.0
    %778 = vmatpush1.msra.mxu0 0.0
    %779 = vmatprep.subr.mxu0 0.0
    %780 = vmatpush1.msra.mxu0 0.0
    %781 = vmatprep.mubr.f32.mxu0 0.0
    %782 = vmatmul.mubr.f32.gmra.mrb[0].mxu0 %v712
    %v783 = vpop.f32.mrb[0].mxu0
    %v784 = vadd.f32 %v708, %v783
    %v785 = vpop.f32.mrb[0].mxu0
    %786 = vmatprep.mubr.f32.mxu0 0.0
    %787 = vmatmul.mubr.f32.gmra.mrb[0].mxu0 %v715
    %v788 = vpop.f32.mrb[0].mxu0
    %v789 = vadd.f32 %v708, %v788
    %v790 = vpop.f32.mrb[0].mxu0
    %791 = vdwg.mxu0
    %v792 = vld [vmem:[%s6] sm:$0xff]
    %v793 = vld [vmem:[%s6 + $0x8] sm:$0xff]
    %v794 = vld [vmem:[%s6 + $0x10] sm:$0xff]
    %v795 = vld [vmem:[%s6 + $0x18] sm:$0xff]
    %v796 = vld [vmem:[%s8] sm:$0xff]
    %v797 = vld [vmem:[%s8 + $0x8] sm:$0xff]
    %v798 = vld [vmem:[%s8 + $0x10] sm:$0xff]
    %v799 = vld [vmem:[%s8 + $0x18] sm:$0xff]
    %v800 = vld [vmem:[%s9] sm:$0xff]
    %v801 = vld [vmem:[%s9 + $0x8] sm:$0xff]
    %v802 = vld [vmem:[%s9 + $0x10] sm:$0xff]
    %v803 = vld [vmem:[%s9 + $0x18] sm:$0xff]
    %v804 = vld [vmem:[%s10] sm:$0x1]
    %v806 = vsel %vm710, 0.0, 0
    %808 = vmatprep.subr.mxu0 0.0
    %809 = vmatpush1.msra.mxu0 %v792
    %810 = vmatprep.subr.mxu0 0.0
    %811 = vmatpush1.msra.mxu0 %v793
    %812 = vmatprep.subr.mxu0 0.0
    %813 = vmatpush1.msra.mxu0 %v794
    %814 = vmatprep.subr.mxu0 0.0
    %815 = vmatpush1.msra.mxu0 %v795
    %816 = vmatprep.subr.mxu0 0.0
    %817 = vmatpush1.msra.mxu0 0.0
    %818 = vmatprep.subr.mxu0 0.0
    %819 = vmatpush1.msra.mxu0 0.0
    %820 = vmatprep.subr.mxu0 0.0
    %821 = vmatpush1.msra.mxu0 0.0
    %822 = vmatprep.subr.mxu0 0.0
    %823 = vmatpush1.msra.mxu0 0.0
    %824 = vmatprep.subr.mxu0 0.0
    %825 = vmatpush1.msra.mxu0 0.0
    %826 = vmatprep.subr.mxu0 0.0
    %827 = vmatpush1.msra.mxu0 0.0
    %828 = vmatprep.subr.mxu0 0.0
    %829 = vmatpush1.msra.mxu0 0.0
    %830 = vmatprep.subr.mxu0 0.0
    %831 = vmatpush1.msra.mxu0 0.0
    %832 = vmatprep.subr.mxu0 0.0
    %833 = vmatpush1.msra.mxu0 0.0
    %834 = vmatprep.subr.mxu0 0.0
    %835 = vmatpush1.msra.mxu0 0.0
    %836 = vmatprep.subr.mxu0 0.0
    %837 = vmatpush1.msra.mxu0 0.0
    %838 = vmatprep.subr.mxu0 0.0
    %839 = vmatpush1.msra.mxu0 0.0
    %840 = vmatprep.subr.mxu0 0.0
    %841 = vmatpush1.msra.mxu0 0.0
    %842 = vmatprep.subr.mxu0 0.0
    %843 = vmatpush1.msra.mxu0 0.0
    %844 = vmatprep.subr.mxu0 0.0
    %845 = vmatpush1.msra.mxu0 0.0
    %846 = vmatprep.subr.mxu0 0.0
    %847 = vmatpush1.msra.mxu0 0.0
    %848 = vmatprep.subr.mxu0 0.0
    %849 = vmatpush1.msra.mxu0 0.0
    %850 = vmatprep.subr.mxu0 0.0
    %851 = vmatpush1.msra.mxu0 0.0
    %852 = vmatprep.subr.mxu0 0.0
    %853 = vmatpush1.msra.mxu0 0.0
    %854 = vmatprep.subr.mxu0 0.0
    %855 = vmatpush1.msra.mxu0 0.0
    %856 = vmatprep.subr.mxu0 0.0
    %857 = vmatpush1.msra.mxu0 0.0
    %858 = vmatprep.subr.mxu0 0.0
    %859 = vmatpush1.msra.mxu0 0.0
    %860 = vmatprep.subr.mxu0 0.0
    %861 = vmatpush1.msra.mxu0 0.0
    %862 = vmatprep.subr.mxu0 0.0
    %863 = vmatpush1.msra.mxu0 0.0
    %864 = vmatprep.subr.mxu0 0.0
    %865 = vmatpush1.msra.mxu0 0.0
    %866 = vmatprep.subr.mxu0 0.0
    %867 = vmatpush1.msra.mxu0 0.0
    %868 = vmatprep.subr.mxu0 0.0
    %869 = vmatpush1.msra.mxu0 0.0
    %870 = vmatprep.subr.mxu0 0.0
    %871 = vmatpush1.msra.mxu0 0.0
    %872 = vmatprep.mubr.f32.mxu0 0.0
    %873 = vmatmul.mubr.f32.gmra.mrb[0].mxu0 %v806
    %v874 = vpop.f32.mrb[0].mxu0
    %v875 = vadd.f32 0.0, %v874
    %v876 = vpop.f32.mrb[0].mxu0
    %877 = vdwg.mxu0
    %v878 = vadd.f32 %v784, %v875
    %v879 = vxor.u32 %v878, 2147483648
    %v880 = vmul.f32 %v879, 1.442695
    %v881 = vpow.pop %v880
    %v882 = vadd.f32 %v881, 1.0
    %v883 = vrcp.pop %v882
    %v884 = vmul.f32 1.0, %v883
    %v885 = vtanh.pop %v878
    %v886 = vmul.f32 %v884, 0.0
    %888 = vrot.lane.b32.xlu0 %v885, 64
    %v889 = vpop.permute.xlu0 %888
    %v891 = vmul.f32 %v884, %v889
    %893 = vrot.lane.b32.xlu0 %v891, 32
    %v894 = vpop.permute.xlu0 %893
    %v896 = vadd.f32 %v886, %v894
    %v897 = vtanh.pop %v896
    %899 = vrot.lane.b32.xlu0 %v897, 64
    %v900 = vpop.permute.xlu0 %899
    %v902 = vmul.f32 %v884, %v900
    %v904 = vlaneseq
    %v905 = vshrl.u32 %v904, 7
    %v906 = vsub.s32 0, %v905
    %v907 = vrot.slane %v804, %v906
    %910 = vrot.lane.b32.xlu0 %v902, 32
    %v911 = vpop.permute.xlu0 %910
    %v912 = vsel %vm710, %v911, 0
    %914 = vmatprep.subr.mxu0 0.0
    %915 = vmatpush1.msra.mxu0 %v796
    %916 = vmatprep.subr.mxu0 0.0
    %917 = vmatpush1.msra.mxu0 %v797
    %918 = vmatprep.subr.mxu0 0.0
    %919 = vmatpush1.msra.mxu0 %v798
    %920 = vmatprep.subr.mxu0 0.0
    %921 = vmatpush1.msra.mxu0 %v799
    %922 = vmatprep.subr.mxu0 0.0
    %923 = vmatpush1.msra.mxu0 0.0
    %924 = vmatprep.subr.mxu0 0.0
    %925 = vmatpush1.msra.mxu0 0.0
    %926 = vmatprep.subr.mxu0 0.0
    %927 = vmatpush1.msra.mxu0 0.0
    %928 = vmatprep.subr.mxu0 0.0
    %929 = vmatpush1.msra.mxu0 0.0
    %930 = vmatprep.subr.mxu0 0.0
    %931 = vmatpush1.msra.mxu0 0.0
    %932 = vmatprep.subr.mxu0 0.0
    %933 = vmatpush1.msra.mxu0 0.0
    %934 = vmatprep.subr.mxu0 0.0
    %935 = vmatpush1.msra.mxu0 0.0
    %936 = vmatprep.subr.mxu0 0.0
    %937 = vmatpush1.msra.mxu0 0.0
    %938 = vmatprep.subr.mxu0 0.0
    %939 = vmatpush1.msra.mxu0 0.0
    %940 = vmatprep.subr.mxu0 0.0
    %941 = vmatpush1.msra.mxu0 0.0
    %942 = vmatprep.subr.mxu0 0.0
    %943 = vmatpush1.msra.mxu0 0.0
    %944 = vmatprep.subr.mxu0 0.0
    %945 = vmatpush1.msra.mxu0 0.0
    %946 = vmatprep.subr.mxu0 0.0
    %947 = vmatpush1.msra.mxu0 0.0
    %948 = vmatprep.subr.mxu0 0.0
    %949 = vmatpush1.msra.mxu0 0.0
    %950 = vmatprep.subr.mxu0 0.0
    %951 = vmatpush1.msra.mxu0 0.0
    %952 = vmatprep.subr.mxu0 0.0
    %953 = vmatpush1.msra.mxu0 0.0
    %954 = vmatprep.subr.mxu0 0.0
    %955 = vmatpush1.msra.mxu0 0.0
    %956 = vmatprep.subr.mxu0 0.0
    %957 = vmatpush1.msra.mxu0 0.0
    %958 = vmatprep.subr.mxu0 0.0
    %959 = vmatpush1.msra.mxu0 0.0
    %960 = vmatprep.subr.mxu0 0.0
    %961 = vmatpush1.msra.mxu0 0.0
    %962 = vmatprep.subr.mxu0 0.0
    %963 = vmatpush1.msra.mxu0 0.0
    %964 = vmatprep.subr.mxu0 0.0
    %965 = vmatpush1.msra.mxu0 0.0
    %966 = vmatprep.subr.mxu0 0.0
    %967 = vmatpush1.msra.mxu0 0.0
    %968 = vmatprep.subr.mxu0 0.0
    %969 = vmatpush1.msra.mxu0 0.0
    %970 = vmatprep.subr.mxu0 0.0
    %971 = vmatpush1.msra.mxu0 0.0
    %972 = vmatprep.subr.mxu0 0.0
    %973 = vmatpush1.msra.mxu0 0.0
    %974 = vmatprep.subr.mxu0 0.0
    %975 = vmatpush1.msra.mxu0 0.0
    %976 = vmatprep.subr.mxu0 0.0
    %977 = vmatpush1.msra.mxu0 0.0
    %978 = vmatprep.mubr.f32.mxu0 0.0
    %979 = vmatmul.mubr.f32.gmra.mrb[0].mxu0 %v912
    %v980 = vpop.f32.mrb[0].mxu0
    %v981 = vadd.f32 %v907, %v980
    %v982 = vpop.f32.mrb[0].mxu0
    %983 = vdwg.mxu0
    %984 = vmatprep.subr.mxu0 0.0
    %985 = vmatpush1.msra.mxu0 %v800
    %986 = vmatprep.subr.mxu0 0.0
    %987 = vmatpush1.msra.mxu0 %v801
    %988 = vmatprep.subr.mxu0 0.0
    %989 = vmatpush1.msra.mxu0 %v802
    %990 = vmatprep.subr.mxu0 0.0
    %991 = vmatpush1.msra.mxu0 %v803
    %992 = vmatprep.subr.mxu0 0.0
    %993 = vmatpush1.msra.mxu0 0.0
    %994 = vmatprep.subr.mxu0 0.0
    %995 = vmatpush1.msra.mxu0 0.0
    %996 = vmatprep.subr.mxu0 0.0
    %997 = vmatpush1.msra.mxu0 0.0
    %998 = vmatprep.subr.mxu0 0.0
    %999 = vmatpush1.msra.mxu0 0.0
    %1000 = vmatprep.subr.mxu0 0.0
    %1001 = vmatpush1.msra.mxu0 0.0
    %1002 = vmatprep.subr.mxu0 0.0
    %1003 = vmatpush1.msra.mxu0 0.0
    %1004 = vmatprep.subr.mxu0 0.0
    %1005 = vmatpush1.msra.mxu0 0.0
    %1006 = vmatprep.subr.mxu0 0.0
    %1007 = vmatpush1.msra.mxu0 0.0
    %1008 = vmatprep.subr.mxu0 0.0
    %1009 = vmatpush1.msra.mxu0 0.0
    %1010 = vmatprep.subr.mxu0 0.0
    %1011 = vmatpush1.msra.mxu0 0.0
    %1012 = vmatprep.subr.mxu0 0.0
    %1013 = vmatpush1.msra.mxu0 0.0
    %1014 = vmatprep.subr.mxu0 0.0
    %1015 = vmatpush1.msra.mxu0 0.0
    %1016 = vmatprep.subr.mxu0 0.0
    %1017 = vmatpush1.msra.mxu0 0.0
    %1018 = vmatprep.subr.mxu0 0.0
    %1019 = vmatpush1.msra.mxu0 0.0
    %1020 = vmatprep.subr.mxu0 0.0
    %1021 = vmatpush1.msra.mxu0 0.0
    %1022 = vmatprep.subr.mxu0 0.0
    %1023 = vmatpush1.msra.mxu0 0.0
    %1024 = vmatprep.subr.mxu0 0.0
    %1025 = vmatpush1.msra.mxu0 0.0
    %1026 = vmatprep.subr.mxu0 0.0
    %1027 = vmatpush1.msra.mxu0 0.0
    %1028 = vmatprep.subr.mxu0 0.0
    %1029 = vmatpush1.msra.mxu0 0.0
    %1030 = vmatprep.subr.mxu0 0.0
    %1031 = vmatpush1.msra.mxu0 0.0
    %1032 = vmatprep.subr.mxu0 0.0
    %1033 = vmatpush1.msra.mxu0 0.0
    %1034 = vmatprep.subr.mxu0 0.0
    %1035 = vmatpush1.msra.mxu0 0.0
    %1036 = vmatprep.subr.mxu0 0.0
    %1037 = vmatpush1.msra.mxu0 0.0
    %1038 = vmatprep.subr.mxu0 0.0
    %1039 = vmatpush1.msra.mxu0 0.0
    %1040 = vmatprep.subr.mxu0 0.0
    %1041 = vmatpush1.msra.mxu0 0.0
    %1042 = vmatprep.subr.mxu0 0.0
    %1043 = vmatpush1.msra.mxu0 0.0
    %1044 = vmatprep.subr.mxu0 0.0
    %1045 = vmatpush1.msra.mxu0 0.0
    %1046 = vmatprep.subr.mxu0 0.0
    %1047 = vmatpush1.msra.mxu0 0.0
    %1048 = vmatprep.mubr.f32.mxu0 0.0
    %1049 = vmatmul.mubr.f32.gmra.mrb[0].mxu0 %v806
    %v1050 = vpop.f32.mrb[0].mxu0
    %v1051 = vadd.f32 0.0, %v1050
    %v1052 = vpop.f32.mrb[0].mxu0
    %1053 = vdwg.mxu0
    %v1054 = vadd.f32 %v981, %v1051
    %v1055 = vxor.u32 %v1054, 2147483648
    %v1056 = vmul.f32 %v1055, 1.442695
    %v1057 = vpow.pop %v1056
    %v1058 = vadd.f32 %v1057, 1.0
    %v1059 = vrcp.pop %v1058
    %v1060 = vmul.f32 1.0, %v1059
    %v1061 = vtanh.pop %v1054
    %v1062 = vmul.f32 %v1060, 0.0
    %1064 = vrot.lane.b32.xlu0 %v1061, 64
    %v1065 = vpop.permute.xlu0 %1064
    %v1067 = vmul.f32 %v1060, %v1065
    %1069 = vrot.lane.b32.xlu0 %v1067, 32
    %v1070 = vpop.permute.xlu0 %1069
    %v1072 = vadd.f32 %v1062, %v1070
    %v1073 = vtanh.pop %v1072
    %1075 = vrot.lane.b32.xlu0 %v1073, 64
    %v1076 = vpop.permute.xlu0 %1075
    %v1078 = vmul.f32 %v1060, %v1076
    %1079 = vmatprep.subr.mxu0 0.0
    %1080 = vmatpush1.msra.mxu0 %v792
    %1081 = vmatprep.subr.mxu0 0.0
    %1082 = vmatpush1.msra.mxu0 %v793
    %1083 = vmatprep.subr.mxu0 0.0
    %1084 = vmatpush1.msra.mxu0 %v794
    %1085 = vmatprep.subr.mxu0 0.0
    %1086 = vmatpush1.msra.mxu0 %v795
    %1087 = vmatprep.subr.mxu0 0.0
    %1088 = vmatpush1.msra.mxu0 0.0
    %1089 = vmatprep.subr.mxu0 0.0
    %1090 = vmatpush1.msra.mxu0 0.0
    %1091 = vmatprep.subr.mxu0 0.0
    %1092 = vmatpush1.msra.mxu0 0.0
    %1093 = vmatprep.subr.mxu0 0.0
    %1094 = vmatpush1.msra.mxu0 0.0
    %1095 = vmatprep.subr.mxu0 0.0
    %1096 = vmatpush1.msra.mxu0 0.0
    %1097 = vmatprep.subr.mxu0 0.0
    %1098 = vmatpush1.msra.mxu0 0.0
    %1099 = vmatprep.subr.mxu0 0.0
    %1100 = vmatpush1.msra.mxu0 0.0
    %1101 = vmatprep.subr.mxu0 0.0
    %1102 = vmatpush1.msra.mxu0 0.0
    %1103 = vmatprep.subr.mxu0 0.0
    %1104 = vmatpush1.msra.mxu0 0.0
    %1105 = vmatprep.subr.mxu0 0.0
    %1106 = vmatpush1.msra.mxu0 0.0
    %1107 = vmatprep.subr.mxu0 0.0
    %1108 = vmatpush1.msra.mxu0 0.0
    %1109 = vmatprep.subr.mxu0 0.0
    %1110 = vmatpush1.msra.mxu0 0.0
    %1111 = vmatprep.subr.mxu0 0.0
    %1112 = vmatpush1.msra.mxu0 0.0
    %1113 = vmatprep.subr.mxu0 0.0
    %1114 = vmatpush1.msra.mxu0 0.0
    %1115 = vmatprep.subr.mxu0 0.0
    %1116 = vmatpush1.msra.mxu0 0.0
    %1117 = vmatprep.subr.mxu0 0.0
    %1118 = vmatpush1.msra.mxu0 0.0
    %1119 = vmatprep.subr.mxu0 0.0
    %1120 = vmatpush1.msra.mxu0 0.0
    %1121 = vmatprep.subr.mxu0 0.0
    %1122 = vmatpush1.msra.mxu0 0.0
    %1123 = vmatprep.subr.mxu0 0.0
    %1124 = vmatpush1.msra.mxu0 0.0
    %1125 = vmatprep.subr.mxu0 0.0
    %1126 = vmatpush1.msra.mxu0 0.0
    %1127 = vmatprep.subr.mxu0 0.0
    %1128 = vmatpush1.msra.mxu0 0.0
    %1129 = vmatprep.subr.mxu0 0.0
    %1130 = vmatpush1.msra.mxu0 0.0
    %1131 = vmatprep.subr.mxu0 0.0
    %1132 = vmatpush1.msra.mxu0 0.0
    %1133 = vmatprep.subr.mxu0 0.0
    %1134 = vmatpush1.msra.mxu0 0.0
    %1135 = vmatprep.subr.mxu0 0.0
    %1136 = vmatpush1.msra.mxu0 0.0
    %1137 = vmatprep.subr.mxu0 0.0
    %1138 = vmatpush1.msra.mxu0 0.0
    %1139 = vmatprep.subr.mxu0 0.0
    %1140 = vmatpush1.msra.mxu0 0.0
    %1141 = vmatprep.subr.mxu0 0.0
    %1142 = vmatpush1.msra.mxu0 0.0
    %1143 = vmatprep.mubr.f32.mxu0 0.0
    %1144 = vmatmul.mubr.f32.gmra.mrb[0].mxu0 %v912
    %v1145 = vpop.f32.mrb[0].mxu0
    %v1146 = vadd.f32 0.0, %v1145
    %v1147 = vpop.f32.mrb[0].mxu0
    %1148 = vdwg.mxu0
    %v1150 = vrot.slane %v1146, 6
    %v1152 = vadd.f32 %v784, %v1150
    %v1153 = vxor.u32 %v1152, 2147483648
    %v1154 = vmul.f32 %v1153, 1.442695
    %v1155 = vpow.pop %v1154
    %v1156 = vadd.f32 %v1155, 1.0
    %v1157 = vrcp.pop %v1156
    %v1158 = vmul.f32 1.0, %v1157
    %v1159 = vtanh.pop %v1152
    %v1161 = vrot.slane %v896, 6
    %v1163 = vmul.f32 %v1158, %v1161
    %1165 = vrot.lane.b32.xlu0 %v1159, 64
    %v1166 = vpop.permute.xlu0 %1165
    %v1168 = vmul.f32 %v1158, %v1166
    %1170 = vrot.lane.b32.xlu0 %v1168, 32
    %v1171 = vpop.permute.xlu0 %1170
    %v1173 = vadd.f32 %v1163, %v1171
    %v1174 = vtanh.pop %v1173
    %1176 = vrot.lane.b32.xlu0 %v1174, 64
    %v1177 = vpop.permute.xlu0 %1176
    %v1179 = vmul.f32 %v1158, %v1177
    %v1181 = vrot.slane %v1179, 2
    %1182 = vrot.lane.b32.xlu0 %v1181, 32
    %v1183 = vpop.permute.xlu0 %1182
    %v1184 = vsel %vm710, %v1183, 0
    %1186 = vmatprep.subr.mxu0 0.0
    %1187 = vmatpush1.msra.mxu0 %v796
    %1188 = vmatprep.subr.mxu0 0.0
    %1189 = vmatpush1.msra.mxu0 %v797
    %1190 = vmatprep.subr.mxu0 0.0
    %1191 = vmatpush1.msra.mxu0 %v798
    %1192 = vmatprep.subr.mxu0 0.0
    %1193 = vmatpush1.msra.mxu0 %v799
    %1194 = vmatprep.subr.mxu0 0.0
    %1195 = vmatpush1.msra.mxu0 0.0
    %1196 = vmatprep.subr.mxu0 0.0
    %1197 = vmatpush1.msra.mxu0 0.0
    %1198 = vmatprep.subr.mxu0 0.0
    %1199 = vmatpush1.msra.mxu0 0.0
    %1200 = vmatprep.subr.mxu0 0.0
    %1201 = vmatpush1.msra.mxu0 0.0
    %1202 = vmatprep.subr.mxu0 0.0
    %1203 = vmatpush1.msra.mxu0 0.0
    %1204 = vmatprep.subr.mxu0 0.0
    %1205 = vmatpush1.msra.mxu0 0.0
    %1206 = vmatprep.subr.mxu0 0.0
    %1207 = vmatpush1.msra.mxu0 0.0
    %1208 = vmatprep.subr.mxu0 0.0
    %1209 = vmatpush1.msra.mxu0 0.0
    %1210 = vmatprep.subr.mxu0 0.0
    %1211 = vmatpush1.msra.mxu0 0.0
    %1212 = vmatprep.subr.mxu0 0.0
    %1213 = vmatpush1.msra.mxu0 0.0
    %1214 = vmatprep.subr.mxu0 0.0
    %1215 = vmatpush1.msra.mxu0 0.0
    %1216 = vmatprep.subr.mxu0 0.0
    %1217 = vmatpush1.msra.mxu0 0.0
    %1218 = vmatprep.subr.mxu0 0.0
    %1219 = vmatpush1.msra.mxu0 0.0
    %1220 = vmatprep.subr.mxu0 0.0
    %1221 = vmatpush1.msra.mxu0 0.0
    %1222 = vmatprep.subr.mxu0 0.0
    %1223 = vmatpush1.msra.mxu0 0.0
    %1224 = vmatprep.subr.mxu0 0.0
    %1225 = vmatpush1.msra.mxu0 0.0
    %1226 = vmatprep.subr.mxu0 0.0
    %1227 = vmatpush1.msra.mxu0 0.0
    %1228 = vmatprep.subr.mxu0 0.0
    %1229 = vmatpush1.msra.mxu0 0.0
    %1230 = vmatprep.subr.mxu0 0.0
    %1231 = vmatpush1.msra.mxu0 0.0
    %1232 = vmatprep.subr.mxu0 0.0
    %1233 = vmatpush1.msra.mxu0 0.0
    %1234 = vmatprep.subr.mxu0 0.0
    %1235 = vmatpush1.msra.mxu0 0.0
    %1236 = vmatprep.subr.mxu0 0.0
    %1237 = vmatpush1.msra.mxu0 0.0
    %1238 = vmatprep.subr.mxu0 0.0
    %1239 = vmatpush1.msra.mxu0 0.0
    %1240 = vmatprep.subr.mxu0 0.0
    %1241 = vmatpush1.msra.mxu0 0.0
    %1242 = vmatprep.subr.mxu0 0.0
    %1243 = vmatpush1.msra.mxu0 0.0
    %1244 = vmatprep.subr.mxu0 0.0
    %1245 = vmatpush1.msra.mxu0 0.0
    %1246 = vmatprep.subr.mxu0 0.0
    %1247 = vmatpush1.msra.mxu0 0.0
    %1248 = vmatprep.subr.mxu0 0.0
    %1249 = vmatpush1.msra.mxu0 0.0
    %1250 = vmatprep.mubr.f32.mxu0 0.0
    %1251 = vmatmul.mubr.f32.gmra.mrb[0].mxu0 %v1184
    %v1252 = vpop.f32.mrb[0].mxu0
    %v1253 = vadd.f32 %v907, %v1252
    %v1254 = vpop.f32.mrb[0].mxu0
    %1255 = vdwg.mxu0
    %1257 = vrot.lane.b32.xlu0 %v1078, 32
    %v1258 = vpop.permute.xlu0 %1257
    %v1259 = vsel %vm710, %v1258, 0
    %1261 = vmatprep.subr.mxu0 0.0
    %1262 = vmatpush1.msra.mxu0 %v800
    %1263 = vmatprep.subr.mxu0 0.0
    %1264 = vmatpush1.msra.mxu0 %v801
    %1265 = vmatprep.subr.mxu0 0.0
    %1266 = vmatpush1.msra.mxu0 %v802
    %1267 = vmatprep.subr.mxu0 0.0
    %1268 = vmatpush1.msra.mxu0 %v803
    %1269 = vmatprep.subr.mxu0 0.0
    %1270 = vmatpush1.msra.mxu0 0.0
    %1271 = vmatprep.subr.mxu0 0.0
    %1272 = vmatpush1.msra.mxu0 0.0
    %1273 = vmatprep.subr.mxu0 0.0
    %1274 = vmatpush1.msra.mxu0 0.0
    %1275 = vmatprep.subr.mxu0 0.0
    %1276 = vmatpush1.msra.mxu0 0.0
    %1277 = vmatprep.subr.mxu0 0.0
    %1278 = vmatpush1.msra.mxu0 0.0
    %1279 = vmatprep.subr.mxu0 0.0
    %1280 = vmatpush1.msra.mxu0 0.0
    %1281 = vmatprep.subr.mxu0 0.0
    %1282 = vmatpush1.msra.mxu0 0.0
    %1283 = vmatprep.subr.mxu0 0.0
    %1284 = vmatpush1.msra.mxu0 0.0
    %1285 = vmatprep.subr.mxu0 0.0
    %1286 = vmatpush1.msra.mxu0 0.0
    %1287 = vmatprep.subr.mxu0 0.0
    %1288 = vmatpush1.msra.mxu0 0.0
    %1289 = vmatprep.subr.mxu0 0.0
    %1290 = vmatpush1.msra.mxu0 0.0
    %1291 = vmatprep.subr.mxu0 0.0
    %1292 = vmatpush1.msra.mxu0 0.0
    %1293 = vmatprep.subr.mxu0 0.0
    %1294 = vmatpush1.msra.mxu0 0.0
    %1295 = vmatprep.subr.mxu0 0.0
    %1296 = vmatpush1.msra.mxu0 0.0
    %1297 = vmatprep.subr.mxu0 0.0
    %1298 = vmatpush1.msra.mxu0 0.0
    %1299 = vmatprep.subr.mxu0 0.0
    %1300 = vmatpush1.msra.mxu0 0.0
    %1301 = vmatprep.subr.mxu0 0.0
    %1302 = vmatpush1.msra.mxu0 0.0
    %1303 = vmatprep.subr.mxu0 0.0
    %1304 = vmatpush1.msra.mxu0 0.0
    %1305 = vmatprep.subr.mxu0 0.0
    %1306 = vmatpush1.msra.mxu0 0.0
    %1307 = vmatprep.subr.mxu0 0.0
    %1308 = vmatpush1.msra.mxu0 0.0
    %1309 = vmatprep.subr.mxu0 0.0
    %1310 = vmatpush1.msra.mxu0 0.0
    %1311 = vmatprep.subr.mxu0 0.0
    %1312 = vmatpush1.msra.mxu0 0.0
    %1313 = vmatprep.subr.mxu0 0.0
    %1314 = vmatpush1.msra.mxu0 0.0
    %1315 = vmatprep.subr.mxu0 0.0
    %1316 = vmatpush1.msra.mxu0 0.0
    %1317 = vmatprep.subr.mxu0 0.0
    %1318 = vmatpush1.msra.mxu0 0.0
    %1319 = vmatprep.subr.mxu0 0.0
    %1320 = vmatpush1.msra.mxu0 0.0
    %1321 = vmatprep.subr.mxu0 0.0
    %1322 = vmatpush1.msra.mxu0 0.0
    %1323 = vmatprep.subr.mxu0 0.0
    %1324 = vmatpush1.msra.mxu0 0.0
    %1325 = vmatprep.mubr.f32.mxu0 0.0
    %1326 = vmatmul.mubr.f32.gmra.mrb[0].mxu0 %v1259
    %v1327 = vpop.f32.mrb[0].mxu0
    %v1328 = vadd.f32 0.0, %v1327
    %v1329 = vpop.f32.mrb[0].mxu0
    %1330 = vdwg.mxu0
    %v1331 = vadd.f32 %v1253, %v1328
    %v1332 = vxor.u32 %v1331, 2147483648
    %v1333 = vmul.f32 %v1332, 1.442695
    %v1334 = vpow.pop %v1333
    %v1335 = vadd.f32 %v1334, 1.0
    %v1336 = vrcp.pop %v1335
    %v1337 = vmul.f32 1.0, %v1336
    %v1338 = vtanh.pop %v1331
    %v1339 = vmul.f32 %v1337, %v1072
    %1341 = vrot.lane.b32.xlu0 %v1338, 64
    %v1342 = vpop.permute.xlu0 %1341
    %v1344 = vmul.f32 %v1337, %v1342
    %1346 = vrot.lane.b32.xlu0 %v1344, 32
    %v1347 = vpop.permute.xlu0 %1346
    %v1349 = vadd.f32 %v1339, %v1347
    %v1350 = vtanh.pop %v1349
    %1352 = vrot.lane.b32.xlu0 %v1350, 64
    %v1353 = vpop.permute.xlu0 %1352
    %v1355 = vmul.f32 %v1337, %v1353
    %1356 = vmatprep.subr.mxu0 0.0
    %1357 = vmatpush1.msra.mxu0 %v792
    %1358 = vmatprep.subr.mxu0 0.0
    %1359 = vmatpush1.msra.mxu0 %v793
    %1360 = vmatprep.subr.mxu0 0.0
    %1361 = vmatpush1.msra.mxu0 %v794
    %1362 = vmatprep.subr.mxu0 0.0
    %1363 = vmatpush1.msra.mxu0 %v795
    %1364 = vmatprep.subr.mxu0 0.0
    %1365 = vmatpush1.msra.mxu0 0.0
    %1366 = vmatprep.subr.mxu0 0.0
    %1367 = vmatpush1.msra.mxu0 0.0
    %1368 = vmatprep.subr.mxu0 0.0
    %1369 = vmatpush1.msra.mxu0 0.0
    %1370 = vmatprep.subr.mxu0 0.0
    %1371 = vmatpush1.msra.mxu0 0.0
    %1372 = vmatprep.subr.mxu0 0.0
    %1373 = vmatpush1.msra.mxu0 0.0
    %1374 = vmatprep.subr.mxu0 0.0
    %1375 = vmatpush1.msra.mxu0 0.0
    %1376 = vmatprep.subr.mxu0 0.0
    %1377 = vmatpush1.msra.mxu0 0.0
    %1378 = vmatprep.subr.mxu0 0.0
    %1379 = vmatpush1.msra.mxu0 0.0
    %1380 = vmatprep.subr.mxu0 0.0
    %1381 = vmatpush1.msra.mxu0 0.0
    %1382 = vmatprep.subr.mxu0 0.0
    %1383 = vmatpush1.msra.mxu0 0.0
    %1384 = vmatprep.subr.mxu0 0.0
    %1385 = vmatpush1.msra.mxu0 0.0
    %1386 = vmatprep.subr.mxu0 0.0
    %1387 = vmatpush1.msra.mxu0 0.0
    %1388 = vmatprep.subr.mxu0 0.0
    %1389 = vmatpush1.msra.mxu0 0.0
    %1390 = vmatprep.subr.mxu0 0.0
    %1391 = vmatpush1.msra.mxu0 0.0
    %1392 = vmatprep.subr.mxu0 0.0
    %1393 = vmatpush1.msra.mxu0 0.0
    %1394 = vmatprep.subr.mxu0 0.0
    %1395 = vmatpush1.msra.mxu0 0.0
    %1396 = vmatprep.subr.mxu0 0.0
    %1397 = vmatpush1.msra.mxu0 0.0
    %1398 = vmatprep.subr.mxu0 0.0
    %1399 = vmatpush1.msra.mxu0 0.0
    %1400 = vmatprep.subr.mxu0 0.0
    %1401 = vmatpush1.msra.mxu0 0.0
    %1402 = vmatprep.subr.mxu0 0.0
    %1403 = vmatpush1.msra.mxu0 0.0
    %1404 = vmatprep.subr.mxu0 0.0
    %1405 = vmatpush1.msra.mxu0 0.0
    %1406 = vmatprep.subr.mxu0 0.0
    %1407 = vmatpush1.msra.mxu0 0.0
    %1408 = vmatprep.subr.mxu0 0.0
    %1409 = vmatpush1.msra.mxu0 0.0
    %1410 = vmatprep.subr.mxu0 0.0
    %1411 = vmatpush1.msra.mxu0 0.0
    %1412 = vmatprep.subr.mxu0 0.0
    %1413 = vmatpush1.msra.mxu0 0.0
    %1414 = vmatprep.subr.mxu0 0.0
    %1415 = vmatpush1.msra.mxu0 0.0
    %1416 = vmatprep.subr.mxu0 0.0
    %1417 = vmatpush1.msra.mxu0 0.0
    %1418 = vmatprep.subr.mxu0 0.0
    %1419 = vmatpush1.msra.mxu0 0.0
    %1420 = vmatprep.mubr.f32.mxu0 0.0
    %1421 = vmatmul.mubr.f32.gmra.mrb[0].mxu0 %v1184
    %v1422 = vpop.f32.mrb[0].mxu0
    %v1423 = vadd.f32 0.0, %v1422
    %v1424 = vpop.f32.mrb[0].mxu0
    %1425 = vdwg.mxu0
    %v1427 = vrot.slane %v1423, 4
    %v1429 = vadd.f32 %v784, %v1427
    %v1430 = vxor.u32 %v1429, 2147483648
    %v1431 = vmul.f32 %v1430, 1.442695
    %v1432 = vpow.pop %v1431
    %v1433 = vadd.f32 %v1432, 1.0
    %v1434 = vrcp.pop %v1433
    %v1435 = vmul.f32 1.0, %v1434
    %v1436 = vtanh.pop %v1429
    %v1438 = vrot.slane %v1173, 6
    %v1440 = vmul.f32 %v1435, %v1438
    %1442 = vrot.lane.b32.xlu0 %v1436, 64
    %v1443 = vpop.permute.xlu0 %1442
    %v1445 = vmul.f32 %v1435, %v1443
    %1447 = vrot.lane.b32.xlu0 %v1445, 32
    %v1448 = vpop.permute.xlu0 %1447
    %v1450 = vadd.f32 %v1440, %v1448
    %v1451 = vtanh.pop %v1450
    %1453 = vrot.lane.b32.xlu0 %v1451, 64
    %v1454 = vpop.permute.xlu0 %1453
    %v1456 = vmul.f32 %v1435, %v1454
    %v1458 = vrot.slane %v1456, 4
    %1459 = vrot.lane.b32.xlu0 %v1458, 32
    %v1460 = vpop.permute.xlu0 %1459
    %v1461 = vsel %vm710, %v1460, 0
    %1463 = vmatprep.subr.mxu0 0.0
    %1464 = vmatpush1.msra.mxu0 %v796
    %1465 = vmatprep.subr.mxu0 0.0
    %1466 = vmatpush1.msra.mxu0 %v797
    %1467 = vmatprep.subr.mxu0 0.0
    %1468 = vmatpush1.msra.mxu0 %v798
    %1469 = vmatprep.subr.mxu0 0.0
    %1470 = vmatpush1.msra.mxu0 %v799
    %1471 = vmatprep.subr.mxu0 0.0
    %1472 = vmatpush1.msra.mxu0 0.0
    %1473 = vmatprep.subr.mxu0 0.0
    %1474 = vmatpush1.msra.mxu0 0.0
    %1475 = vmatprep.subr.mxu0 0.0
    %1476 = vmatpush1.msra.mxu0 0.0
    %1477 = vmatprep.subr.mxu0 0.0
    %1478 = vmatpush1.msra.mxu0 0.0
    %1479 = vmatprep.subr.mxu0 0.0
    %1480 = vmatpush1.msra.mxu0 0.0
    %1481 = vmatprep.subr.mxu0 0.0
    %1482 = vmatpush1.msra.mxu0 0.0
    %1483 = vmatprep.subr.mxu0 0.0
    %1484 = vmatpush1.msra.mxu0 0.0
    %1485 = vmatprep.subr.mxu0 0.0
    %1486 = vmatpush1.msra.mxu0 0.0
    %1487 = vmatprep.subr.mxu0 0.0
    %1488 = vmatpush1.msra.mxu0 0.0
    %1489 = vmatprep.subr.mxu0 0.0
    %1490 = vmatpush1.msra.mxu0 0.0
    %1491 = vmatprep.subr.mxu0 0.0
    %1492 = vmatpush1.msra.mxu0 0.0
    %1493 = vmatprep.subr.mxu0 0.0
    %1494 = vmatpush1.msra.mxu0 0.0
    %1495 = vmatprep.subr.mxu0 0.0
    %1496 = vmatpush1.msra.mxu0 0.0
    %1497 = vmatprep.subr.mxu0 0.0
    %1498 = vmatpush1.msra.mxu0 0.0
    %1499 = vmatprep.subr.mxu0 0.0
    %1500 = vmatpush1.msra.mxu0 0.0
    %1501 = vmatprep.subr.mxu0 0.0
    %1502 = vmatpush1.msra.mxu0 0.0
    %1503 = vmatprep.subr.mxu0 0.0
    %1504 = vmatpush1.msra.mxu0 0.0
    %1505 = vmatprep.subr.mxu0 0.0
    %1506 = vmatpush1.msra.mxu0 0.0
    %1507 = vmatprep.subr.mxu0 0.0
    %1508 = vmatpush1.msra.mxu0 0.0
    %1509 = vmatprep.subr.mxu0 0.0
    %1510 = vmatpush1.msra.mxu0 0.0
    %1511 = vmatprep.subr.mxu0 0.0
    %1512 = vmatpush1.msra.mxu0 0.0
    %1513 = vmatprep.subr.mxu0 0.0
    %1514 = vmatpush1.msra.mxu0 0.0
    %1515 = vmatprep.subr.mxu0 0.0
    %1516 = vmatpush1.msra.mxu0 0.0
    %1517 = vmatprep.subr.mxu0 0.0
    %1518 = vmatpush1.msra.mxu0 0.0
    %1519 = vmatprep.subr.mxu0 0.0
    %1520 = vmatpush1.msra.mxu0 0.0
    %1521 = vmatprep.subr.mxu0 0.0
    %1522 = vmatpush1.msra.mxu0 0.0
    %1523 = vmatprep.subr.mxu0 0.0
    %1524 = vmatpush1.msra.mxu0 0.0
    %1525 = vmatprep.subr.mxu0 0.0
    %1526 = vmatpush1.msra.mxu0 0.0
    %1527 = vmatprep.mubr.f32.mxu0 0.0
    %1528 = vmatmul.mubr.f32.gmra.mrb[0].mxu0 %v1461
    %v1529 = vpop.f32.mrb[0].mxu0
    %v1530 = vadd.f32 %v907, %v1529
    %v1531 = vpop.f32.mrb[0].mxu0
    %1532 = vdwg.mxu0
    %1534 = vrot.lane.b32.xlu0 %v1355, 32
    %v1535 = vpop.permute.xlu0 %1534
    %v1536 = vsel %vm710, %v1535, 0
    %1538 = vmatprep.subr.mxu0 0.0
    %1539 = vmatpush1.msra.mxu0 %v800
    %1540 = vmatprep.subr.mxu0 0.0
    %1541 = vmatpush1.msra.mxu0 %v801
    %1542 = vmatprep.subr.mxu0 0.0
    %1543 = vmatpush1.msra.mxu0 %v802
    %1544 = vmatprep.subr.mxu0 0.0
    %1545 = vmatpush1.msra.mxu0 %v803
    %1546 = vmatprep.subr.mxu0 0.0
    %1547 = vmatpush1.msra.mxu0 0.0
    %1548 = vmatprep.subr.mxu0 0.0
    %1549 = vmatpush1.msra.mxu0 0.0
    %1550 = vmatprep.subr.mxu0 0.0
    %1551 = vmatpush1.msra.mxu0 0.0
    %1552 = vmatprep.subr.mxu0 0.0
    %1553 = vmatpush1.msra.mxu0 0.0
    %1554 = vmatprep.subr.mxu0 0.0
    %1555 = vmatpush1.msra.mxu0 0.0
    %1556 = vmatprep.subr.mxu0 0.0
    %1557 = vmatpush1.msra.mxu0 0.0
    %1558 = vmatprep.subr.mxu0 0.0
    %1559 = vmatpush1.msra.mxu0 0.0
    %1560 = vmatprep.subr.mxu0 0.0
    %1561 = vmatpush1.msra.mxu0 0.0
    %1562 = vmatprep.subr.mxu0 0.0
    %1563 = vmatpush1.msra.mxu0 0.0
    %1564 = vmatprep.subr.mxu0 0.0
    %1565 = vmatpush1.msra.mxu0 0.0
    %1566 = vmatprep.subr.mxu0 0.0
    %1567 = vmatpush1.msra.mxu0 0.0
    %1568 = vmatprep.subr.mxu0 0.0
    %1569 = vmatpush1.msra.mxu0 0.0
    %1570 = vmatprep.subr.mxu0 0.0
    %1571 = vmatpush1.msra.mxu0 0.0
    %1572 = vmatprep.subr.mxu0 0.0
    %1573 = vmatpush1.msra.mxu0 0.0
    %1574 = vmatprep.subr.mxu0 0.0
    %1575 = vmatpush1.msra.mxu0 0.0
    %1576 = vmatprep.subr.mxu0 0.0
    %1577 = vmatpush1.msra.mxu0 0.0
    %1578 = vmatprep.subr.mxu0 0.0
    %1579 = vmatpush1.msra.mxu0 0.0
    %1580 = vmatprep.subr.mxu0 0.0
    %1581 = vmatpush1.msra.mxu0 0.0
    %1582 = vmatprep.subr.mxu0 0.0
    %1583 = vmatpush1.msra.mxu0 0.0
    %1584 = vmatprep.subr.mxu0 0.0
    %1585 = vmatpush1.msra.mxu0 0.0
    %1586 = vmatprep.subr.mxu0 0.0
    %1587 = vmatpush1.msra.mxu0 0.0
    %1588 = vmatprep.subr.mxu0 0.0
    %1589 = vmatpush1.msra.mxu0 0.0
    %1590 = vmatprep.subr.mxu0 0.0
    %1591 = vmatpush1.msra.mxu0 0.0
    %1592 = vmatprep.subr.mxu0 0.0
    %1593 = vmatpush1.msra.mxu0 0.0
    %1594 = vmatprep.subr.mxu0 0.0
    %1595 = vmatpush1.msra.mxu0 0.0
    %1596 = vmatprep.subr.mxu0 0.0
    %1597 = vmatpush1.msra.mxu0 0.0
    %1598 = vmatprep.subr.mxu0 0.0
    %1599 = vmatpush1.msra.mxu0 0.0
    %1600 = vmatprep.subr.mxu0 0.0
    %1601 = vmatpush1.msra.mxu0 0.0
    %1602 = vmatprep.mubr.f32.mxu0 0.0
    %1603 = vmatmul.mubr.f32.gmra.mrb[0].mxu0 %v1536
    %v1604 = vpop.f32.mrb[0].mxu0
    %v1605 = vadd.f32 0.0, %v1604
    %v1606 = vpop.f32.mrb[0].mxu0
    %1607 = vdwg.mxu0
    %v1608 = vadd.f32 %v1530, %v1605
    %v1609 = vxor.u32 %v1608, 2147483648
    %v1610 = vmul.f32 %v1609, 1.442695
    %v1611 = vpow.pop %v1610
    %v1612 = vadd.f32 %v1611, 1.0
    %v1613 = vrcp.pop %v1612
    %v1614 = vmul.f32 1.0, %v1613
    %v1615 = vtanh.pop %v1608
    %v1616 = vmul.f32 %v1614, %v1349
    %1618 = vrot.lane.b32.xlu0 %v1615, 64
    %v1619 = vpop.permute.xlu0 %1618
    %v1621 = vmul.f32 %v1614, %v1619
    %1623 = vrot.lane.b32.xlu0 %v1621, 32
    %v1624 = vpop.permute.xlu0 %1623
    %v1626 = vadd.f32 %v1616, %v1624
    %v1627 = vtanh.pop %v1626
    %1629 = vrot.lane.b32.xlu0 %v1627, 64
    %v1630 = vpop.permute.xlu0 %1629
    %v1632 = vmul.f32 %v1614, %v1630
    %1633 = vmatprep.subr.mxu0 0.0
    %1634 = vmatpush1.msra.mxu0 %v792
    %1635 = vmatprep.subr.mxu0 0.0
    %1636 = vmatpush1.msra.mxu0 %v793
    %1637 = vmatprep.subr.mxu0 0.0
    %1638 = vmatpush1.msra.mxu0 %v794
    %1639 = vmatprep.subr.mxu0 0.0
    %1640 = vmatpush1.msra.mxu0 %v795
    %1641 = vmatprep.subr.mxu0 0.0
    %1642 = vmatpush1.msra.mxu0 0.0
    %1643 = vmatprep.subr.mxu0 0.0
    %1644 = vmatpush1.msra.mxu0 0.0
    %1645 = vmatprep.subr.mxu0 0.0
    %1646 = vmatpush1.msra.mxu0 0.0
    %1647 = vmatprep.subr.mxu0 0.0
    %1648 = vmatpush1.msra.mxu0 0.0
    %1649 = vmatprep.subr.mxu0 0.0
    %1650 = vmatpush1.msra.mxu0 0.0
    %1651 = vmatprep.subr.mxu0 0.0
    %1652 = vmatpush1.msra.mxu0 0.0
    %1653 = vmatprep.subr.mxu0 0.0
    %1654 = vmatpush1.msra.mxu0 0.0
    %1655 = vmatprep.subr.mxu0 0.0
    %1656 = vmatpush1.msra.mxu0 0.0
    %1657 = vmatprep.subr.mxu0 0.0
    %1658 = vmatpush1.msra.mxu0 0.0
    %1659 = vmatprep.subr.mxu0 0.0
    %1660 = vmatpush1.msra.mxu0 0.0
    %1661 = vmatprep.subr.mxu0 0.0
    %1662 = vmatpush1.msra.mxu0 0.0
    %1663 = vmatprep.subr.mxu0 0.0
    %1664 = vmatpush1.msra.mxu0 0.0
    %1665 = vmatprep.subr.mxu0 0.0
    %1666 = vmatpush1.msra.mxu0 0.0
    %1667 = vmatprep.subr.mxu0 0.0
    %1668 = vmatpush1.msra.mxu0 0.0
    %1669 = vmatprep.subr.mxu0 0.0
    %1670 = vmatpush1.msra.mxu0 0.0
    %1671 = vmatprep.subr.mxu0 0.0
    %1672 = vmatpush1.msra.mxu0 0.0
    %1673 = vmatprep.subr.mxu0 0.0
    %1674 = vmatpush1.msra.mxu0 0.0
    %1675 = vmatprep.subr.mxu0 0.0
    %1676 = vmatpush1.msra.mxu0 0.0
    %1677 = vmatprep.subr.mxu0 0.0
    %1678 = vmatpush1.msra.mxu0 0.0
    %1679 = vmatprep.subr.mxu0 0.0
    %1680 = vmatpush1.msra.mxu0 0.0
    %1681 = vmatprep.subr.mxu0 0.0
    %1682 = vmatpush1.msra.mxu0 0.0
    %1683 = vmatprep.subr.mxu0 0.0
    %1684 = vmatpush1.msra.mxu0 0.0
    %1685 = vmatprep.subr.mxu0 0.0
    %1686 = vmatpush1.msra.mxu0 0.0
    %1687 = vmatprep.subr.mxu0 0.0
    %1688 = vmatpush1.msra.mxu0 0.0
    %1689 = vmatprep.subr.mxu0 0.0
    %1690 = vmatpush1.msra.mxu0 0.0
    %1691 = vmatprep.subr.mxu0 0.0
    %1692 = vmatpush1.msra.mxu0 0.0
    %1693 = vmatprep.subr.mxu0 0.0
    %1694 = vmatpush1.msra.mxu0 0.0
    %1695 = vmatprep.subr.mxu0 0.0
    %1696 = vmatpush1.msra.mxu0 0.0
    %1697 = vmatprep.mubr.f32.mxu0 0.0
    %1698 = vmatmul.mubr.f32.gmra.mrb[0].mxu0 %v1461
    %v1699 = vpop.f32.mrb[0].mxu0
    %v1700 = vadd.f32 0.0, %v1699
    %v1701 = vpop.f32.mrb[0].mxu0
    %1702 = vdwg.mxu0
    %v1704 = vrot.slane %v1700, 2
    %v1706 = vadd.f32 %v784, %v1704
    %v1707 = vxor.u32 %v1706, 2147483648
    %v1708 = vmul.f32 %v1707, 1.442695
    %v1709 = vpow.pop %v1708
    %v1710 = vadd.f32 %v1709, 1.0
    %v1711 = vrcp.pop %v1710
    %v1712 = vmul.f32 1.0, %v1711
    %v1713 = vtanh.pop %v1706
    %v1715 = vrot.slane %v1450, 6
    %v1717 = vmul.f32 %v1712, %v1715
    %1719 = vrot.lane.b32.xlu0 %v1713, 64
    %v1720 = vpop.permute.xlu0 %1719
    %v1722 = vmul.f32 %v1712, %v1720
    %1724 = vrot.lane.b32.xlu0 %v1722, 32
    %v1725 = vpop.permute.xlu0 %1724
    %v1727 = vadd.f32 %v1717, %v1725
    %v1728 = vtanh.pop %v1727
    %1730 = vrot.lane.b32.xlu0 %v1728, 64
    %v1731 = vpop.permute.xlu0 %1730
    %v1733 = vmul.f32 %v1712, %v1731
    %v1735 = vrot.slane %v1733, 6
    %1736 = vrot.lane.b32.xlu0 %v1735, 32
    %v1737 = vpop.permute.xlu0 %1736
    %v1738 = vsel %vm710, %v1737, 0
    %1740 = vmatprep.subr.mxu0 0.0
    %1741 = vmatpush1.msra.mxu0 %v796
    %1742 = vmatprep.subr.mxu0 0.0
    %1743 = vmatpush1.msra.mxu0 %v797
    %1744 = vmatprep.subr.mxu0 0.0
    %1745 = vmatpush1.msra.mxu0 %v798
    %1746 = vmatprep.subr.mxu0 0.0
    %1747 = vmatpush1.msra.mxu0 %v799
    %1748 = vmatprep.subr.mxu0 0.0
    %1749 = vmatpush1.msra.mxu0 0.0
    %1750 = vmatprep.subr.mxu0 0.0
    %1751 = vmatpush1.msra.mxu0 0.0
    %1752 = vmatprep.subr.mxu0 0.0
    %1753 = vmatpush1.msra.mxu0 0.0
    %1754 = vmatprep.subr.mxu0 0.0
    %1755 = vmatpush1.msra.mxu0 0.0
    %1756 = vmatprep.subr.mxu0 0.0
    %1757 = vmatpush1.msra.mxu0 0.0
    %1758 = vmatprep.subr.mxu0 0.0
    %1759 = vmatpush1.msra.mxu0 0.0
    %1760 = vmatprep.subr.mxu0 0.0
    %1761 = vmatpush1.msra.mxu0 0.0
    %1762 = vmatprep.subr.mxu0 0.0
    %1763 = vmatpush1.msra.mxu0 0.0
    %1764 = vmatprep.subr.mxu0 0.0
    %1765 = vmatpush1.msra.mxu0 0.0
    %1766 = vmatprep.subr.mxu0 0.0
    %1767 = vmatpush1.msra.mxu0 0.0
    %1768 = vmatprep.subr.mxu0 0.0
    %1769 = vmatpush1.msra.mxu0 0.0
    %1770 = vmatprep.subr.mxu0 0.0
    %1771 = vmatpush1.msra.mxu0 0.0
    %1772 = vmatprep.subr.mxu0 0.0
    %1773 = vmatpush1.msra.mxu0 0.0
    %1774 = vmatprep.subr.mxu0 0.0
    %1775 = vmatpush1.msra.mxu0 0.0
    %1776 = vmatprep.subr.mxu0 0.0
    %1777 = vmatpush1.msra.mxu0 0.0
    %1778 = vmatprep.subr.mxu0 0.0
    %1779 = vmatpush1.msra.mxu0 0.0
    %1780 = vmatprep.subr.mxu0 0.0
    %1781 = vmatpush1.msra.mxu0 0.0
    %1782 = vmatprep.subr.mxu0 0.0
    %1783 = vmatpush1.msra.mxu0 0.0
    %1784 = vmatprep.subr.mxu0 0.0
    %1785 = vmatpush1.msra.mxu0 0.0
    %1786 = vmatprep.subr.mxu0 0.0
    %1787 = vmatpush1.msra.mxu0 0.0
    %1788 = vmatprep.subr.mxu0 0.0
    %1789 = vmatpush1.msra.mxu0 0.0
    %1790 = vmatprep.subr.mxu0 0.0
    %1791 = vmatpush1.msra.mxu0 0.0
    %1792 = vmatprep.subr.mxu0 0.0
    %1793 = vmatpush1.msra.mxu0 0.0
    %1794 = vmatprep.subr.mxu0 0.0
    %1795 = vmatpush1.msra.mxu0 0.0
    %1796 = vmatprep.subr.mxu0 0.0
    %1797 = vmatpush1.msra.mxu0 0.0
    %1798 = vmatprep.subr.mxu0 0.0
    %1799 = vmatpush1.msra.mxu0 0.0
    %1800 = vmatprep.subr.mxu0 0.0
    %1801 = vmatpush1.msra.mxu0 0.0
    %1802 = vmatprep.subr.mxu0 0.0
    %1803 = vmatpush1.msra.mxu0 0.0
    %1804 = vmatprep.mubr.f32.mxu0 0.0
    %1805 = vmatmul.mubr.f32.gmra.mrb[0].mxu0 %v1738
    %v1806 = vpop.f32.mrb[0].mxu0
    %v1807 = vadd.f32 %v907, %v1806
    %v1808 = vpop.f32.mrb[0].mxu0
    %1809 = vdwg.mxu0
    %1811 = vrot.lane.b32.xlu0 %v1632, 32
    %v1812 = vpop.permute.xlu0 %1811
    %v1813 = vsel %vm710, %v1812, 0
    %1815 = vmatprep.subr.mxu0 0.0
    %1816 = vmatpush1.msra.mxu0 %v800
    %1817 = vmatprep.subr.mxu0 0.0
    %1818 = vmatpush1.msra.mxu0 %v801
    %1819 = vmatprep.subr.mxu0 0.0
    %1820 = vmatpush1.msra.mxu0 %v802
    %1821 = vmatprep.subr.mxu0 0.0
    %1822 = vmatpush1.msra.mxu0 %v803
    %1823 = vmatprep.subr.mxu0 0.0
    %1824 = vmatpush1.msra.mxu0 0.0
    %1825 = vmatprep.subr.mxu0 0.0
    %1826 = vmatpush1.msra.mxu0 0.0
    %1827 = vmatprep.subr.mxu0 0.0
    %1828 = vmatpush1.msra.mxu0 0.0
    %1829 = vmatprep.subr.mxu0 0.0
    %1830 = vmatpush1.msra.mxu0 0.0
    %1831 = vmatprep.subr.mxu0 0.0
    %1832 = vmatpush1.msra.mxu0 0.0
    %1833 = vmatprep.subr.mxu0 0.0
    %1834 = vmatpush1.msra.mxu0 0.0
    %1835 = vmatprep.subr.mxu0 0.0
    %1836 = vmatpush1.msra.mxu0 0.0
    %1837 = vmatprep.subr.mxu0 0.0
    %1838 = vmatpush1.msra.mxu0 0.0
    %1839 = vmatprep.subr.mxu0 0.0
    %1840 = vmatpush1.msra.mxu0 0.0
    %1841 = vmatprep.subr.mxu0 0.0
    %1842 = vmatpush1.msra.mxu0 0.0
    %1843 = vmatprep.subr.mxu0 0.0
    %1844 = vmatpush1.msra.mxu0 0.0
    %1845 = vmatprep.subr.mxu0 0.0
    %1846 = vmatpush1.msra.mxu0 0.0
    %1847 = vmatprep.subr.mxu0 0.0
    %1848 = vmatpush1.msra.mxu0 0.0
    %1849 = vmatprep.subr.mxu0 0.0
    %1850 = vmatpush1.msra.mxu0 0.0
    %1851 = vmatprep.subr.mxu0 0.0
    %1852 = vmatpush1.msra.mxu0 0.0
    %1853 = vmatprep.subr.mxu0 0.0
    %1854 = vmatpush1.msra.mxu0 0.0
    %1855 = vmatprep.subr.mxu0 0.0
    %1856 = vmatpush1.msra.mxu0 0.0
    %1857 = vmatprep.subr.mxu0 0.0
    %1858 = vmatpush1.msra.mxu0 0.0
    %1859 = vmatprep.subr.mxu0 0.0
    %1860 = vmatpush1.msra.mxu0 0.0
    %1861 = vmatprep.subr.mxu0 0.0
    %1862 = vmatpush1.msra.mxu0 0.0
    %1863 = vmatprep.subr.mxu0 0.0
    %1864 = vmatpush1.msra.mxu0 0.0
    %1865 = vmatprep.subr.mxu0 0.0
    %1866 = vmatpush1.msra.mxu0 0.0
    %1867 = vmatprep.subr.mxu0 0.0
    %1868 = vmatpush1.msra.mxu0 0.0
    %1869 = vmatprep.subr.mxu0 0.0
    %1870 = vmatpush1.msra.mxu0 0.0
    %1871 = vmatprep.subr.mxu0 0.0
    %1872 = vmatpush1.msra.mxu0 0.0
    %1873 = vmatprep.subr.mxu0 0.0
    %1874 = vmatpush1.msra.mxu0 0.0
    %1875 = vmatprep.subr.mxu0 0.0
    %1876 = vmatpush1.msra.mxu0 0.0
    %1877 = vmatprep.subr.mxu0 0.0
    %1878 = vmatpush1.msra.mxu0 0.0
    %1879 = vmatprep.mubr.f32.mxu0 0.0
    %1880 = vmatmul.mubr.f32.gmra.mrb[0].mxu0 %v1813
    %v1881 = vpop.f32.mrb[0].mxu0
    %v1882 = vadd.f32 0.0, %v1881
    %v1883 = vpop.f32.mrb[0].mxu0
    %1884 = vdwg.mxu0
    %v1885 = vadd.f32 %v1807, %v1882
    %v1886 = vxor.u32 %v1885, 2147483648
    %v1887 = vmul.f32 %v1886, 1.442695
    %v1888 = vpow.pop %v1887
    %v1889 = vadd.f32 %v1888, 1.0
    %v1890 = vrcp.pop %v1889
    %v1891 = vmul.f32 1.0, %v1890
    %v1892 = vtanh.pop %v1885
    %v1893 = vmul.f32 %v1891, %v1626
    %1895 = vrot.lane.b32.xlu0 %v1892, 64
    %v1896 = vpop.permute.xlu0 %1895
    %v1898 = vmul.f32 %v1891, %v1896
    %1900 = vrot.lane.b32.xlu0 %v1898, 32
    %v1901 = vpop.permute.xlu0 %1900
    %v1903 = vadd.f32 %v1893, %v1901
    %v1904 = vtanh.pop %v1903
    %1906 = vrot.lane.b32.xlu0 %v1904, 64
    %v1907 = vpop.permute.xlu0 %1906
    %v1909 = vmul.f32 %v1891, %v1907
    %1910 = vmatprep.subr.mxu0 0.0
    %1911 = vmatpush1.msra.mxu0 %v792
    %1912 = vmatprep.subr.mxu0 0.0
    %1913 = vmatpush1.msra.mxu0 %v793
    %1914 = vmatprep.subr.mxu0 0.0
    %1915 = vmatpush1.msra.mxu0 %v794
    %1916 = vmatprep.subr.mxu0 0.0
    %1917 = vmatpush1.msra.mxu0 %v795
    %1918 = vmatprep.subr.mxu0 0.0
    %1919 = vmatpush1.msra.mxu0 0.0
    %1920 = vmatprep.subr.mxu0 0.0
    %1921 = vmatpush1.msra.mxu0 0.0
    %1922 = vmatprep.subr.mxu0 0.0
    %1923 = vmatpush1.msra.mxu0 0.0
    %1924 = vmatprep.subr.mxu0 0.0
    %1925 = vmatpush1.msra.mxu0 0.0
    %1926 = vmatprep.subr.mxu0 0.0
    %1927 = vmatpush1.msra.mxu0 0.0
    %1928 = vmatprep.subr.mxu0 0.0
    %1929 = vmatpush1.msra.mxu0 0.0
    %1930 = vmatprep.subr.mxu0 0.0
    %1931 = vmatpush1.msra.mxu0 0.0
    %1932 = vmatprep.subr.mxu0 0.0
    %1933 = vmatpush1.msra.mxu0 0.0
    %1934 = vmatprep.subr.mxu0 0.0
    %1935 = vmatpush1.msra.mxu0 0.0
    %1936 = vmatprep.subr.mxu0 0.0
    %1937 = vmatpush1.msra.mxu0 0.0
    %1938 = vmatprep.subr.mxu0 0.0
    %1939 = vmatpush1.msra.mxu0 0.0
    %1940 = vmatprep.subr.mxu0 0.0
    %1941 = vmatpush1.msra.mxu0 0.0
    %1942 = vmatprep.subr.mxu0 0.0
    %1943 = vmatpush1.msra.mxu0 0.0
    %1944 = vmatprep.subr.mxu0 0.0
    %1945 = vmatpush1.msra.mxu0 0.0
    %1946 = vmatprep.subr.mxu0 0.0
    %1947 = vmatpush1.msra.mxu0 0.0
    %1948 = vmatprep.subr.mxu0 0.0
    %1949 = vmatpush1.msra.mxu0 0.0
    %1950 = vmatprep.subr.mxu0 0.0
    %1951 = vmatpush1.msra.mxu0 0.0
    %1952 = vmatprep.subr.mxu0 0.0
    %1953 = vmatpush1.msra.mxu0 0.0
    %1954 = vmatprep.subr.mxu0 0.0
    %1955 = vmatpush1.msra.mxu0 0.0
    %1956 = vmatprep.subr.mxu0 0.0
    %1957 = vmatpush1.msra.mxu0 0.0
    %1958 = vmatprep.subr.mxu0 0.0
    %1959 = vmatpush1.msra.mxu0 0.0
    %1960 = vmatprep.subr.mxu0 0.0
    %1961 = vmatpush1.msra.mxu0 0.0
    %1962 = vmatprep.subr.mxu0 0.0
    %1963 = vmatpush1.msra.mxu0 0.0
    %1964 = vmatprep.subr.mxu0 0.0
    %1965 = vmatpush1.msra.mxu0 0.0
    %1966 = vmatprep.subr.mxu0 0.0
    %1967 = vmatpush1.msra.mxu0 0.0
    %1968 = vmatprep.subr.mxu0 0.0
    %1969 = vmatpush1.msra.mxu0 0.0
    %1970 = vmatprep.subr.mxu0 0.0
    %1971 = vmatpush1.msra.mxu0 0.0
    %1972 = vmatprep.subr.mxu0 0.0
    %1973 = vmatpush1.msra.mxu0 0.0
    %1974 = vmatprep.mubr.f32.mxu0 0.0
    %1975 = vmatmul.mubr.f32.gmra.mrb[0].mxu0 %v1738
    %v1976 = vpop.f32.mrb[0].mxu0
    %v1977 = vadd.f32 0.0, %v1976
    %v1978 = vpop.f32.mrb[0].mxu0
    %1979 = vdwg.mxu0
    %v1980 = vadd.f32 %v789, %v1977
    %v1981 = vxor.u32 %v1980, 2147483648
    %v1982 = vmul.f32 %v1981, 1.442695
    %v1983 = vpow.pop %v1982
    %v1984 = vadd.f32 %v1983, 1.0
    %v1985 = vrcp.pop %v1984
    %v1986 = vmul.f32 1.0, %v1985
    %v1987 = vtanh.pop %v1980
    %v1989 = vrot.slane %v1727, 6
    %v1991 = vmul.f32 %v1986, %v1989
    %1993 = vrot.lane.b32.xlu0 %v1987, 64
    %v1994 = vpop.permute.xlu0 %1993
    %v1996 = vmul.f32 %v1986, %v1994
    %1998 = vrot.lane.b32.xlu0 %v1996, 32
    %v1999 = vpop.permute.xlu0 %1998
    %v2001 = vadd.f32 %v1991, %v1999
    %v2002 = vtanh.pop %v2001
    %2004 = vrot.lane.b32.xlu0 %v2002, 64
    %v2005 = vpop.permute.xlu0 %2004
    %v2007 = vmul.f32 %v1986, %v2005
    %2009 = vrot.lane.b32.xlu0 %v2007, 32
    %v2010 = vpop.permute.xlu0 %2009
    %v2011 = vsel %vm710, %v2010, 0
    %2013 = vmatprep.subr.mxu0 0.0
    %2014 = vmatpush1.msra.mxu0 %v796
    %2015 = vmatprep.subr.mxu0 0.0
    %2016 = vmatpush1.msra.mxu0 %v797
    %2017 = vmatprep.subr.mxu0 0.0
    %2018 = vmatpush1.msra.mxu0 %v798
    %2019 = vmatprep.subr.mxu0 0.0
    %2020 = vmatpush1.msra.mxu0 %v799
    %2021 = vmatprep.subr.mxu0 0.0
    %2022 = vmatpush1.msra.mxu0 0.0
    %2023 = vmatprep.subr.mxu0 0.0
    %2024 = vmatpush1.msra.mxu0 0.0
    %2025 = vmatprep.subr.mxu0 0.0
    %2026 = vmatpush1.msra.mxu0 0.0
    %2027 = vmatprep.subr.mxu0 0.0
    %2028 = vmatpush1.msra.mxu0 0.0
    %2029 = vmatprep.subr.mxu0 0.0
    %2030 = vmatpush1.msra.mxu0 0.0
    %2031 = vmatprep.subr.mxu0 0.0
    %2032 = vmatpush1.msra.mxu0 0.0
    %2033 = vmatprep.subr.mxu0 0.0
    %2034 = vmatpush1.msra.mxu0 0.0
    %2035 = vmatprep.subr.mxu0 0.0
    %2036 = vmatpush1.msra.mxu0 0.0
    %2037 = vmatprep.subr.mxu0 0.0
    %2038 = vmatpush1.msra.mxu0 0.0
    %2039 = vmatprep.subr.mxu0 0.0
    %2040 = vmatpush1.msra.mxu0 0.0
    %2041 = vmatprep.subr.mxu0 0.0
    %2042 = vmatpush1.msra.mxu0 0.0
    %2043 = vmatprep.subr.mxu0 0.0
    %2044 = vmatpush1.msra.mxu0 0.0
    %2045 = vmatprep.subr.mxu0 0.0
    %2046 = vmatpush1.msra.mxu0 0.0
    %2047 = vmatprep.subr.mxu0 0.0
    %2048 = vmatpush1.msra.mxu0 0.0
    %2049 = vmatprep.subr.mxu0 0.0
    %2050 = vmatpush1.msra.mxu0 0.0
    %2051 = vmatprep.subr.mxu0 0.0
    %2052 = vmatpush1.msra.mxu0 0.0
    %2053 = vmatprep.subr.mxu0 0.0
    %2054 = vmatpush1.msra.mxu0 0.0
    %2055 = vmatprep.subr.mxu0 0.0
    %2056 = vmatpush1.msra.mxu0 0.0
    %2057 = vmatprep.subr.mxu0 0.0
    %2058 = vmatpush1.msra.mxu0 0.0
    %2059 = vmatprep.subr.mxu0 0.0
    %2060 = vmatpush1.msra.mxu0 0.0
    %2061 = vmatprep.subr.mxu0 0.0
    %2062 = vmatpush1.msra.mxu0 0.0
    %2063 = vmatprep.subr.mxu0 0.0
    %2064 = vmatpush1.msra.mxu0 0.0
    %2065 = vmatprep.subr.mxu0 0.0
    %2066 = vmatpush1.msra.mxu0 0.0
    %2067 = vmatprep.subr.mxu0 0.0
    %2068 = vmatpush1.msra.mxu0 0.0
    %2069 = vmatprep.subr.mxu0 0.0
    %2070 = vmatpush1.msra.mxu0 0.0
    %2071 = vmatprep.subr.mxu0 0.0
    %2072 = vmatpush1.msra.mxu0 0.0
    %2073 = vmatprep.subr.mxu0 0.0
    %2074 = vmatpush1.msra.mxu0 0.0
    %2075 = vmatprep.subr.mxu0 0.0
    %2076 = vmatpush1.msra.mxu0 0.0
    %2077 = vmatprep.mubr.f32.mxu0 0.0
    %2078 = vmatmul.mubr.f32.gmra.mrb[0].mxu0 %v2011
    %v2079 = vpop.f32.mrb[0].mxu0
    %v2080 = vadd.f32 %v907, %v2079
    %v2081 = vpop.f32.mrb[0].mxu0
    %2082 = vdwg.mxu0
    %2084 = vrot.lane.b32.xlu0 %v1909, 32
    %v2085 = vpop.permute.xlu0 %2084
    %v2086 = vsel %vm710, %v2085, 0
    %2088 = vmatprep.subr.mxu0 0.0
    %2089 = vmatpush1.msra.mxu0 %v800
    %2090 = vmatprep.subr.mxu0 0.0
    %2091 = vmatpush1.msra.mxu0 %v801
    %2092 = vmatprep.subr.mxu0 0.0
    %2093 = vmatpush1.msra.mxu0 %v802
    %2094 = vmatprep.subr.mxu0 0.0
    %2095 = vmatpush1.msra.mxu0 %v803
    %2096 = vmatprep.subr.mxu0 0.0
    %2097 = vmatpush1.msra.mxu0 0.0
    %2098 = vmatprep.subr.mxu0 0.0
    %2099 = vmatpush1.msra.mxu0 0.0
    %2100 = vmatprep.subr.mxu0 0.0
    %2101 = vmatpush1.msra.mxu0 0.0
    %2102 = vmatprep.subr.mxu0 0.0
    %2103 = vmatpush1.msra.mxu0 0.0
    %2104 = vmatprep.subr.mxu0 0.0
    %2105 = vmatpush1.msra.mxu0 0.0
    %2106 = vmatprep.subr.mxu0 0.0
    %2107 = vmatpush1.msra.mxu0 0.0
    %2108 = vmatprep.subr.mxu0 0.0
    %2109 = vmatpush1.msra.mxu0 0.0
    %2110 = vmatprep.subr.mxu0 0.0
    %2111 = vmatpush1.msra.mxu0 0.0
    %2112 = vmatprep.subr.mxu0 0.0
    %2113 = vmatpush1.msra.mxu0 0.0
    %2114 = vmatprep.subr.mxu0 0.0
    %2115 = vmatpush1.msra.mxu0 0.0
    %2116 = vmatprep.subr.mxu0 0.0
    %2117 = vmatpush1.msra.mxu0 0.0
    %2118 = vmatprep.subr.mxu0 0.0
    %2119 = vmatpush1.msra.mxu0 0.0
    %2120 = vmatprep.subr.mxu0 0.0
    %2121 = vmatpush1.msra.mxu0 0.0
    %2122 = vmatprep.subr.mxu0 0.0
    %2123 = vmatpush1.msra.mxu0 0.0
    %2124 = vmatprep.subr.mxu0 0.0
    %2125 = vmatpush1.msra.mxu0 0.0
    %2126 = vmatprep.subr.mxu0 0.0
    %2127 = vmatpush1.msra.mxu0 0.0
    %2128 = vmatprep.subr.mxu0 0.0
    %2129 = vmatpush1.msra.mxu0 0.0
    %2130 = vmatprep.subr.mxu0 0.0
    %2131 = vmatpush1.msra.mxu0 0.0
    %2132 = vmatprep.subr.mxu0 0.0
    %2133 = vmatpush1.msra.mxu0 0.0
    %2134 = vmatprep.subr.mxu0 0.0
    %2135 = vmatpush1.msra.mxu0 0.0
    %2136 = vmatprep.subr.mxu0 0.0
    %2137 = vmatpush1.msra.mxu0 0.0
    %2138 = vmatprep.subr.mxu0 0.0
    %2139 = vmatpush1.msra.mxu0 0.0
    %2140 = vmatprep.subr.mxu0 0.0
    %2141 = vmatpush1.msra.mxu0 0.0
    %2142 = vmatprep.subr.mxu0 0.0
    %2143 = vmatpush1.msra.mxu0 0.0
    %2144 = vmatprep.subr.mxu0 0.0
    %2145 = vmatpush1.msra.mxu0 0.0
    %2146 = vmatprep.subr.mxu0 0.0
    %2147 = vmatpush1.msra.mxu0 0.0
    %2148 = vmatprep.subr.mxu0 0.0
    %2149 = vmatpush1.msra.mxu0 0.0
    %2150 = vmatprep.subr.mxu0 0.0
    %2151 = vmatpush1.msra.mxu0 0.0
    %2152 = vmatprep.mubr.f32.mxu0 0.0
    %2153 = vmatmul.mubr.f32.gmra.mrb[0].mxu0 %v2086
    %v2154 = vpop.f32.mrb[0].mxu0
    %v2155 = vadd.f32 0.0, %v2154
    %v2156 = vpop.f32.mrb[0].mxu0
    %2157 = vdwg.mxu0
    %v2158 = vadd.f32 %v2080, %v2155
    %v2159 = vxor.u32 %v2158, 2147483648
    %v2160 = vmul.f32 %v2159, 1.442695
    %v2161 = vpow.pop %v2160
    %v2162 = vadd.f32 %v2161, 1.0
    %v2163 = vrcp.pop %v2162
    %v2164 = vmul.f32 1.0, %v2163
    %v2165 = vtanh.pop %v2158
    %v2166 = vmul.f32 %v2164, %v1903
    %2168 = vrot.lane.b32.xlu0 %v2165, 64
    %v2169 = vpop.permute.xlu0 %2168
    %v2171 = vmul.f32 %v2164, %v2169
    %2173 = vrot.lane.b32.xlu0 %v2171, 32
    %v2174 = vpop.permute.xlu0 %2173
    %v2176 = vadd.f32 %v2166, %v2174
    %v2177 = vtanh.pop %v2176
    %2179 = vrot.lane.b32.xlu0 %v2177, 64
    %v2180 = vpop.permute.xlu0 %2179
    %v2182 = vmul.f32 %v2164, %v2180
    %2183 = vmatprep.subr.mxu0 0.0
    %2184 = vmatpush1.msra.mxu0 %v792
    %2185 = vmatprep.subr.mxu0 0.0
    %2186 = vmatpush1.msra.mxu0 %v793
    %2187 = vmatprep.subr.mxu0 0.0
    %2188 = vmatpush1.msra.mxu0 %v794
    %2189 = vmatprep.subr.mxu0 0.0
    %2190 = vmatpush1.msra.mxu0 %v795
    %2191 = vmatprep.subr.mxu0 0.0
    %2192 = vmatpush1.msra.mxu0 0.0
    %2193 = vmatprep.subr.mxu0 0.0
    %2194 = vmatpush1.msra.mxu0 0.0
    %2195 = vmatprep.subr.mxu0 0.0
    %2196 = vmatpush1.msra.mxu0 0.0
    %2197 = vmatprep.subr.mxu0 0.0
    %2198 = vmatpush1.msra.mxu0 0.0
    %2199 = vmatprep.subr.mxu0 0.0
    %2200 = vmatpush1.msra.mxu0 0.0
    %2201 = vmatprep.subr.mxu0 0.0
    %2202 = vmatpush1.msra.mxu0 0.0
    %2203 = vmatprep.subr.mxu0 0.0
    %2204 = vmatpush1.msra.mxu0 0.0
    %2205 = vmatprep.subr.mxu0 0.0
    %2206 = vmatpush1.msra.mxu0 0.0
    %2207 = vmatprep.subr.mxu0 0.0
    %2208 = vmatpush1.msra.mxu0 0.0
    %2209 = vmatprep.subr.mxu0 0.0
    %2210 = vmatpush1.msra.mxu0 0.0
    %2211 = vmatprep.subr.mxu0 0.0
    %2212 = vmatpush1.msra.mxu0 0.0
    %2213 = vmatprep.subr.mxu0 0.0
    %2214 = vmatpush1.msra.mxu0 0.0
    %2215 = vmatprep.subr.mxu0 0.0
    %2216 = vmatpush1.msra.mxu0 0.0
    %2217 = vmatprep.subr.mxu0 0.0
    %2218 = vmatpush1.msra.mxu0 0.0
    %2219 = vmatprep.subr.mxu0 0.0
    %2220 = vmatpush1.msra.mxu0 0.0
    %2221 = vmatprep.subr.mxu0 0.0
    %2222 = vmatpush1.msra.mxu0 0.0
    %2223 = vmatprep.subr.mxu0 0.0
    %2224 = vmatpush1.msra.mxu0 0.0
    %2225 = vmatprep.subr.mxu0 0.0
    %2226 = vmatpush1.msra.mxu0 0.0
    %2227 = vmatprep.subr.mxu0 0.0
    %2228 = vmatpush1.msra.mxu0 0.0
    %2229 = vmatprep.subr.mxu0 0.0
    %2230 = vmatpush1.msra.mxu0 0.0
    %2231 = vmatprep.subr.mxu0 0.0
    %2232 = vmatpush1.msra.mxu0 0.0
    %2233 = vmatprep.subr.mxu0 0.0
    %2234 = vmatpush1.msra.mxu0 0.0
    %2235 = vmatprep.subr.mxu0 0.0
    %2236 = vmatpush1.msra.mxu0 0.0
    %2237 = vmatprep.subr.mxu0 0.0
    %2238 = vmatpush1.msra.mxu0 0.0
    %2239 = vmatprep.subr.mxu0 0.0
    %2240 = vmatpush1.msra.mxu0 0.0
    %2241 = vmatprep.subr.mxu0 0.0
    %2242 = vmatpush1.msra.mxu0 0.0
    %2243 = vmatprep.subr.mxu0 0.0
    %2244 = vmatpush1.msra.mxu0 0.0
    %2245 = vmatprep.subr.mxu0 0.0
    %2246 = vmatpush1.msra.mxu0 0.0
    %2247 = vmatprep.mubr.f32.mxu0 0.0
    %2248 = vmatmul.mubr.f32.gmra.mrb[0].mxu0 %v2011
    %v2249 = vpop.f32.mrb[0].mxu0
    %v2250 = vadd.f32 0.0, %v2249
    %v2251 = vpop.f32.mrb[0].mxu0
    %2252 = vdwg.mxu0
    %v2254 = vrot.slane %v2250, 6
    %v2256 = vadd.f32 %v789, %v2254
    %v2257 = vxor.u32 %v2256, 2147483648
    %v2258 = vmul.f32 %v2257, 1.442695
    %v2259 = vpow.pop %v2258
    %v2260 = vadd.f32 %v2259, 1.0
    %v2261 = vrcp.pop %v2260
    %v2262 = vmul.f32 1.0, %v2261
    %v2263 = vtanh.pop %v2256
    %v2265 = vrot.slane %v2001, 6
    %v2267 = vmul.f32 %v2262, %v2265
    %2269 = vrot.lane.b32.xlu0 %v2263, 64
    %v2270 = vpop.permute.xlu0 %2269
    %v2272 = vmul.f32 %v2262, %v2270
    %2274 = vrot.lane.b32.xlu0 %v2272, 32
    %v2275 = vpop.permute.xlu0 %2274
    %v2277 = vadd.f32 %v2267, %v2275
    %v2278 = vtanh.pop %v2277
    %2280 = vrot.lane.b32.xlu0 %v2278, 64
    %v2281 = vpop.permute.xlu0 %2280
    %v2283 = vmul.f32 %v2262, %v2281
    %v2285 = vrot.slane %v2283, 2
    %2286 = vrot.lane.b32.xlu0 %v2285, 32
    %v2287 = vpop.permute.xlu0 %2286
    %v2288 = vsel %vm710, %v2287, 0
    %2290 = vmatprep.subr.mxu0 0.0
    %2291 = vmatpush1.msra.mxu0 %v796
    %2292 = vmatprep.subr.mxu0 0.0
    %2293 = vmatpush1.msra.mxu0 %v797
    %2294 = vmatprep.subr.mxu0 0.0
    %2295 = vmatpush1.msra.mxu0 %v798
    %2296 = vmatprep.subr.mxu0 0.0
    %2297 = vmatpush1.msra.mxu0 %v799
    %2298 = vmatprep.subr.mxu0 0.0
    %2299 = vmatpush1.msra.mxu0 0.0
    %2300 = vmatprep.subr.mxu0 0.0
    %2301 = vmatpush1.msra.mxu0 0.0
    %2302 = vmatprep.subr.mxu0 0.0
    %2303 = vmatpush1.msra.mxu0 0.0
    %2304 = vmatprep.subr.mxu0 0.0
    %2305 = vmatpush1.msra.mxu0 0.0
    %2306 = vmatprep.subr.mxu0 0.0
    %2307 = vmatpush1.msra.mxu0 0.0
    %2308 = vmatprep.subr.mxu0 0.0
    %2309 = vmatpush1.msra.mxu0 0.0
    %2310 = vmatprep.subr.mxu0 0.0
    %2311 = vmatpush1.msra.mxu0 0.0
    %2312 = vmatprep.subr.mxu0 0.0
    %2313 = vmatpush1.msra.mxu0 0.0
    %2314 = vmatprep.subr.mxu0 0.0
    %2315 = vmatpush1.msra.mxu0 0.0
    %2316 = vmatprep.subr.mxu0 0.0
    %2317 = vmatpush1.msra.mxu0 0.0
    %2318 = vmatprep.subr.mxu0 0.0
    %2319 = vmatpush1.msra.mxu0 0.0
    %2320 = vmatprep.subr.mxu0 0.0
    %2321 = vmatpush1.msra.mxu0 0.0
    %2322 = vmatprep.subr.mxu0 0.0
    %2323 = vmatpush1.msra.mxu0 0.0
    %2324 = vmatprep.subr.mxu0 0.0
    %2325 = vmatpush1.msra.mxu0 0.0
    %2326 = vmatprep.subr.mxu0 0.0
    %2327 = vmatpush1.msra.mxu0 0.0
    %2328 = vmatprep.subr.mxu0 0.0
    %2329 = vmatpush1.msra.mxu0 0.0
    %2330 = vmatprep.subr.mxu0 0.0
    %2331 = vmatpush1.msra.mxu0 0.0
    %2332 = vmatprep.subr.mxu0 0.0
    %2333 = vmatpush1.msra.mxu0 0.0
    %2334 = vmatprep.subr.mxu0 0.0
    %2335 = vmatpush1.msra.mxu0 0.0
    %2336 = vmatprep.subr.mxu0 0.0
    %2337 = vmatpush1.msra.mxu0 0.0
    %2338 = vmatprep.subr.mxu0 0.0
    %2339 = vmatpush1.msra.mxu0 0.0
    %2340 = vmatprep.subr.mxu0 0.0
    %2341 = vmatpush1.msra.mxu0 0.0
    %2342 = vmatprep.subr.mxu0 0.0
    %2343 = vmatpush1.msra.mxu0 0.0
    %2344 = vmatprep.subr.mxu0 0.0
    %2345 = vmatpush1.msra.mxu0 0.0
    %2346 = vmatprep.subr.mxu0 0.0
    %2347 = vmatpush1.msra.mxu0 0.0
    %2348 = vmatprep.subr.mxu0 0.0
    %2349 = vmatpush1.msra.mxu0 0.0
    %2350 = vmatprep.subr.mxu0 0.0
    %2351 = vmatpush1.msra.mxu0 0.0
    %2352 = vmatprep.subr.mxu0 0.0
    %2353 = vmatpush1.msra.mxu0 0.0
    %2354 = vmatprep.mubr.f32.mxu0 0.0
    %2355 = vmatmul.mubr.f32.gmra.mrb[0].mxu0 %v2288
    %v2356 = vpop.f32.mrb[0].mxu0
    %v2357 = vadd.f32 %v907, %v2356
    %v2358 = vpop.f32.mrb[0].mxu0
    %2359 = vdwg.mxu0
    %2361 = vrot.lane.b32.xlu0 %v2182, 32
    %v2362 = vpop.permute.xlu0 %2361
    %v2363 = vsel %vm710, %v2362, 0
    %2365 = vmatprep.subr.mxu0 0.0
    %2366 = vmatpush1.msra.mxu0 %v800
    %2367 = vmatprep.subr.mxu0 0.0
    %2368 = vmatpush1.msra.mxu0 %v801
    %2369 = vmatprep.subr.mxu0 0.0
    %2370 = vmatpush1.msra.mxu0 %v802
    %2371 = vmatprep.subr.mxu0 0.0
    %2372 = vmatpush1.msra.mxu0 %v803
    %2373 = vmatprep.subr.mxu0 0.0
    %2374 = vmatpush1.msra.mxu0 0.0
    %2375 = vmatprep.subr.mxu0 0.0
    %2376 = vmatpush1.msra.mxu0 0.0
    %2377 = vmatprep.subr.mxu0 0.0
    %2378 = vmatpush1.msra.mxu0 0.0
    %2379 = vmatprep.subr.mxu0 0.0
    %2380 = vmatpush1.msra.mxu0 0.0
    %2381 = vmatprep.subr.mxu0 0.0
    %2382 = vmatpush1.msra.mxu0 0.0
    %2383 = vmatprep.subr.mxu0 0.0
    %2384 = vmatpush1.msra.mxu0 0.0
    %2385 = vmatprep.subr.mxu0 0.0
    %2386 = vmatpush1.msra.mxu0 0.0
    %2387 = vmatprep.subr.mxu0 0.0
    %2388 = vmatpush1.msra.mxu0 0.0
    %2389 = vmatprep.subr.mxu0 0.0
    %2390 = vmatpush1.msra.mxu0 0.0
    %2391 = vmatprep.subr.mxu0 0.0
    %2392 = vmatpush1.msra.mxu0 0.0
    %2393 = vmatprep.subr.mxu0 0.0
    %2394 = vmatpush1.msra.mxu0 0.0
    %2395 = vmatprep.subr.mxu0 0.0
    %2396 = vmatpush1.msra.mxu0 0.0
    %2397 = vmatprep.subr.mxu0 0.0
    %2398 = vmatpush1.msra.mxu0 0.0
    %2399 = vmatprep.subr.mxu0 0.0
    %2400 = vmatpush1.msra.mxu0 0.0
    %2401 = vmatprep.subr.mxu0 0.0
    %2402 = vmatpush1.msra.mxu0 0.0
    %2403 = vmatprep.subr.mxu0 0.0
    %2404 = vmatpush1.msra.mxu0 0.0
    %2405 = vmatprep.subr.mxu0 0.0
    %2406 = vmatpush1.msra.mxu0 0.0
    %2407 = vmatprep.subr.mxu0 0.0
    %2408 = vmatpush1.msra.mxu0 0.0
    %2409 = vmatprep.subr.mxu0 0.0
    %2410 = vmatpush1.msra.mxu0 0.0
    %2411 = vmatprep.subr.mxu0 0.0
    %2412 = vmatpush1.msra.mxu0 0.0
    %2413 = vmatprep.subr.mxu0 0.0
    %2414 = vmatpush1.msra.mxu0 0.0
    %2415 = vmatprep.subr.mxu0 0.0
    %2416 = vmatpush1.msra.mxu0 0.0
    %2417 = vmatprep.subr.mxu0 0.0
    %2418 = vmatpush1.msra.mxu0 0.0
    %2419 = vmatprep.subr.mxu0 0.0
    %2420 = vmatpush1.msra.mxu0 0.0
    %2421 = vmatprep.subr.mxu0 0.0
    %2422 = vmatpush1.msra.mxu0 0.0
    %2423 = vmatprep.subr.mxu0 0.0
    %2424 = vmatpush1.msra.mxu0 0.0
    %2425 = vmatprep.subr.mxu0 0.0
    %2426 = vmatpush1.msra.mxu0 0.0
    %2427 = vmatprep.subr.mxu0 0.0
    %2428 = vmatpush1.msra.mxu0 0.0
    %2429 = vmatprep.mubr.f32.mxu0 0.0
    %2430 = vmatmul.mubr.f32.gmra.mrb[0].mxu0 %v2363
    %v2431 = vpop.f32.mrb[0].mxu0
    %v2432 = vadd.f32 0.0, %v2431
    %v2433 = vpop.f32.mrb[0].mxu0
    %2434 = vdwg.mxu0
    %v2435 = vadd.f32 %v2357, %v2432
    %v2436 = vxor.u32 %v2435, 2147483648
    %v2437 = vmul.f32 %v2436, 1.442695
    %v2438 = vpow.pop %v2437
    %v2439 = vadd.f32 %v2438, 1.0
    %v2440 = vrcp.pop %v2439
    %v2441 = vmul.f32 1.0, %v2440
    %v2442 = vtanh.pop %v2435
    %v2443 = vmul.f32 %v2441, %v2176
    %2445 = vrot.lane.b32.xlu0 %v2442, 64
    %v2446 = vpop.permute.xlu0 %2445
    %v2448 = vmul.f32 %v2441, %v2446
    %2450 = vrot.lane.b32.xlu0 %v2448, 32
    %v2451 = vpop.permute.xlu0 %2450
    %v2453 = vadd.f32 %v2443, %v2451
    %v2454 = vtanh.pop %v2453
    %2456 = vrot.lane.b32.xlu0 %v2454, 64
    %v2457 = vpop.permute.xlu0 %2456
    %v2459 = vmul.f32 %v2441, %v2457
    %2460 = vmatprep.subr.mxu0 0.0
    %2461 = vmatpush1.msra.mxu0 %v792
    %2462 = vmatprep.subr.mxu0 0.0
    %2463 = vmatpush1.msra.mxu0 %v793
    %2464 = vmatprep.subr.mxu0 0.0
    %2465 = vmatpush1.msra.mxu0 %v794
    %2466 = vmatprep.subr.mxu0 0.0
    %2467 = vmatpush1.msra.mxu0 %v795
    %2468 = vmatprep.subr.mxu0 0.0
    %2469 = vmatpush1.msra.mxu0 0.0
    %2470 = vmatprep.subr.mxu0 0.0
    %2471 = vmatpush1.msra.mxu0 0.0
    %2472 = vmatprep.subr.mxu0 0.0
    %2473 = vmatpush1.msra.mxu0 0.0
    %2474 = vmatprep.subr.mxu0 0.0
    %2475 = vmatpush1.msra.mxu0 0.0
    %2476 = vmatprep.subr.mxu0 0.0
    %2477 = vmatpush1.msra.mxu0 0.0
    %2478 = vmatprep.subr.mxu0 0.0
    %2479 = vmatpush1.msra.mxu0 0.0
    %2480 = vmatprep.subr.mxu0 0.0
    %2481 = vmatpush1.msra.mxu0 0.0
    %2482 = vmatprep.subr.mxu0 0.0
    %2483 = vmatpush1.msra.mxu0 0.0
    %2484 = vmatprep.subr.mxu0 0.0
    %2485 = vmatpush1.msra.mxu0 0.0
    %2486 = vmatprep.subr.mxu0 0.0
    %2487 = vmatpush1.msra.mxu0 0.0
    %2488 = vmatprep.subr.mxu0 0.0
    %2489 = vmatpush1.msra.mxu0 0.0
    %2490 = vmatprep.subr.mxu0 0.0
    %2491 = vmatpush1.msra.mxu0 0.0
    %2492 = vmatprep.subr.mxu0 0.0
    %2493 = vmatpush1.msra.mxu0 0.0
    %2494 = vmatprep.subr.mxu0 0.0
    %2495 = vmatpush1.msra.mxu0 0.0
    %2496 = vmatprep.subr.mxu0 0.0
    %2497 = vmatpush1.msra.mxu0 0.0
    %2498 = vmatprep.subr.mxu0 0.0
    %2499 = vmatpush1.msra.mxu0 0.0
    %2500 = vmatprep.subr.mxu0 0.0
    %2501 = vmatpush1.msra.mxu0 0.0
    %2502 = vmatprep.subr.mxu0 0.0
    %2503 = vmatpush1.msra.mxu0 0.0
    %2504 = vmatprep.subr.mxu0 0.0
    %2505 = vmatpush1.msra.mxu0 0.0
    %2506 = vmatprep.subr.mxu0 0.0
    %2507 = vmatpush1.msra.mxu0 0.0
    %2508 = vmatprep.subr.mxu0 0.0
    %2509 = vmatpush1.msra.mxu0 0.0
    %2510 = vmatprep.subr.mxu0 0.0
    %2511 = vmatpush1.msra.mxu0 0.0
    %2512 = vmatprep.subr.mxu0 0.0
    %2513 = vmatpush1.msra.mxu0 0.0
    %2514 = vmatprep.subr.mxu0 0.0
    %2515 = vmatpush1.msra.mxu0 0.0
    %2516 = vmatprep.subr.mxu0 0.0
    %2517 = vmatpush1.msra.mxu0 0.0
    %2518 = vmatprep.subr.mxu0 0.0
    %2519 = vmatpush1.msra.mxu0 0.0
    %2520 = vmatprep.subr.mxu0 0.0
    %2521 = vmatpush1.msra.mxu0 0.0
    %2522 = vmatprep.subr.mxu0 0.0
    %2523 = vmatpush1.msra.mxu0 0.0
    %2524 = vmatprep.mubr.f32.mxu0 0.0
    %2525 = vmatmul.mubr.f32.gmra.mrb[0].mxu0 %v2288
    %v2526 = vpop.f32.mrb[0].mxu0
    %v2527 = vadd.f32 0.0, %v2526
    %v2528 = vpop.f32.mrb[0].mxu0
    %2529 = vdwg.mxu0
    %v2531 = vrot.slane %v2527, 4
    %v2533 = vadd.f32 %v789, %v2531
    %v2534 = vxor.u32 %v2533, 2147483648
    %v2535 = vmul.f32 %v2534, 1.442695
    %v2536 = vpow.pop %v2535
    %v2537 = vadd.f32 %v2536, 1.0
    %v2538 = vrcp.pop %v2537
    %v2539 = vmul.f32 1.0, %v2538
    %v2540 = vtanh.pop %v2533
    %v2542 = vrot.slane %v2277, 6
    %v2544 = vmul.f32 %v2539, %v2542
    %2546 = vrot.lane.b32.xlu0 %v2540, 64
    %v2547 = vpop.permute.xlu0 %2546
    %v2549 = vmul.f32 %v2539, %v2547
    %2551 = vrot.lane.b32.xlu0 %v2549, 32
    %v2552 = vpop.permute.xlu0 %2551
    %v2554 = vadd.f32 %v2544, %v2552
    %v2555 = vtanh.pop %v2554
    %2557 = vrot.lane.b32.xlu0 %v2555, 64
    %v2558 = vpop.permute.xlu0 %2557
    %v2560 = vmul.f32 %v2539, %v2558
    %v2562 = vrot.slane %v2560, 4
    %2563 = vrot.lane.b32.xlu0 %v2562, 32
    %v2564 = vpop.permute.xlu0 %2563
    %v2565 = vsel %vm710, %v2564, 0
    %2567 = vmatprep.subr.mxu0 0.0
    %2568 = vmatpush1.msra.mxu0 %v796
    %2569 = vmatprep.subr.mxu0 0.0
    %2570 = vmatpush1.msra.mxu0 %v797
    %2571 = vmatprep.subr.mxu0 0.0
    %2572 = vmatpush1.msra.mxu0 %v798
    %2573 = vmatprep.subr.mxu0 0.0
    %2574 = vmatpush1.msra.mxu0 %v799
    %2575 = vmatprep.subr.mxu0 0.0
    %2576 = vmatpush1.msra.mxu0 0.0
    %2577 = vmatprep.subr.mxu0 0.0
    %2578 = vmatpush1.msra.mxu0 0.0
    %2579 = vmatprep.subr.mxu0 0.0
    %2580 = vmatpush1.msra.mxu0 0.0
    %2581 = vmatprep.subr.mxu0 0.0
    %2582 = vmatpush1.msra.mxu0 0.0
    %2583 = vmatprep.subr.mxu0 0.0
    %2584 = vmatpush1.msra.mxu0 0.0
    %2585 = vmatprep.subr.mxu0 0.0
    %2586 = vmatpush1.msra.mxu0 0.0
    %2587 = vmatprep.subr.mxu0 0.0
    %2588 = vmatpush1.msra.mxu0 0.0
    %2589 = vmatprep.subr.mxu0 0.0
    %2590 = vmatpush1.msra.mxu0 0.0
    %2591 = vmatprep.subr.mxu0 0.0
    %2592 = vmatpush1.msra.mxu0 0.0
    %2593 = vmatprep.subr.mxu0 0.0
    %2594 = vmatpush1.msra.mxu0 0.0
    %2595 = vmatprep.subr.mxu0 0.0
    %2596 = vmatpush1.msra.mxu0 0.0
    %2597 = vmatprep.subr.mxu0 0.0
    %2598 = vmatpush1.msra.mxu0 0.0
    %2599 = vmatprep.subr.mxu0 0.0
    %2600 = vmatpush1.msra.mxu0 0.0
    %2601 = vmatprep.subr.mxu0 0.0
    %2602 = vmatpush1.msra.mxu0 0.0
    %2603 = vmatprep.subr.mxu0 0.0
    %2604 = vmatpush1.msra.mxu0 0.0
    %2605 = vmatprep.subr.mxu0 0.0
    %2606 = vmatpush1.msra.mxu0 0.0
    %2607 = vmatprep.subr.mxu0 0.0
    %2608 = vmatpush1.msra.mxu0 0.0
    %2609 = vmatprep.subr.mxu0 0.0
    %2610 = vmatpush1.msra.mxu0 0.0
    %2611 = vmatprep.subr.mxu0 0.0
    %2612 = vmatpush1.msra.mxu0 0.0
    %2613 = vmatprep.subr.mxu0 0.0
    %2614 = vmatpush1.msra.mxu0 0.0
    %2615 = vmatprep.subr.mxu0 0.0
    %2616 = vmatpush1.msra.mxu0 0.0
    %2617 = vmatprep.subr.mxu0 0.0
    %2618 = vmatpush1.msra.mxu0 0.0
    %2619 = vmatprep.subr.mxu0 0.0
    %2620 = vmatpush1.msra.mxu0 0.0
    %2621 = vmatprep.subr.mxu0 0.0
    %2622 = vmatpush1.msra.mxu0 0.0
    %2623 = vmatprep.subr.mxu0 0.0
    %2624 = vmatpush1.msra.mxu0 0.0
    %2625 = vmatprep.subr.mxu0 0.0
    %2626 = vmatpush1.msra.mxu0 0.0
    %2627 = vmatprep.subr.mxu0 0.0
    %2628 = vmatpush1.msra.mxu0 0.0
    %2629 = vmatprep.subr.mxu0 0.0
    %2630 = vmatpush1.msra.mxu0 0.0
    %2631 = vmatprep.mubr.f32.mxu0 0.0
    %2632 = vmatmul.mubr.f32.gmra.mrb[0].mxu0 %v2565
    %v2633 = vpop.f32.mrb[0].mxu0
    %v2634 = vadd.f32 %v907, %v2633
    %v2635 = vpop.f32.mrb[0].mxu0
    %2636 = vdwg.mxu0
    %2638 = vrot.lane.b32.xlu0 %v2459, 32
    %v2639 = vpop.permute.xlu0 %2638
    %v2640 = vsel %vm710, %v2639, 0
    %2642 = vmatprep.subr.mxu0 0.0
    %2643 = vmatpush1.msra.mxu0 %v800
    %2644 = vmatprep.subr.mxu0 0.0
    %2645 = vmatpush1.msra.mxu0 %v801
    %2646 = vmatprep.subr.mxu0 0.0
    %2647 = vmatpush1.msra.mxu0 %v802
    %2648 = vmatprep.subr.mxu0 0.0
    %2649 = vmatpush1.msra.mxu0 %v803
    %2650 = vmatprep.subr.mxu0 0.0
    %2651 = vmatpush1.msra.mxu0 0.0
    %2652 = vmatprep.subr.mxu0 0.0
    %2653 = vmatpush1.msra.mxu0 0.0
    %2654 = vmatprep.subr.mxu0 0.0
    %2655 = vmatpush1.msra.mxu0 0.0
    %2656 = vmatprep.subr.mxu0 0.0
    %2657 = vmatpush1.msra.mxu0 0.0
    %2658 = vmatprep.subr.mxu0 0.0
    %2659 = vmatpush1.msra.mxu0 0.0
    %2660 = vmatprep.subr.mxu0 0.0
    %2661 = vmatpush1.msra.mxu0 0.0
    %2662 = vmatprep.subr.mxu0 0.0
    %2663 = vmatpush1.msra.mxu0 0.0
    %2664 = vmatprep.subr.mxu0 0.0
    %2665 = vmatpush1.msra.mxu0 0.0
    %2666 = vmatprep.subr.mxu0 0.0
    %2667 = vmatpush1.msra.mxu0 0.0
    %2668 = vmatprep.subr.mxu0 0.0
    %2669 = vmatpush1.msra.mxu0 0.0
    %2670 = vmatprep.subr.mxu0 0.0
    %2671 = vmatpush1.msra.mxu0 0.0
    %2672 = vmatprep.subr.mxu0 0.0
    %2673 = vmatpush1.msra.mxu0 0.0
    %2674 = vmatprep.subr.mxu0 0.0
    %2675 = vmatpush1.msra.mxu0 0.0
    %2676 = vmatprep.subr.mxu0 0.0
    %2677 = vmatpush1.msra.mxu0 0.0
    %2678 = vmatprep.subr.mxu0 0.0
    %2679 = vmatpush1.msra.mxu0 0.0
    %2680 = vmatprep.subr.mxu0 0.0
    %2681 = vmatpush1.msra.mxu0 0.0
    %2682 = vmatprep.subr.mxu0 0.0
    %2683 = vmatpush1.msra.mxu0 0.0
    %2684 = vmatprep.subr.mxu0 0.0
    %2685 = vmatpush1.msra.mxu0 0.0
    %2686 = vmatprep.subr.mxu0 0.0
    %2687 = vmatpush1.msra.mxu0 0.0
    %2688 = vmatprep.subr.mxu0 0.0
    %2689 = vmatpush1.msra.mxu0 0.0
    %2690 = vmatprep.subr.mxu0 0.0
    %2691 = vmatpush1.msra.mxu0 0.0
    %2692 = vmatprep.subr.mxu0 0.0
    %2693 = vmatpush1.msra.mxu0 0.0
    %2694 = vmatprep.subr.mxu0 0.0
    %2695 = vmatpush1.msra.mxu0 0.0
    %2696 = vmatprep.subr.mxu0 0.0
    %2697 = vmatpush1.msra.mxu0 0.0
    %2698 = vmatprep.subr.mxu0 0.0
    %2699 = vmatpush1.msra.mxu0 0.0
    %2700 = vmatprep.subr.mxu0 0.0
    %2701 = vmatpush1.msra.mxu0 0.0
    %2702 = vmatprep.subr.mxu0 0.0
    %2703 = vmatpush1.msra.mxu0 0.0
    %2704 = vmatprep.subr.mxu0 0.0
    %2705 = vmatpush1.msra.mxu0 0.0
    %2706 = vmatprep.mubr.f32.mxu0 0.0
    %2707 = vmatmul.mubr.f32.gmra.mrb[0].mxu0 %v2640
    %v2708 = vpop.f32.mrb[0].mxu0
    %v2709 = vadd.f32 0.0, %v2708
    %v2710 = vpop.f32.mrb[0].mxu0
    %2711 = vdwg.mxu0
    %v2712 = vadd.f32 %v2634, %v2709
    %v2713 = vxor.u32 %v2712, 2147483648
    %v2714 = vmul.f32 %v2713, 1.442695
    %v2715 = vpow.pop %v2714
    %v2716 = vadd.f32 %v2715, 1.0
    %v2717 = vrcp.pop %v2716
    %v2718 = vmul.f32 1.0, %v2717
    %v2719 = vtanh.pop %v2712
    %v2720 = vmul.f32 %v2718, %v2453
    %2722 = vrot.lane.b32.xlu0 %v2719, 64
    %v2723 = vpop.permute.xlu0 %2722
    %v2725 = vmul.f32 %v2718, %v2723
    %2727 = vrot.lane.b32.xlu0 %v2725, 32
    %v2728 = vpop.permute.xlu0 %2727
    %v2730 = vadd.f32 %v2720, %v2728
    %v2731 = vtanh.pop %v2730
    %2733 = vrot.lane.b32.xlu0 %v2731, 64
    %v2734 = vpop.permute.xlu0 %2733
    %v2736 = vmul.f32 %v2718, %v2734
    %2737 = vmatprep.subr.mxu0 0.0
    %2738 = vmatpush1.msra.mxu0 %v792
    %2739 = vmatprep.subr.mxu0 0.0
    %2740 = vmatpush1.msra.mxu0 %v793
    %2741 = vmatprep.subr.mxu0 0.0
    %2742 = vmatpush1.msra.mxu0 %v794
    %2743 = vmatprep.subr.mxu0 0.0
    %2744 = vmatpush1.msra.mxu0 %v795
    %2745 = vmatprep.subr.mxu0 0.0
    %2746 = vmatpush1.msra.mxu0 0.0
    %2747 = vmatprep.subr.mxu0 0.0
    %2748 = vmatpush1.msra.mxu0 0.0
    %2749 = vmatprep.subr.mxu0 0.0
    %2750 = vmatpush1.msra.mxu0 0.0
    %2751 = vmatprep.subr.mxu0 0.0
    %2752 = vmatpush1.msra.mxu0 0.0
    %2753 = vmatprep.subr.mxu0 0.0
    %2754 = vmatpush1.msra.mxu0 0.0
    %2755 = vmatprep.subr.mxu0 0.0
    %2756 = vmatpush1.msra.mxu0 0.0
    %2757 = vmatprep.subr.mxu0 0.0
    %2758 = vmatpush1.msra.mxu0 0.0
    %2759 = vmatprep.subr.mxu0 0.0
    %2760 = vmatpush1.msra.mxu0 0.0
    %2761 = vmatprep.subr.mxu0 0.0
    %2762 = vmatpush1.msra.mxu0 0.0
    %2763 = vmatprep.subr.mxu0 0.0
    %2764 = vmatpush1.msra.mxu0 0.0
    %2765 = vmatprep.subr.mxu0 0.0
    %2766 = vmatpush1.msra.mxu0 0.0
    %2767 = vmatprep.subr.mxu0 0.0
    %2768 = vmatpush1.msra.mxu0 0.0
    %2769 = vmatprep.subr.mxu0 0.0
    %2770 = vmatpush1.msra.mxu0 0.0
    %2771 = vmatprep.subr.mxu0 0.0
    %2772 = vmatpush1.msra.mxu0 0.0
    %2773 = vmatprep.subr.mxu0 0.0
    %2774 = vmatpush1.msra.mxu0 0.0
    %2775 = vmatprep.subr.mxu0 0.0
    %2776 = vmatpush1.msra.mxu0 0.0
    %2777 = vmatprep.subr.mxu0 0.0
    %2778 = vmatpush1.msra.mxu0 0.0
    %2779 = vmatprep.subr.mxu0 0.0
    %2780 = vmatpush1.msra.mxu0 0.0
    %2781 = vmatprep.subr.mxu0 0.0
    %2782 = vmatpush1.msra.mxu0 0.0
    %2783 = vmatprep.subr.mxu0 0.0
    %2784 = vmatpush1.msra.mxu0 0.0
    %2785 = vmatprep.subr.mxu0 0.0
    %2786 = vmatpush1.msra.mxu0 0.0
    %2787 = vmatprep.subr.mxu0 0.0
    %2788 = vmatpush1.msra.mxu0 0.0
    %2789 = vmatprep.subr.mxu0 0.0
    %2790 = vmatpush1.msra.mxu0 0.0
    %2791 = vmatprep.subr.mxu0 0.0
    %2792 = vmatpush1.msra.mxu0 0.0
    %2793 = vmatprep.subr.mxu0 0.0
    %2794 = vmatpush1.msra.mxu0 0.0
    %2795 = vmatprep.subr.mxu0 0.0
    %2796 = vmatpush1.msra.mxu0 0.0
    %2797 = vmatprep.subr.mxu0 0.0
    %2798 = vmatpush1.msra.mxu0 0.0
    %2799 = vmatprep.subr.mxu0 0.0
    %2800 = vmatpush1.msra.mxu0 0.0
    %2801 = vmatprep.mubr.f32.mxu0 0.0
    %2802 = vmatmul.mubr.f32.gmra.mrb[0].mxu0 %v2565
    %v2803 = vpop.f32.mrb[0].mxu0
    %v2804 = vadd.f32 0.0, %v2803
    %v2805 = vpop.f32.mrb[0].mxu0
    %2806 = vdwg.mxu0
    %v2808 = vrot.slane %v2804, 2
    %v2810 = vadd.f32 %v789, %v2808
    %v2811 = vxor.u32 %v2810, 2147483648
    %v2812 = vmul.f32 %v2811, 1.442695
    %v2813 = vpow.pop %v2812
    %v2814 = vadd.f32 %v2813, 1.0
    %v2815 = vrcp.pop %v2814
    %v2816 = vmul.f32 1.0, %v2815
    %v2817 = vtanh.pop %v2810
    %v2819 = vrot.slane %v2554, 6
    %v2821 = vmul.f32 %v2816, %v2819
    %2823 = vrot.lane.b32.xlu0 %v2817, 64
    %v2824 = vpop.permute.xlu0 %2823
    %v2826 = vmul.f32 %v2816, %v2824
    %2828 = vrot.lane.b32.xlu0 %v2826, 32
    %v2829 = vpop.permute.xlu0 %2828
    %v2831 = vadd.f32 %v2821, %v2829
    %v2832 = vtanh.pop %v2831
    %2834 = vrot.lane.b32.xlu0 %v2832, 64
    %v2835 = vpop.permute.xlu0 %2834
    %v2837 = vmul.f32 %v2816, %v2835
    %v2839 = vrot.slane %v2837, 6
    %2840 = vrot.lane.b32.xlu0 %v2839, 32
    %v2841 = vpop.permute.xlu0 %2840
    %v2842 = vsel %vm710, %v2841, 0
    %2844 = vmatprep.subr.mxu0 0.0
    %2845 = vmatpush1.msra.mxu0 %v796
    %2846 = vmatprep.subr.mxu0 0.0
    %2847 = vmatpush1.msra.mxu0 %v797
    %2848 = vmatprep.subr.mxu0 0.0
    %2849 = vmatpush1.msra.mxu0 %v798
    %2850 = vmatprep.subr.mxu0 0.0
    %2851 = vmatpush1.msra.mxu0 %v799
    %2852 = vmatprep.subr.mxu0 0.0
    %2853 = vmatpush1.msra.mxu0 0.0
    %2854 = vmatprep.subr.mxu0 0.0
    %2855 = vmatpush1.msra.mxu0 0.0
    %2856 = vmatprep.subr.mxu0 0.0
    %2857 = vmatpush1.msra.mxu0 0.0
    %2858 = vmatprep.subr.mxu0 0.0
    %2859 = vmatpush1.msra.mxu0 0.0
    %2860 = vmatprep.subr.mxu0 0.0
    %2861 = vmatpush1.msra.mxu0 0.0
    %2862 = vmatprep.subr.mxu0 0.0
    %2863 = vmatpush1.msra.mxu0 0.0
    %2864 = vmatprep.subr.mxu0 0.0
    %2865 = vmatpush1.msra.mxu0 0.0
    %2866 = vmatprep.subr.mxu0 0.0
    %2867 = vmatpush1.msra.mxu0 0.0
    %2868 = vmatprep.subr.mxu0 0.0
    %2869 = vmatpush1.msra.mxu0 0.0
    %2870 = vmatprep.subr.mxu0 0.0
    %2871 = vmatpush1.msra.mxu0 0.0
    %2872 = vmatprep.subr.mxu0 0.0
    %2873 = vmatpush1.msra.mxu0 0.0
    %2874 = vmatprep.subr.mxu0 0.0
    %2875 = vmatpush1.msra.mxu0 0.0
    %2876 = vmatprep.subr.mxu0 0.0
    %2877 = vmatpush1.msra.mxu0 0.0
    %2878 = vmatprep.subr.mxu0 0.0
    %2879 = vmatpush1.msra.mxu0 0.0
    %2880 = vmatprep.subr.mxu0 0.0
    %2881 = vmatpush1.msra.mxu0 0.0
    %2882 = vmatprep.subr.mxu0 0.0
    %2883 = vmatpush1.msra.mxu0 0.0
    %2884 = vmatprep.subr.mxu0 0.0
    %2885 = vmatpush1.msra.mxu0 0.0
    %2886 = vmatprep.subr.mxu0 0.0
    %2887 = vmatpush1.msra.mxu0 0.0
    %2888 = vmatprep.subr.mxu0 0.0
    %2889 = vmatpush1.msra.mxu0 0.0
    %2890 = vmatprep.subr.mxu0 0.0
    %2891 = vmatpush1.msra.mxu0 0.0
    %2892 = vmatprep.subr.mxu0 0.0
    %2893 = vmatpush1.msra.mxu0 0.0
    %2894 = vmatprep.subr.mxu0 0.0
    %2895 = vmatpush1.msra.mxu0 0.0
    %2896 = vmatprep.subr.mxu0 0.0
    %2897 = vmatpush1.msra.mxu0 0.0
    %2898 = vmatprep.subr.mxu0 0.0
    %2899 = vmatpush1.msra.mxu0 0.0
    %2900 = vmatprep.subr.mxu0 0.0
    %2901 = vmatpush1.msra.mxu0 0.0
    %2902 = vmatprep.subr.mxu0 0.0
    %2903 = vmatpush1.msra.mxu0 0.0
    %2904 = vmatprep.subr.mxu0 0.0
    %2905 = vmatpush1.msra.mxu0 0.0
    %2906 = vmatprep.subr.mxu0 0.0
    %2907 = vmatpush1.msra.mxu0 0.0
    %2908 = vmatprep.mubr.f32.mxu0 0.0
    %2909 = vmatmul.mubr.f32.gmra.mrb[0].mxu0 %v2842
    %v2910 = vpop.f32.mrb[0].mxu0
    %v2911 = vadd.f32 %v907, %v2910
    %v2912 = vpop.f32.mrb[0].mxu0
    %2913 = vdwg.mxu0
    %2915 = vrot.lane.b32.xlu0 %v2736, 32
    %v2916 = vpop.permute.xlu0 %2915
    %v2917 = vsel %vm710, %v2916, 0
    %2919 = vmatprep.subr.mxu0 0.0
    %2920 = vmatpush1.msra.mxu0 %v800
    %2921 = vmatprep.subr.mxu0 0.0
    %2922 = vmatpush1.msra.mxu0 %v801
    %2923 = vmatprep.subr.mxu0 0.0
    %2924 = vmatpush1.msra.mxu0 %v802
    %2925 = vmatprep.subr.mxu0 0.0
    %2926 = vmatpush1.msra.mxu0 %v803
    %2927 = vmatprep.subr.mxu0 0.0
    %2928 = vmatpush1.msra.mxu0 0.0
    %2929 = vmatprep.subr.mxu0 0.0
    %2930 = vmatpush1.msra.mxu0 0.0
    %2931 = vmatprep.subr.mxu0 0.0
    %2932 = vmatpush1.msra.mxu0 0.0
    %2933 = vmatprep.subr.mxu0 0.0
    %2934 = vmatpush1.msra.mxu0 0.0
    %2935 = vmatprep.subr.mxu0 0.0
    %2936 = vmatpush1.msra.mxu0 0.0
    %2937 = vmatprep.subr.mxu0 0.0
    %2938 = vmatpush1.msra.mxu0 0.0
    %2939 = vmatprep.subr.mxu0 0.0
    %2940 = vmatpush1.msra.mxu0 0.0
    %2941 = vmatprep.subr.mxu0 0.0
    %2942 = vmatpush1.msra.mxu0 0.0
    %2943 = vmatprep.subr.mxu0 0.0
    %2944 = vmatpush1.msra.mxu0 0.0
    %2945 = vmatprep.subr.mxu0 0.0
    %2946 = vmatpush1.msra.mxu0 0.0
    %2947 = vmatprep.subr.mxu0 0.0
    %2948 = vmatpush1.msra.mxu0 0.0
    %2949 = vmatprep.subr.mxu0 0.0
    %2950 = vmatpush1.msra.mxu0 0.0
    %2951 = vmatprep.subr.mxu0 0.0
    %2952 = vmatpush1.msra.mxu0 0.0
    %2953 = vmatprep.subr.mxu0 0.0
    %2954 = vmatpush1.msra.mxu0 0.0
    %2955 = vmatprep.subr.mxu0 0.0
    %2956 = vmatpush1.msra.mxu0 0.0
    %2957 = vmatprep.subr.mxu0 0.0
    %2958 = vmatpush1.msra.mxu0 0.0
    %2959 = vmatprep.subr.mxu0 0.0
    %2960 = vmatpush1.msra.mxu0 0.0
    %2961 = vmatprep.subr.mxu0 0.0
    %2962 = vmatpush1.msra.mxu0 0.0
    %2963 = vmatprep.subr.mxu0 0.0
    %2964 = vmatpush1.msra.mxu0 0.0
    %2965 = vmatprep.subr.mxu0 0.0
    %2966 = vmatpush1.msra.mxu0 0.0
    %2967 = vmatprep.subr.mxu0 0.0
    %2968 = vmatpush1.msra.mxu0 0.0
    %2969 = vmatprep.subr.mxu0 0.0
    %2970 = vmatpush1.msra.mxu0 0.0
    %2971 = vmatprep.subr.mxu0 0.0
    %2972 = vmatpush1.msra.mxu0 0.0
    %2973 = vmatprep.subr.mxu0 0.0
    %2974 = vmatpush1.msra.mxu0 0.0
    %2975 = vmatprep.subr.mxu0 0.0
    %2976 = vmatpush1.msra.mxu0 0.0
    %2977 = vmatprep.subr.mxu0 0.0
    %2978 = vmatpush1.msra.mxu0 0.0
    %2979 = vmatprep.subr.mxu0 0.0
    %2980 = vmatpush1.msra.mxu0 0.0
    %2981 = vmatprep.subr.mxu0 0.0
    %2982 = vmatpush1.msra.mxu0 0.0
    %2983 = vmatprep.mubr.f32.mxu0 0.0
    %2984 = vmatmul.mubr.f32.gmra.mrb[0].mxu0 %v2917
    %v2985 = vpop.f32.mrb[0].mxu0
    %v2986 = vadd.f32 0.0, %v2985
    %v2987 = vpop.f32.mrb[0].mxu0
    %2988 = vdwg.mxu0
    %v2989 = vadd.f32 %v2911, %v2986
    %v2990 = vxor.u32 %v2989, 2147483648
    %v2991 = vmul.f32 %v2990, 1.442695
    %v2992 = vpow.pop %v2991
    %v2993 = vadd.f32 %v2992, 1.0
    %v2994 = vrcp.pop %v2993
    %v2995 = vmul.f32 1.0, %v2994
    %v2996 = vtanh.pop %v2989
    %v2997 = vmul.f32 %v2995, %v2730
    %2999 = vrot.lane.b32.xlu0 %v2996, 64
    %v3000 = vpop.permute.xlu0 %2999
    %v3002 = vmul.f32 %v2995, %v3000
    %3004 = vrot.lane.b32.xlu0 %v3002, 32
    %v3005 = vpop.permute.xlu0 %3004
    %v3007 = vadd.f32 %v2997, %v3005
    %v3008 = vtanh.pop %v3007
    %3010 = vrot.lane.b32.xlu0 %v3008, 64
    %v3011 = vpop.permute.xlu0 %3010
    %v3013 = vmul.f32 %v2995, %v3011
    %v3014 = vrot.slane %v1355, 7
    %v3016 = vrot.slane %v1632, 6
    %v3018 = vrot.slane %v1909, 5
    %v3020 = vrot.slane %v2182, 4
    %v3022 = vrot.slane %v2459, 3
    %v3024 = vrot.slane %v2736, 2
    %v3027 = vrot.slane %v3013, 1
    %v3029 = vrot.slane %v1078, 1
    %v3031 = vrot.slane %v1632, 7
    %v3033 = vrot.slane %v1909, 6
    %v3035 = vrot.slane %v2182, 5
    %v3037 = vrot.slane %v2459, 4
    %v3039 = vrot.slane %v2736, 3
    %v3041 = vrot.slane %v3013, 2
    %vm3043 = vcmask 1040384
    %v3044 = vsel %vm3043, %v1078, %v3014
    %vm3045 = vcmask 1041408
    %v3046 = vsel %vm3045, %v3044, %v3016
    %vm3047 = vcmask 1042432
    %v3048 = vsel %vm3047, %v3046, %v3018
    %vm3049 = vcmask 1043456
    %v3050 = vsel %vm3049, %v3048, %v3020
    %vm3051 = vcmask 1044480
    %v3052 = vsel %vm3051, %v3050, %v3022
    %vm3053 = vcmask 1045504
    %v3054 = vsel %vm3053, %v3052, %v3024
    %vm3055 = vcmask 1046528
    %v3056 = vsel %vm3055, %v3054, %v3027
    %v3057 = vsel %vm3043, %v3029, %v1355
    %v3058 = vsel %vm3045, %v3057, %v3031
    %v3059 = vsel %vm3047, %v3058, %v3033
    %v3060 = vsel %vm3049, %v3059, %v3035
    %v3061 = vsel %vm3051, %v3060, %v3037
    %v3062 = vsel %vm3053, %v3061, %v3039
    %v3063 = vsel %vm3055, %v3062, %v3041
    %v3064 = vld [vmem:[%s11] sm:$0xff]
    %v3065 = vld [vmem:[%s11 + $0x8] sm:$0xff]
    %v3066 = vld [vmem:[%s11 + $0x10] sm:$0xff]
    %v3067 = vld [vmem:[%s11 + $0x18] sm:$0xff]
    %v3068 = vld [vmem:[%s12] sm:$0x1]
    %v3070 = vlaneseq
    %v3071 = vshrl.u32 %v3070, 7
    %v3072 = vsub.s32 0, %v3071
    %v3073 = vrot.slane %v3068, %v3072
    %3077 = vrot.lane.b32.xlu0 %v3056, 32
    %v3078 = vpop.permute.xlu0 %3077
    %3079 = vrot.lane.b32.xlu0 %v3063, 32
    %v3080 = vpop.permute.xlu0 %3079
    %v3081 = vsel %vm710, %v3078, 0
    %v3083 = vsel %vm710, %v3080, 0
    %3085 = vmatprep.subr.mxu0 0.0
    %3086 = vmatpush1.msra.mxu0 %v3064
    %3087 = vmatprep.subr.mxu0 0.0
    %3088 = vmatpush1.msra.mxu0 %v3065
    %3089 = vmatprep.subr.mxu0 0.0
    %3090 = vmatpush1.msra.mxu0 %v3066
    %3091 = vmatprep.subr.mxu0 0.0
    %3092 = vmatpush1.msra.mxu0 %v3067
    %3093 = vmatprep.subr.mxu0 0.0
    %3094 = vmatpush1.msra.mxu0 0.0
    %3095 = vmatprep.subr.mxu0 0.0
    %3096 = vmatpush1.msra.mxu0 0.0
    %3097 = vmatprep.subr.mxu0 0.0
    %3098 = vmatpush1.msra.mxu0 0.0
    %3099 = vmatprep.subr.mxu0 0.0
    %3100 = vmatpush1.msra.mxu0 0.0
    %3101 = vmatprep.subr.mxu0 0.0
    %3102 = vmatpush1.msra.mxu0 0.0
    %3103 = vmatprep.subr.mxu0 0.0
    %3104 = vmatpush1.msra.mxu0 0.0
    %3105 = vmatprep.subr.mxu0 0.0
    %3106 = vmatpush1.msra.mxu0 0.0
    %3107 = vmatprep.subr.mxu0 0.0
    %3108 = vmatpush1.msra.mxu0 0.0
    %3109 = vmatprep.subr.mxu0 0.0
    %3110 = vmatpush1.msra.mxu0 0.0
    %3111 = vmatprep.subr.mxu0 0.0
    %3112 = vmatpush1.msra.mxu0 0.0
    %3113 = vmatprep.subr.mxu0 0.0
    %3114 = vmatpush1.msra.mxu0 0.0
    %3115 = vmatprep.subr.mxu0 0.0
    %3116 = vmatpush1.msra.mxu0 0.0
    %3117 = vmatprep.subr.mxu0 0.0
    %3118 = vmatpush1.msra.mxu0 0.0
    %3119 = vmatprep.subr.mxu0 0.0
    %3120 = vmatpush1.msra.mxu0 0.0
    %3121 = vmatprep.subr.mxu0 0.0
    %3122 = vmatpush1.msra.mxu0 0.0
    %3123 = vmatprep.subr.mxu0 0.0
    %3124 = vmatpush1.msra.mxu0 0.0
    %3125 = vmatprep.subr.mxu0 0.0
    %3126 = vmatpush1.msra.mxu0 0.0
    %3127 = vmatprep.subr.mxu0 0.0
    %3128 = vmatpush1.msra.mxu0 0.0
    %3129 = vmatprep.subr.mxu0 0.0
    %3130 = vmatpush1.msra.mxu0 0.0
    %3131 = vmatprep.subr.mxu0 0.0
    %3132 = vmatpush1.msra.mxu0 0.0
    %3133 = vmatprep.subr.mxu0 0.0
    %3134 = vmatpush1.msra.mxu0 0.0
    %3135 = vmatprep.subr.mxu0 0.0
    %3136 = vmatpush1.msra.mxu0 0.0
    %3137 = vmatprep.subr.mxu0 0.0
    %3138 = vmatpush1.msra.mxu0 0.0
    %3139 = vmatprep.subr.mxu0 0.0
    %3140 = vmatpush1.msra.mxu0 0.0
    %3141 = vmatprep.subr.mxu0 0.0
    %3142 = vmatpush1.msra.mxu0 0.0
    %3143 = vmatprep.subr.mxu0 0.0
    %3144 = vmatpush1.msra.mxu0 0.0
    %3145 = vmatprep.subr.mxu0 0.0
    %3146 = vmatpush1.msra.mxu0 0.0
    %3147 = vmatprep.subr.mxu0 0.0
    %3148 = vmatpush1.msra.mxu0 0.0
    %3149 = vmatprep.mubr.f32.mxu0 0.0
    %3150 = vmatmul.mubr.f32.gmra.mrb[0].mxu0 %v3081
    %v3151 = vpop.f32.mrb[0].mxu0
    %v3152 = vadd.f32 %v3073, %v3151
    %v3153 = vpop.f32.mrb[0].mxu0
    %3154 = vmatprep.mubr.f32.mxu0 0.0
    %3155 = vmatmul.mubr.f32.gmra.mrb[0].mxu0 %v3083
    %v3156 = vpop.f32.mrb[0].mxu0
    %v3157 = vadd.f32 %v3073, %v3156
    %v3158 = vpop.f32.mrb[0].mxu0
    %3159 = vdwg.mxu0
    %v3160 = vld [vmem:[%s13] sm:$0xff]
    %v3161 = vld [vmem:[%s13 + $0x8] sm:$0xff]
    %v3162 = vld [vmem:[%s13 + $0x10] sm:$0xff]
    %v3163 = vld [vmem:[%s13 + $0x18] sm:$0xff]
    %v3164 = vld [vmem:[%s15] sm:$0x3]
    %3166 = vrot.lane.b32.xlu0 %v3152, 96
    %v3167 = vpop.permute.xlu0 %3166
    %vm3168 = vcmask 64512
    %v3169 = vsel %vm3168, %v3152, 0
    %v3171 = vsel %vm3168, %v3167, 0
    %3173 = vmatprep.subr.mxu0 0.0
    %3174 = vmatpush1.xpose.msra.mxu0 %v3171
    %3175 = vmatprep.subr.mxu0 0.0
    %3176 = vmatpush1.xpose.msra.mxu0 0.0
    %3177 = vmatprep.subr.mxu0 0.0
    %3178 = vmatpush1.xpose.msra.mxu0 0.0
    %3179 = vmatprep.subr.mxu0 0.0
    %3180 = vmatpush1.xpose.msra.mxu0 0.0
    %3181 = vmatprep.subr.mxu0 0.0
    %3182 = vmatpush1.xpose.msra.mxu0 0.0
    %3183 = vmatprep.subr.mxu0 0.0
    %3184 = vmatpush1.xpose.msra.mxu0 0.0
    %3185 = vmatprep.subr.mxu0 0.0
    %3186 = vmatpush1.xpose.msra.mxu0 0.0
    %3187 = vmatprep.subr.mxu0 0.0
    %3188 = vmatpush1.xpose.msra.mxu0 0.0
    %3189 = vmatprep.subr.mxu0 0.0
    %3190 = vmatpush1.xpose.msra.mxu0 0.0
    %3191 = vmatprep.subr.mxu0 0.0
    %3192 = vmatpush1.xpose.msra.mxu0 0.0
    %3193 = vmatprep.subr.mxu0 0.0
    %3194 = vmatpush1.xpose.msra.mxu0 0.0
    %3195 = vmatprep.subr.mxu0 0.0
    %3196 = vmatpush1.xpose.msra.mxu0 0.0
    %3197 = vmatprep.subr.mxu0 0.0
    %3198 = vmatpush1.xpose.msra.mxu0 0.0
    %3199 = vmatprep.subr.mxu0 0.0
    %3200 = vmatpush1.xpose.msra.mxu0 0.0
    %3201 = vmatprep.subr.mxu0 0.0
    %3202 = vmatpush1.xpose.msra.mxu0 0.0
    %3203 = vmatprep.subr.mxu0 0.0
    %3204 = vmatpush1.xpose.msra.mxu0 0.0
    %3205 = vmatprep.subr.mxu0 0.0
    %3206 = vmatpush1.xpose.msra.mxu0 0.0
    %3207 = vmatprep.subr.mxu0 0.0
    %3208 = vmatpush1.xpose.msra.mxu0 0.0
    %3209 = vmatprep.subr.mxu0 0.0
    %3210 = vmatpush1.xpose.msra.mxu0 0.0
    %3211 = vmatprep.subr.mxu0 0.0
    %3212 = vmatpush1.xpose.msra.mxu0 0.0
    %3213 = vmatprep.subr.mxu0 0.0
    %3214 = vmatpush1.xpose.msra.mxu0 0.0
    %3215 = vmatprep.subr.mxu0 0.0
    %3216 = vmatpush1.xpose.msra.mxu0 0.0
    %3217 = vmatprep.subr.mxu0 0.0
    %3218 = vmatpush1.xpose.msra.mxu0 0.0
    %3219 = vmatprep.subr.mxu0 0.0
    %3220 = vmatpush1.xpose.msra.mxu0 0.0
    %3221 = vmatprep.subr.mxu0 0.0
    %3222 = vmatpush1.xpose.msra.mxu0 0.0
    %3223 = vmatprep.subr.mxu0 0.0
    %3224 = vmatpush1.xpose.msra.mxu0 0.0
    %3225 = vmatprep.subr.mxu0 0.0
    %3226 = vmatpush1.xpose.msra.mxu0 0.0
    %3227 = vmatprep.subr.mxu0 0.0
    %3228 = vmatpush1.xpose.msra.mxu0 0.0
    %3229 = vmatprep.subr.mxu0 0.0
    %3230 = vmatpush1.xpose.msra.mxu0 0.0
    %3231 = vmatprep.subr.mxu0 0.0
    %3232 = vmatpush1.xpose.msra.mxu0 0.0
    %3233 = vmatprep.subr.mxu0 0.0
    %3234 = vmatpush1.xpose.msra.mxu0 0.0
    %3235 = vmatprep.subr.mxu0 0.0
    %3236 = vmatpush1.xpose.msra.mxu0 0.0
    %3237 = vmatprep.mubr.f32.mxu0 0.0
    %3238 = vmatmul.mubr.f32.gmra.mrb[0].mxu0 %v3169
    %v3239 = vpop.f32.mrb[0].mxu0
    %v3240 = vadd.f32 0.0, %v3239
    %v3241 = vpop.f32.mrb[0].mxu0
    %3242 = vdwg.mxu0
    %v3243 = vmul.f32 %v3240, 0.35355338
    %v3244 = vlaneseq
    %v3245 = vshrl.u32 %v3244, 7
    %v3246 = vsub.s32 0, %v3245
    %v3247 = vrot.slane %v3164, %v3246
    %v3248 = vadd.f32 %v3243, %v3247
    %v3249 = vsel %vm3168, %v3248, -inf
    %3250 = vmax.xlane.f32.xlu0 %v3249
    %v3251 = vpop.xlane.xlu0 %3250
    %v3252 = vsub.f32 %v3248, %v3251
    %v3253 = vmul.f32 %v3252, 1.442695
    %v3254 = vpow.pop %v3253
    %v3255 = vsel %vm3168, %v3254, 0.0
    %3256 = vadd.xlane.f32.xlu0 %v3255
    %v3257 = vpop.xlane.xlu0 %3256
    %v3258 = vrcp.pop %v3257
    %v3259 = vmul.f32 %v3254, %v3258
    %v3260 = vadd.f32 %v3259, 0.0
    %3261 = vrot.lane.b32.xlu0 %v3152, 64
    %v3262 = vpop.permute.xlu0 %3261
    %v3265 = vsel %vm3168, %v3259, 0
    %3267 = vmatprep.subr.mxu0 0.0
    %3268 = vmatpush1.msra.mxu0 %v3262
    %3269 = vmatprep.subr.mxu0 0.0
    %3270 = vmatpush1.msra.mxu0 0.0
    %3271 = vmatprep.subr.mxu0 0.0
    %3272 = vmatpush1.msra.mxu0 0.0
    %3273 = vmatprep.subr.mxu0 0.0
    %3274 = vmatpush1.msra.mxu0 0.0
    %3275 = vmatprep.subr.mxu0 0.0
    %3276 = vmatpush1.msra.mxu0 0.0
    %3277 = vmatprep.subr.mxu0 0.0
    %3278 = vmatpush1.msra.mxu0 0.0
    %3279 = vmatprep.subr.mxu0 0.0
    %3280 = vmatpush1.msra.mxu0 0.0
    %3281 = vmatprep.subr.mxu0 0.0
    %3282 = vmatpush1.msra.mxu0 0.0
    %3283 = vmatprep.subr.mxu0 0.0
    %3284 = vmatpush1.msra.mxu0 0.0
    %3285 = vmatprep.subr.mxu0 0.0
    %3286 = vmatpush1.msra.mxu0 0.0
    %3287 = vmatprep.subr.mxu0 0.0
    %3288 = vmatpush1.msra.mxu0 0.0
    %3289 = vmatprep.subr.mxu0 0.0
    %3290 = vmatpush1.msra.mxu0 0.0
    %3291 = vmatprep.subr.mxu0 0.0
    %3292 = vmatpush1.msra.mxu0 0.0
    %3293 = vmatprep.subr.mxu0 0.0
    %3294 = vmatpush1.msra.mxu0 0.0
    %3295 = vmatprep.subr.mxu0 0.0
    %3296 = vmatpush1.msra.mxu0 0.0
    %3297 = vmatprep.subr.mxu0 0.0
    %3298 = vmatpush1.msra.mxu0 0.0
    %3299 = vmatprep.subr.mxu0 0.0
    %3300 = vmatpush1.msra.mxu0 0.0
    %3301 = vmatprep.subr.mxu0 0.0
    %3302 = vmatpush1.msra.mxu0 0.0
    %3303 = vmatprep.subr.mxu0 0.0
    %3304 = vmatpush1.msra.mxu0 0.0
    %3305 = vmatprep.subr.mxu0 0.0
    %3306 = vmatpush1.msra.mxu0 0.0
    %3307 = vmatprep.subr.mxu0 0.0
    %3308 = vmatpush1.msra.mxu0 0.0
    %3309 = vmatprep.subr.mxu0 0.0
    %3310 = vmatpush1.msra.mxu0 0.0
    %3311 = vmatprep.subr.mxu0 0.0
    %3312 = vmatpush1.msra.mxu0 0.0
    %3313 = vmatprep.subr.mxu0 0.0
    %3314 = vmatpush1.msra.mxu0 0.0
    %3315 = vmatprep.subr.mxu0 0.0
    %3316 = vmatpush1.msra.mxu0 0.0
    %3317 = vmatprep.subr.mxu0 0.0
    %3318 = vmatpush1.msra.mxu0 0.0
    %3319 = vmatprep.subr.mxu0 0.0
    %3320 = vmatpush1.msra.mxu0 0.0
    %3321 = vmatprep.subr.mxu0 0.0
    %3322 = vmatpush1.msra.mxu0 0.0
    %3323 = vmatprep.subr.mxu0 0.0
    %3324 = vmatpush1.msra.mxu0 0.0
    %3325 = vmatprep.subr.mxu0 0.0
    %3326 = vmatpush1.msra.mxu0 0.0
    %3327 = vmatprep.subr.mxu0 0.0
    %3328 = vmatpush1.msra.mxu0 0.0
    %3329 = vmatprep.subr.mxu0 0.0
    %3330 = vmatpush1.msra.mxu0 0.0
    %3331 = vmatprep.mubr.f32.mxu0 0.0
    %3332 = vmatmul.mubr.f32.gmra.mrb[0].mxu0 %v3265
    %v3333 = vpop.f32.mrb[0].mxu0
    %v3334 = vadd.f32 0.0, %v3333
    %v3335 = vpop.f32.mrb[0].mxu0
    %3336 = vdwg.mxu0
    %v3337 = vsel %vm3168, %v3334, 0.0
    %v3338 = vrot.slane %v3337, 4
    %v3339 = vadd.f32 %v3337, %v3338
    %v3340 = vrot.slane %v3339, 2
    %v3341 = vadd.f32 %v3339, %v3340
    %v3342 = vrot.slane %v3341, 1
    %v3343 = vadd.f32 %v3341, %v3342
    %3344 = vrot.lane.b32.xlu0 %v3152, 120
    %v3345 = vpop.permute.xlu0 %3344
    %3346 = vrot.lane.b32.xlu0 %v3152, 88
    %v3347 = vpop.permute.xlu0 %3346
    %v3348 = vsel %vm3168, %v3345, 0
    %v3350 = vsel %vm3168, %v3347, 0
    %3352 = vmatprep.subr.mxu0 0.0
    %3353 = vmatpush1.xpose.msra.mxu0 %v3350
    %3354 = vmatprep.subr.mxu0 0.0
    %3355 = vmatpush1.xpose.msra.mxu0 0.0
    %3356 = vmatprep.subr.mxu0 0.0
    %3357 = vmatpush1.xpose.msra.mxu0 0.0
    %3358 = vmatprep.subr.mxu0 0.0
    %3359 = vmatpush1.xpose.msra.mxu0 0.0
    %3360 = vmatprep.subr.mxu0 0.0
    %3361 = vmatpush1.xpose.msra.mxu0 0.0
    %3362 = vmatprep.subr.mxu0 0.0
    %3363 = vmatpush1.xpose.msra.mxu0 0.0
    %3364 = vmatprep.subr.mxu0 0.0
    %3365 = vmatpush1.xpose.msra.mxu0 0.0
    %3366 = vmatprep.subr.mxu0 0.0
    %3367 = vmatpush1.xpose.msra.mxu0 0.0
    %3368 = vmatprep.subr.mxu0 0.0
    %3369 = vmatpush1.xpose.msra.mxu0 0.0
    %3370 = vmatprep.subr.mxu0 0.0
    %3371 = vmatpush1.xpose.msra.mxu0 0.0
    %3372 = vmatprep.subr.mxu0 0.0
    %3373 = vmatpush1.xpose.msra.mxu0 0.0
    %3374 = vmatprep.subr.mxu0 0.0
    %3375 = vmatpush1.xpose.msra.mxu0 0.0
    %3376 = vmatprep.subr.mxu0 0.0
    %3377 = vmatpush1.xpose.msra.mxu0 0.0
    %3378 = vmatprep.subr.mxu0 0.0
    %3379 = vmatpush1.xpose.msra.mxu0 0.0
    %3380 = vmatprep.subr.mxu0 0.0
    %3381 = vmatpush1.xpose.msra.mxu0 0.0
    %3382 = vmatprep.subr.mxu0 0.0
    %3383 = vmatpush1.xpose.msra.mxu0 0.0
    %3384 = vmatprep.subr.mxu0 0.0
    %3385 = vmatpush1.xpose.msra.mxu0 0.0
    %3386 = vmatprep.subr.mxu0 0.0
    %3387 = vmatpush1.xpose.msra.mxu0 0.0
    %3388 = vmatprep.subr.mxu0 0.0
    %3389 = vmatpush1.xpose.msra.mxu0 0.0
    %3390 = vmatprep.subr.mxu0 0.0
    %3391 = vmatpush1.xpose.msra.mxu0 0.0
    %3392 = vmatprep.subr.mxu0 0.0
    %3393 = vmatpush1.xpose.msra.mxu0 0.0
    %3394 = vmatprep.subr.mxu0 0.0
    %3395 = vmatpush1.xpose.msra.mxu0 0.0
    %3396 = vmatprep.subr.mxu0 0.0
    %3397 = vmatpush1.xpose.msra.mxu0 0.0
    %3398 = vmatprep.subr.mxu0 0.0
    %3399 = vmatpush1.xpose.msra.mxu0 0.0
    %3400 = vmatprep.subr.mxu0 0.0
    %3401 = vmatpush1.xpose.msra.mxu0 0.0
    %3402 = vmatprep.subr.mxu0 0.0
    %3403 = vmatpush1.xpose.msra.mxu0 0.0
    %3404 = vmatprep.subr.mxu0 0.0
    %3405 = vmatpush1.xpose.msra.mxu0 0.0
    %3406 = vmatprep.subr.mxu0 0.0
    %3407 = vmatpush1.xpose.msra.mxu0 0.0
    %3408 = vmatprep.subr.mxu0 0.0
    %3409 = vmatpush1.xpose.msra.mxu0 0.0
    %3410 = vmatprep.subr.mxu0 0.0
    %3411 = vmatpush1.xpose.msra.mxu0 0.0
    %3412 = vmatprep.subr.mxu0 0.0
    %3413 = vmatpush1.xpose.msra.mxu0 0.0
    %3414 = vmatprep.subr.mxu0 0.0
    %3415 = vmatpush1.xpose.msra.mxu0 0.0
    %3416 = vmatprep.mubr.f32.mxu0 0.0
    %3417 = vmatmul.mubr.f32.gmra.mrb[0].mxu0 %v3348
    %v3418 = vpop.f32.mrb[0].mxu0
    %v3419 = vadd.f32 0.0, %v3418
    %v3420 = vpop.f32.mrb[0].mxu0
    %3421 = vdwg.mxu0
    %v3422 = vmul.f32 %v3419, 0.35355338
    %v3423 = vadd.f32 %v3422, %v3247
    %v3424 = vsel %vm3168, %v3423, -inf
    %3425 = vmax.xlane.f32.xlu0 %v3424
    %v3426 = vpop.xlane.xlu0 %3425
    %v3427 = vsub.f32 %v3423, %v3426
    %v3428 = vmul.f32 %v3427, 1.442695
    %v3429 = vpow.pop %v3428
    %v3430 = vsel %vm3168, %v3429, 0.0
    %3431 = vadd.xlane.f32.xlu0 %v3430
    %v3432 = vpop.xlane.xlu0 %3431
    %v3433 = vrcp.pop %v3432
    %v3434 = vmul.f32 %v3429, %v3433
    %v3435 = vadd.f32 %v3260, %v3434
    %3436 = vrot.lane.b32.xlu0 %v3152, 56
    %v3437 = vpop.permute.xlu0 %3436
    %v3440 = vsel %vm3168, %v3434, 0
    %3442 = vmatprep.subr.mxu0 0.0
    %3443 = vmatpush1.msra.mxu0 %v3437
    %3444 = vmatprep.subr.mxu0 0.0
    %3445 = vmatpush1.msra.mxu0 0.0
    %3446 = vmatprep.subr.mxu0 0.0
    %3447 = vmatpush1.msra.mxu0 0.0
    %3448 = vmatprep.subr.mxu0 0.0
    %3449 = vmatpush1.msra.mxu0 0.0
    %3450 = vmatprep.subr.mxu0 0.0
    %3451 = vmatpush1.msra.mxu0 0.0
    %3452 = vmatprep.subr.mxu0 0.0
    %3453 = vmatpush1.msra.mxu0 0.0
    %3454 = vmatprep.subr.mxu0 0.0
    %3455 = vmatpush1.msra.mxu0 0.0
    %3456 = vmatprep.subr.mxu0 0.0
    %3457 = vmatpush1.msra.mxu0 0.0
    %3458 = vmatprep.subr.mxu0 0.0
    %3459 = vmatpush1.msra.mxu0 0.0
    %3460 = vmatprep.subr.mxu0 0.0
    %3461 = vmatpush1.msra.mxu0 0.0
    %3462 = vmatprep.subr.mxu0 0.0
    %3463 = vmatpush1.msra.mxu0 0.0
    %3464 = vmatprep.subr.mxu0 0.0
    %3465 = vmatpush1.msra.mxu0 0.0
    %3466 = vmatprep.subr.mxu0 0.0
    %3467 = vmatpush1.msra.mxu0 0.0
    %3468 = vmatprep.subr.mxu0 0.0
    %3469 = vmatpush1.msra.mxu0 0.0
    %3470 = vmatprep.subr.mxu0 0.0
    %3471 = vmatpush1.msra.mxu0 0.0
    %3472 = vmatprep.subr.mxu0 0.0
    %3473 = vmatpush1.msra.mxu0 0.0
    %3474 = vmatprep.subr.mxu0 0.0
    %3475 = vmatpush1.msra.mxu0 0.0
    %3476 = vmatprep.subr.mxu0 0.0
    %3477 = vmatpush1.msra.mxu0 0.0
    %3478 = vmatprep.subr.mxu0 0.0
    %3479 = vmatpush1.msra.mxu0 0.0
    %3480 = vmatprep.subr.mxu0 0.0
    %3481 = vmatpush1.msra.mxu0 0.0
    %3482 = vmatprep.subr.mxu0 0.0
    %3483 = vmatpush1.msra.mxu0 0.0
    %3484 = vmatprep.subr.mxu0 0.0
    %3485 = vmatpush1.msra.mxu0 0.0
    %3486 = vmatprep.subr.mxu0 0.0
    %3487 = vmatpush1.msra.mxu0 0.0
    %3488 = vmatprep.subr.mxu0 0.0
    %3489 = vmatpush1.msra.mxu0 0.0
    %3490 = vmatprep.subr.mxu0 0.0
    %3491 = vmatpush1.msra.mxu0 0.0
    %3492 = vmatprep.subr.mxu0 0.0
    %3493 = vmatpush1.msra.mxu0 0.0
    %3494 = vmatprep.subr.mxu0 0.0
    %3495 = vmatpush1.msra.mxu0 0.0
    %3496 = vmatprep.subr.mxu0 0.0
    %3497 = vmatpush1.msra.mxu0 0.0
    %3498 = vmatprep.subr.mxu0 0.0
    %3499 = vmatpush1.msra.mxu0 0.0
    %3500 = vmatprep.subr.mxu0 0.0
    %3501 = vmatpush1.msra.mxu0 0.0
    %3502 = vmatprep.subr.mxu0 0.0
    %3503 = vmatpush1.msra.mxu0 0.0
    %3504 = vmatprep.subr.mxu0 0.0
    %3505 = vmatpush1.msra.mxu0 0.0
    %3506 = vmatprep.mubr.f32.mxu0 0.0
    %3507 = vmatmul.mubr.f32.gmra.mrb[0].mxu0 %v3440
    %v3508 = vpop.f32.mrb[0].mxu0
    %v3509 = vadd.f32 0.0, %v3508
    %v3510 = vpop.f32.mrb[0].mxu0
    %3511 = vdwg.mxu0
    %v3512 = vsel %vm3168, %v3509, 0.0
    %v3513 = vrot.slane %v3512, 4
    %v3514 = vadd.f32 %v3512, %v3513
    %v3515 = vrot.slane %v3514, 2
    %v3516 = vadd.f32 %v3514, %v3515
    %v3517 = vrot.slane %v3516, 1
    %v3518 = vadd.f32 %v3516, %v3517
    %3519 = vrot.lane.b32.xlu0 %v3152, 112
    %v3520 = vpop.permute.xlu0 %3519
    %3521 = vrot.lane.b32.xlu0 %v3152, 80
    %v3522 = vpop.permute.xlu0 %3521
    %v3523 = vsel %vm3168, %v3520, 0
    %v3525 = vsel %vm3168, %v3522, 0
    %3527 = vmatprep.subr.mxu0 0.0
    %3528 = vmatpush1.xpose.msra.mxu0 %v3525
    %3529 = vmatprep.subr.mxu0 0.0
    %3530 = vmatpush1.xpose.msra.mxu0 0.0
    %3531 = vmatprep.subr.mxu0 0.0
    %3532 = vmatpush1.xpose.msra.mxu0 0.0
    %3533 = vmatprep.subr.mxu0 0.0
    %3534 = vmatpush1.xpose.msra.mxu0 0.0
    %3535 = vmatprep.subr.mxu0 0.0
    %3536 = vmatpush1.xpose.msra.mxu0 0.0
    %3537 = vmatprep.subr.mxu0 0.0
    %3538 = vmatpush1.xpose.msra.mxu0 0.0
    %3539 = vmatprep.subr.mxu0 0.0
    %3540 = vmatpush1.xpose.msra.mxu0 0.0
    %3541 = vmatprep.subr.mxu0 0.0
    %3542 = vmatpush1.xpose.msra.mxu0 0.0
    %3543 = vmatprep.subr.mxu0 0.0
    %3544 = vmatpush1.xpose.msra.mxu0 0.0
    %3545 = vmatprep.subr.mxu0 0.0
    %3546 = vmatpush1.xpose.msra.mxu0 0.0
    %3547 = vmatprep.subr.mxu0 0.0
    %3548 = vmatpush1.xpose.msra.mxu0 0.0
    %3549 = vmatprep.subr.mxu0 0.0
    %3550 = vmatpush1.xpose.msra.mxu0 0.0
    %3551 = vmatprep.subr.mxu0 0.0
    %3552 = vmatpush1.xpose.msra.mxu0 0.0
    %3553 = vmatprep.subr.mxu0 0.0
    %3554 = vmatpush1.xpose.msra.mxu0 0.0
    %3555 = vmatprep.subr.mxu0 0.0
    %3556 = vmatpush1.xpose.msra.mxu0 0.0
    %3557 = vmatprep.subr.mxu0 0.0
    %3558 = vmatpush1.xpose.msra.mxu0 0.0
    %3559 = vmatprep.subr.mxu0 0.0
    %3560 = vmatpush1.xpose.msra.mxu0 0.0
    %3561 = vmatprep.subr.mxu0 0.0
    %3562 = vmatpush1.xpose.msra.mxu0 0.0
    %3563 = vmatprep.subr.mxu0 0.0
    %3564 = vmatpush1.xpose.msra.mxu0 0.0
    %3565 = vmatprep.subr.mxu0 0.0
    %3566 = vmatpush1.xpose.msra.mxu0 0.0
    %3567 = vmatprep.subr.mxu0 0.0
    %3568 = vmatpush1.xpose.msra.mxu0 0.0
    %3569 = vmatprep.subr.mxu0 0.0
    %3570 = vmatpush1.xpose.msra.mxu0 0.0
    %3571 = vmatprep.subr.mxu0 0.0
    %3572 = vmatpush1.xpose.msra.mxu0 0.0
    %3573 = vmatprep.subr.mxu0 0.0
    %3574 = vmatpush1.xpose.msra.mxu0 0.0
    %3575 = vmatprep.subr.mxu0 0.0
    %3576 = vmatpush1.xpose.msra.mxu0 0.0
    %3577 = vmatprep.subr.mxu0 0.0
    %3578 = vmatpush1.xpose.msra.mxu0 0.0
    %3579 = vmatprep.subr.mxu0 0.0
    %3580 = vmatpush1.xpose.msra.mxu0 0.0
    %3581 = vmatprep.subr.mxu0 0.0
    %3582 = vmatpush1.xpose.msra.mxu0 0.0
    %3583 = vmatprep.subr.mxu0 0.0
    %3584 = vmatpush1.xpose.msra.mxu0 0.0
    %3585 = vmatprep.subr.mxu0 0.0
    %3586 = vmatpush1.xpose.msra.mxu0 0.0
    %3587 = vmatprep.subr.mxu0 0.0
    %3588 = vmatpush1.xpose.msra.mxu0 0.0
    %3589 = vmatprep.subr.mxu0 0.0
    %3590 = vmatpush1.xpose.msra.mxu0 0.0
    %3591 = vmatprep.mubr.f32.mxu0 0.0
    %3592 = vmatmul.mubr.f32.gmra.mrb[0].mxu0 %v3523
    %v3593 = vpop.f32.mrb[0].mxu0
    %v3594 = vadd.f32 0.0, %v3593
    %v3595 = vpop.f32.mrb[0].mxu0
    %3596 = vdwg.mxu0
    %v3597 = vmul.f32 %v3594, 0.35355338
    %v3598 = vadd.f32 %v3597, %v3247
    %v3599 = vsel %vm3168, %v3598, -inf
    %3600 = vmax.xlane.f32.xlu0 %v3599
    %v3601 = vpop.xlane.xlu0 %3600
    %v3602 = vsub.f32 %v3598, %v3601
    %v3603 = vmul.f32 %v3602, 1.442695
    %v3604 = vpow.pop %v3603
    %v3605 = vsel %vm3168, %v3604, 0.0
    %3606 = vadd.xlane.f32.xlu0 %v3605
    %v3607 = vpop.xlane.xlu0 %3606
    %v3608 = vrcp.pop %v3607
    %v3609 = vmul.f32 %v3604, %v3608
    %v3610 = vadd.f32 %v3435, %v3609
    %3611 = vrot.lane.b32.xlu0 %v3152, 48
    %v3612 = vpop.permute.xlu0 %3611
    %v3615 = vsel %vm3168, %v3609, 0
    %3617 = vmatprep.subr.mxu0 0.0
    %3618 = vmatpush1.msra.mxu0 %v3612
    %3619 = vmatprep.subr.mxu0 0.0
    %3620 = vmatpush1.msra.mxu0 0.0
    %3621 = vmatprep.subr.mxu0 0.0
    %3622 = vmatpush1.msra.mxu0 0.0
    %3623 = vmatprep.subr.mxu0 0.0
    %3624 = vmatpush1.msra.mxu0 0.0
    %3625 = vmatprep.subr.mxu0 0.0
    %3626 = vmatpush1.msra.mxu0 0.0
    %3627 = vmatprep.subr.mxu0 0.0
    %3628 = vmatpush1.msra.mxu0 0.0
    %3629 = vmatprep.subr.mxu0 0.0
    %3630 = vmatpush1.msra.mxu0 0.0
    %3631 = vmatprep.subr.mxu0 0.0
    %3632 = vmatpush1.msra.mxu0 0.0
    %3633 = vmatprep.subr.mxu0 0.0
    %3634 = vmatpush1.msra.mxu0 0.0
    %3635 = vmatprep.subr.mxu0 0.0
    %3636 = vmatpush1.msra.mxu0 0.0
    %3637 = vmatprep.subr.mxu0 0.0
    %3638 = vmatpush1.msra.mxu0 0.0
    %3639 = vmatprep.subr.mxu0 0.0
    %3640 = vmatpush1.msra.mxu0 0.0
    %3641 = vmatprep.subr.mxu0 0.0
    %3642 = vmatpush1.msra.mxu0 0.0
    %3643 = vmatprep.subr.mxu0 0.0
    %3644 = vmatpush1.msra.mxu0 0.0
    %3645 = vmatprep.subr.mxu0 0.0
    %3646 = vmatpush1.msra.mxu0 0.0
    %3647 = vmatprep.subr.mxu0 0.0
    %3648 = vmatpush1.msra.mxu0 0.0
    %3649 = vmatprep.subr.mxu0 0.0
    %3650 = vmatpush1.msra.mxu0 0.0
    %3651 = vmatprep.subr.mxu0 0.0
    %3652 = vmatpush1.msra.mxu0 0.0
    %3653 = vmatprep.subr.mxu0 0.0
    %3654 = vmatpush1.msra.mxu0 0.0
    %3655 = vmatprep.subr.mxu0 0.0
    %3656 = vmatpush1.msra.mxu0 0.0
    %3657 = vmatprep.subr.mxu0 0.0
    %3658 = vmatpush1.msra.mxu0 0.0
    %3659 = vmatprep.subr.mxu0 0.0
    %3660 = vmatpush1.msra.mxu0 0.0
    %3661 = vmatprep.subr.mxu0 0.0
    %3662 = vmatpush1.msra.mxu0 0.0
    %3663 = vmatprep.subr.mxu0 0.0
    %3664 = vmatpush1.msra.mxu0 0.0
    %3665 = vmatprep.subr.mxu0 0.0
    %3666 = vmatpush1.msra.mxu0 0.0
    %3667 = vmatprep.subr.mxu0 0.0
    %3668 = vmatpush1.msra.mxu0 0.0
    %3669 = vmatprep.subr.mxu0 0.0
    %3670 = vmatpush1.msra.mxu0 0.0
    %3671 = vmatprep.subr.mxu0 0.0
    %3672 = vmatpush1.msra.mxu0 0.0
    %3673 = vmatprep.subr.mxu0 0.0
    %3674 = vmatpush1.msra.mxu0 0.0
    %3675 = vmatprep.subr.mxu0 0.0
    %3676 = vmatpush1.msra.mxu0 0.0
    %3677 = vmatprep.subr.mxu0 0.0
    %3678 = vmatpush1.msra.mxu0 0.0
    %3679 = vmatprep.subr.mxu0 0.0
    %3680 = vmatpush1.msra.mxu0 0.0
    %3681 = vmatprep.mubr.f32.mxu0 0.0
    %3682 = vmatmul.mubr.f32.gmra.mrb[0].mxu0 %v3615
    %v3683 = vpop.f32.mrb[0].mxu0
    %v3684 = vadd.f32 0.0, %v3683
    %v3685 = vpop.f32.mrb[0].mxu0
    %3686 = vdwg.mxu0
    %v3687 = vsel %vm3168, %v3684, 0.0
    %v3688 = vrot.slane %v3687, 4
    %v3689 = vadd.f32 %v3687, %v3688
    %v3690 = vrot.slane %v3689, 2
    %v3691 = vadd.f32 %v3689, %v3690
    %v3692 = vrot.slane %v3691, 1
    %v3693 = vadd.f32 %v3691, %v3692
    %3694 = vrot.lane.b32.xlu0 %v3152, 104
    %v3695 = vpop.permute.xlu0 %3694
    %3696 = vrot.lane.b32.xlu0 %v3152, 72
    %v3697 = vpop.permute.xlu0 %3696
    %v3698 = vsel %vm3168, %v3695, 0
    %v3700 = vsel %vm3168, %v3697, 0
    %3702 = vmatprep.subr.mxu0 0.0
    %3703 = vmatpush1.xpose.msra.mxu0 %v3700
    %3704 = vmatprep.subr.mxu0 0.0
    %3705 = vmatpush1.xpose.msra.mxu0 0.0
    %3706 = vmatprep.subr.mxu0 0.0
    %3707 = vmatpush1.xpose.msra.mxu0 0.0
    %3708 = vmatprep.subr.mxu0 0.0
    %3709 = vmatpush1.xpose.msra.mxu0 0.0
    %3710 = vmatprep.subr.mxu0 0.0
    %3711 = vmatpush1.xpose.msra.mxu0 0.0
    %3712 = vmatprep.subr.mxu0 0.0
    %3713 = vmatpush1.xpose.msra.mxu0 0.0
    %3714 = vmatprep.subr.mxu0 0.0
    %3715 = vmatpush1.xpose.msra.mxu0 0.0
    %3716 = vmatprep.subr.mxu0 0.0
    %3717 = vmatpush1.xpose.msra.mxu0 0.0
    %3718 = vmatprep.subr.mxu0 0.0
    %3719 = vmatpush1.xpose.msra.mxu0 0.0
    %3720 = vmatprep.subr.mxu0 0.0
    %3721 = vmatpush1.xpose.msra.mxu0 0.0
    %3722 = vmatprep.subr.mxu0 0.0
    %3723 = vmatpush1.xpose.msra.mxu0 0.0
    %3724 = vmatprep.subr.mxu0 0.0
    %3725 = vmatpush1.xpose.msra.mxu0 0.0
    %3726 = vmatprep.subr.mxu0 0.0
    %3727 = vmatpush1.xpose.msra.mxu0 0.0
    %3728 = vmatprep.subr.mxu0 0.0
    %3729 = vmatpush1.xpose.msra.mxu0 0.0
    %3730 = vmatprep.subr.mxu0 0.0
    %3731 = vmatpush1.xpose.msra.mxu0 0.0
    %3732 = vmatprep.subr.mxu0 0.0
    %3733 = vmatpush1.xpose.msra.mxu0 0.0
    %3734 = vmatprep.subr.mxu0 0.0
    %3735 = vmatpush1.xpose.msra.mxu0 0.0
    %3736 = vmatprep.subr.mxu0 0.0
    %3737 = vmatpush1.xpose.msra.mxu0 0.0
    %3738 = vmatprep.subr.mxu0 0.0
    %3739 = vmatpush1.xpose.msra.mxu0 0.0
    %3740 = vmatprep.subr.mxu0 0.0
    %3741 = vmatpush1.xpose.msra.mxu0 0.0
    %3742 = vmatprep.subr.mxu0 0.0
    %3743 = vmatpush1.xpose.msra.mxu0 0.0
    %3744 = vmatprep.subr.mxu0 0.0
    %3745 = vmatpush1.xpose.msra.mxu0 0.0
    %3746 = vmatprep.subr.mxu0 0.0
    %3747 = vmatpush1.xpose.msra.mxu0 0.0
    %3748 = vmatprep.subr.mxu0 0.0
    %3749 = vmatpush1.xpose.msra.mxu0 0.0
    %3750 = vmatprep.subr.mxu0 0.0
    %3751 = vmatpush1.xpose.msra.mxu0 0.0
    %3752 = vmatprep.subr.mxu0 0.0
    %3753 = vmatpush1.xpose.msra.mxu0 0.0
    %3754 = vmatprep.subr.mxu0 0.0
    %3755 = vmatpush1.xpose.msra.mxu0 0.0
    %3756 = vmatprep.subr.mxu0 0.0
    %3757 = vmatpush1.xpose.msra.mxu0 0.0
    %3758 = vmatprep.subr.mxu0 0.0
    %3759 = vmatpush1.xpose.msra.mxu0 0.0
    %3760 = vmatprep.subr.mxu0 0.0
    %3761 = vmatpush1.xpose.msra.mxu0 0.0
    %3762 = vmatprep.subr.mxu0 0.0
    %3763 = vmatpush1.xpose.msra.mxu0 0.0
    %3764 = vmatprep.subr.mxu0 0.0
    %3765 = vmatpush1.xpose.msra.mxu0 0.0
    %3766 = vmatprep.mubr.f32.mxu0 0.0
    %3767 = vmatmul.mubr.f32.gmra.mrb[0].mxu0 %v3698
    %v3768 = vpop.f32.mrb[0].mxu0
    %v3769 = vadd.f32 0.0, %v3768
    %v3770 = vpop.f32.mrb[0].mxu0
    %3771 = vdwg.mxu0
    %v3772 = vmul.f32 %v3769, 0.35355338
    %v3773 = vadd.f32 %v3772, %v3247
    %v3774 = vsel %vm3168, %v3773, -inf
    %3775 = vmax.xlane.f32.xlu0 %v3774
    %v3776 = vpop.xlane.xlu0 %3775
    %v3777 = vsub.f32 %v3773, %v3776
    %v3778 = vmul.f32 %v3777, 1.442695
    %v3779 = vpow.pop %v3778
    %v3780 = vsel %vm3168, %v3779, 0.0
    %3781 = vadd.xlane.f32.xlu0 %v3780
    %v3782 = vpop.xlane.xlu0 %3781
    %v3783 = vrcp.pop %v3782
    %v3784 = vmul.f32 %v3779, %v3783
    %v3785 = vadd.f32 %v3610, %v3784
    %3786 = vrot.lane.b32.xlu0 %v3152, 40
    %v3787 = vpop.permute.xlu0 %3786
    %v3790 = vsel %vm3168, %v3784, 0
    %3792 = vmatprep.subr.mxu0 0.0
    %3793 = vmatpush1.msra.mxu0 %v3787
    %3794 = vmatprep.subr.mxu0 0.0
    %3795 = vmatpush1.msra.mxu0 0.0
    %3796 = vmatprep.subr.mxu0 0.0
    %3797 = vmatpush1.msra.mxu0 0.0
    %3798 = vmatprep.subr.mxu0 0.0
    %3799 = vmatpush1.msra.mxu0 0.0
    %3800 = vmatprep.subr.mxu0 0.0
    %3801 = vmatpush1.msra.mxu0 0.0
    %3802 = vmatprep.subr.mxu0 0.0
    %3803 = vmatpush1.msra.mxu0 0.0
    %3804 = vmatprep.subr.mxu0 0.0
    %3805 = vmatpush1.msra.mxu0 0.0
    %3806 = vmatprep.subr.mxu0 0.0
    %3807 = vmatpush1.msra.mxu0 0.0
    %3808 = vmatprep.subr.mxu0 0.0
    %3809 = vmatpush1.msra.mxu0 0.0
    %3810 = vmatprep.subr.mxu0 0.0
    %3811 = vmatpush1.msra.mxu0 0.0
    %3812 = vmatprep.subr.mxu0 0.0
    %3813 = vmatpush1.msra.mxu0 0.0
    %3814 = vmatprep.subr.mxu0 0.0
    %3815 = vmatpush1.msra.mxu0 0.0
    %3816 = vmatprep.subr.mxu0 0.0
    %3817 = vmatpush1.msra.mxu0 0.0
    %3818 = vmatprep.subr.mxu0 0.0
    %3819 = vmatpush1.msra.mxu0 0.0
    %3820 = vmatprep.subr.mxu0 0.0
    %3821 = vmatpush1.msra.mxu0 0.0
    %3822 = vmatprep.subr.mxu0 0.0
    %3823 = vmatpush1.msra.mxu0 0.0
    %3824 = vmatprep.subr.mxu0 0.0
    %3825 = vmatpush1.msra.mxu0 0.0
    %3826 = vmatprep.subr.mxu0 0.0
    %3827 = vmatpush1.msra.mxu0 0.0
    %3828 = vmatprep.subr.mxu0 0.0
    %3829 = vmatpush1.msra.mxu0 0.0
    %3830 = vmatprep.subr.mxu0 0.0
    %3831 = vmatpush1.msra.mxu0 0.0
    %3832 = vmatprep.subr.mxu0 0.0
    %3833 = vmatpush1.msra.mxu0 0.0
    %3834 = vmatprep.subr.mxu0 0.0
    %3835 = vmatpush1.msra.mxu0 0.0
    %3836 = vmatprep.subr.mxu0 0.0
    %3837 = vmatpush1.msra.mxu0 0.0
    %3838 = vmatprep.subr.mxu0 0.0
    %3839 = vmatpush1.msra.mxu0 0.0
    %3840 = vmatprep.subr.mxu0 0.0
    %3841 = vmatpush1.msra.mxu0 0.0
    %3842 = vmatprep.subr.mxu0 0.0
    %3843 = vmatpush1.msra.mxu0 0.0
    %3844 = vmatprep.subr.mxu0 0.0
    %3845 = vmatpush1.msra.mxu0 0.0
    %3846 = vmatprep.subr.mxu0 0.0
    %3847 = vmatpush1.msra.mxu0 0.0
    %3848 = vmatprep.subr.mxu0 0.0
    %3849 = vmatpush1.msra.mxu0 0.0
    %3850 = vmatprep.subr.mxu0 0.0
    %3851 = vmatpush1.msra.mxu0 0.0
    %3852 = vmatprep.subr.mxu0 0.0
    %3853 = vmatpush1.msra.mxu0 0.0
    %3854 = vmatprep.subr.mxu0 0.0
    %3855 = vmatpush1.msra.mxu0 0.0
    %3856 = vmatprep.mubr.f32.mxu0 0.0
    %3857 = vmatmul.mubr.f32.gmra.mrb[0].mxu0 %v3790
    %v3858 = vpop.f32.mrb[0].mxu0
    %v3859 = vadd.f32 0.0, %v3858
    %v3860 = vpop.f32.mrb[0].mxu0
    %3861 = vdwg.mxu0
    %v3862 = vsel %vm3168, %v3859, 0.0
    %v3863 = vrot.slane %v3862, 4
    %v3864 = vadd.f32 %v3862, %v3863
    %v3865 = vrot.slane %v3864, 2
    %v3866 = vadd.f32 %v3864, %v3865
    %v3867 = vrot.slane %v3866, 1
    %v3868 = vadd.f32 %v3866, %v3867
    %v3869 = vmul.f32 %v3785, 0.25
    %3870 = vst.msk [vmem:[#allocation4] sm:$0xff] %vm3168, %v3869
    %3872 = vrot.lane.b32.xlu0 %v3518, 8
    %v3873 = vpop.permute.xlu0 %3872
    %3876 = vrot.lane.b32.xlu0 %v3693, 16
    %v3877 = vpop.permute.xlu0 %3876
    %3880 = vrot.lane.b32.xlu0 %v3868, 24
    %v3881 = vpop.permute.xlu0 %3880
    %v3883 = vsel %vm3168, %v3343, %v3873
    %vm3884 = vcmask 130048
    %v3885 = vsel %vm3884, %v3883, %v3877
    %vm3886 = vcmask 195584
    %v3887 = vsel %vm3886, %v3885, %v3881
    %3889 = vrot.lane.b32.xlu0 %v3157, 96
    %v3890 = vpop.permute.xlu0 %3889
    %v3891 = vsel %vm3168, %v3157, 0
    %v3893 = vsel %vm3168, %v3890, 0
    %3895 = vmatprep.subr.mxu0 0.0
    %3896 = vmatpush1.xpose.msra.mxu0 %v3893
    %3897 = vmatprep.subr.mxu0 0.0
    %3898 = vmatpush1.xpose.msra.mxu0 0.0
    %3899 = vmatprep.subr.mxu0 0.0
    %3900 = vmatpush1.xpose.msra.mxu0 0.0
    %3901 = vmatprep.subr.mxu0 0.0
    %3902 = vmatpush1.xpose.msra.mxu0 0.0
    %3903 = vmatprep.subr.mxu0 0.0
    %3904 = vmatpush1.xpose.msra.mxu0 0.0
    %3905 = vmatprep.subr.mxu0 0.0
    %3906 = vmatpush1.xpose.msra.mxu0 0.0
    %3907 = vmatprep.subr.mxu0 0.0
    %3908 = vmatpush1.xpose.msra.mxu0 0.0
    %3909 = vmatprep.subr.mxu0 0.0
    %3910 = vmatpush1.xpose.msra.mxu0 0.0
    %3911 = vmatprep.subr.mxu0 0.0
    %3912 = vmatpush1.xpose.msra.mxu0 0.0
    %3913 = vmatprep.subr.mxu0 0.0
    %3914 = vmatpush1.xpose.msra.mxu0 0.0
    %3915 = vmatprep.subr.mxu0 0.0
    %3916 = vmatpush1.xpose.msra.mxu0 0.0
    %3917 = vmatprep.subr.mxu0 0.0
    %3918 = vmatpush1.xpose.msra.mxu0 0.0
    %3919 = vmatprep.subr.mxu0 0.0
    %3920 = vmatpush1.xpose.msra.mxu0 0.0
    %3921 = vmatprep.subr.mxu0 0.0
    %3922 = vmatpush1.xpose.msra.mxu0 0.0
    %3923 = vmatprep.subr.mxu0 0.0
    %3924 = vmatpush1.xpose.msra.mxu0 0.0
    %3925 = vmatprep.subr.mxu0 0.0
    %3926 = vmatpush1.xpose.msra.mxu0 0.0
    %3927 = vmatprep.subr.mxu0 0.0
    %3928 = vmatpush1.xpose.msra.mxu0 0.0
    %3929 = vmatprep.subr.mxu0 0.0
    %3930 = vmatpush1.xpose.msra.mxu0 0.0
    %3931 = vmatprep.subr.mxu0 0.0
    %3932 = vmatpush1.xpose.msra.mxu0 0.0
    %3933 = vmatprep.subr.mxu0 0.0
    %3934 = vmatpush1.xpose.msra.mxu0 0.0
    %3935 = vmatprep.subr.mxu0 0.0
    %3936 = vmatpush1.xpose.msra.mxu0 0.0
    %3937 = vmatprep.subr.mxu0 0.0
    %3938 = vmatpush1.xpose.msra.mxu0 0.0
    %3939 = vmatprep.subr.mxu0 0.0
    %3940 = vmatpush1.xpose.msra.mxu0 0.0
    %3941 = vmatprep.subr.mxu0 0.0
    %3942 = vmatpush1.xpose.msra.mxu0 0.0
    %3943 = vmatprep.subr.mxu0 0.0
    %3944 = vmatpush1.xpose.msra.mxu0 0.0
    %3945 = vmatprep.subr.mxu0 0.0
    %3946 = vmatpush1.xpose.msra.mxu0 0.0
    %3947 = vmatprep.subr.mxu0 0.0
    %3948 = vmatpush1.xpose.msra.mxu0 0.0
    %3949 = vmatprep.subr.mxu0 0.0
    %3950 = vmatpush1.xpose.msra.mxu0 0.0
    %3951 = vmatprep.subr.mxu0 0.0
    %3952 = vmatpush1.xpose.msra.mxu0 0.0
    %3953 = vmatprep.subr.mxu0 0.0
    %3954 = vmatpush1.xpose.msra.mxu0 0.0
    %3955 = vmatprep.subr.mxu0 0.0
    %3956 = vmatpush1.xpose.msra.mxu0 0.0
    %3957 = vmatprep.subr.mxu0 0.0
    %3958 = vmatpush1.xpose.msra.mxu0 0.0
    %3959 = vmatprep.mubr.f32.mxu0 0.0
    %3960 = vmatmul.mubr.f32.gmra.mrb[0].mxu0 %v3891
    %v3961 = vpop.f32.mrb[0].mxu0
    %v3962 = vadd.f32 0.0, %v3961
    %v3963 = vpop.f32.mrb[0].mxu0
    %3964 = vdwg.mxu0
    %v3965 = vmul.f32 %v3962, 0.35355338
    %v3966 = vlaneseq
    %v3967 = vshrl.u32 %v3966, 7
    %v3968 = vsub.s32 1, %v3967
    %v3969 = vrot.slane %v3164, %v3968
    %v3970 = vadd.f32 %v3965, %v3969
    %v3971 = vsel %vm3168, %v3970, -inf
    %3972 = vmax.xlane.f32.xlu0 %v3971
    %v3973 = vpop.xlane.xlu0 %3972
    %v3974 = vsub.f32 %v3970, %v3973
    %v3975 = vmul.f32 %v3974, 1.442695
    %v3976 = vpow.pop %v3975
    %v3977 = vsel %vm3168, %v3976, 0.0
    %3978 = vadd.xlane.f32.xlu0 %v3977
    %v3979 = vpop.xlane.xlu0 %3978
    %v3980 = vrcp.pop %v3979
    %v3981 = vmul.f32 %v3976, %v3980
    %v3982 = vadd.f32 %v3981, 0.0
    %3983 = vrot.lane.b32.xlu0 %v3157, 64
    %v3984 = vpop.permute.xlu0 %3983
    %v3987 = vsel %vm3168, %v3981, 0
    %3989 = vmatprep.subr.mxu0 0.0
    %3990 = vmatpush1.msra.mxu0 %v3984
    %3991 = vmatprep.subr.mxu0 0.0
    %3992 = vmatpush1.msra.mxu0 0.0
    %3993 = vmatprep.subr.mxu0 0.0
    %3994 = vmatpush1.msra.mxu0 0.0
    %3995 = vmatprep.subr.mxu0 0.0
    %3996 = vmatpush1.msra.mxu0 0.0
    %3997 = vmatprep.subr.mxu0 0.0
    %3998 = vmatpush1.msra.mxu0 0.0
    %3999 = vmatprep.subr.mxu0 0.0
    %4000 = vmatpush1.msra.mxu0 0.0
    %4001 = vmatprep.subr.mxu0 0.0
    %4002 = vmatpush1.msra.mxu0 0.0
    %4003 = vmatprep.subr.mxu0 0.0
    %4004 = vmatpush1.msra.mxu0 0.0
    %4005 = vmatprep.subr.mxu0 0.0
    %4006 = vmatpush1.msra.mxu0 0.0
    %4007 = vmatprep.subr.mxu0 0.0
    %4008 = vmatpush1.msra.mxu0 0.0
    %4009 = vmatprep.subr.mxu0 0.0
    %4010 = vmatpush1.msra.mxu0 0.0
    %4011 = vmatprep.subr.mxu0 0.0
    %4012 = vmatpush1.msra.mxu0 0.0
    %4013 = vmatprep.subr.mxu0 0.0
    %4014 = vmatpush1.msra.mxu0 0.0
    %4015 = vmatprep.subr.mxu0 0.0
    %4016 = vmatpush1.msra.mxu0 0.0
    %4017 = vmatprep.subr.mxu0 0.0
    %4018 = vmatpush1.msra.mxu0 0.0
    %4019 = vmatprep.subr.mxu0 0.0
    %4020 = vmatpush1.msra.mxu0 0.0
    %4021 = vmatprep.subr.mxu0 0.0
    %4022 = vmatpush1.msra.mxu0 0.0
    %4023 = vmatprep.subr.mxu0 0.0
    %4024 = vmatpush1.msra.mxu0 0.0
    %4025 = vmatprep.subr.mxu0 0.0
    %4026 = vmatpush1.msra.mxu0 0.0
    %4027 = vmatprep.subr.mxu0 0.0
    %4028 = vmatpush1.msra.mxu0 0.0
    %4029 = vmatprep.subr.mxu0 0.0
    %4030 = vmatpush1.msra.mxu0 0.0
    %4031 = vmatprep.subr.mxu0 0.0
    %4032 = vmatpush1.msra.mxu0 0.0
    %4033 = vmatprep.subr.mxu0 0.0
    %4034 = vmatpush1.msra.mxu0 0.0
    %4035 = vmatprep.subr.mxu0 0.0
    %4036 = vmatpush1.msra.mxu0 0.0
    %4037 = vmatprep.subr.mxu0 0.0
    %4038 = vmatpush1.msra.mxu0 0.0
    %4039 = vmatprep.subr.mxu0 0.0
    %4040 = vmatpush1.msra.mxu0 0.0
    %4041 = vmatprep.subr.mxu0 0.0
    %4042 = vmatpush1.msra.mxu0 0.0
    %4043 = vmatprep.subr.mxu0 0.0
    %4044 = vmatpush1.msra.mxu0 0.0
    %4045 = vmatprep.subr.mxu0 0.0
    %4046 = vmatpush1.msra.mxu0 0.0
    %4047 = vmatprep.subr.mxu0 0.0
    %4048 = vmatpush1.msra.mxu0 0.0
    %4049 = vmatprep.subr.mxu0 0.0
    %4050 = vmatpush1.msra.mxu0 0.0
    %4051 = vmatprep.subr.mxu0 0.0
    %4052 = vmatpush1.msra.mxu0 0.0
    %4053 = vmatprep.mubr.f32.mxu0 0.0
    %4054 = vmatmul.mubr.f32.gmra.mrb[0].mxu0 %v3987
    %v4055 = vpop.f32.mrb[0].mxu0
    %v4056 = vadd.f32 0.0, %v4055
    %v4057 = vpop.f32.mrb[0].mxu0
    %4058 = vdwg.mxu0
    %v4059 = vsel %vm3168, %v4056, 0.0
    %v4060 = vrot.slane %v4059, 4
    %v4061 = vadd.f32 %v4059, %v4060
    %v4062 = vrot.slane %v4061, 2
    %v4063 = vadd.f32 %v4061, %v4062
    %v4064 = vrot.slane %v4063, 1
    %v4065 = vadd.f32 %v4063, %v4064
    %4066 = vrot.lane.b32.xlu0 %v3157, 120
    %v4067 = vpop.permute.xlu0 %4066
    %4068 = vrot.lane.b32.xlu0 %v3157, 88
    %v4069 = vpop.permute.xlu0 %4068
    %v4070 = vsel %vm3168, %v4067, 0
    %v4072 = vsel %vm3168, %v4069, 0
    %4074 = vmatprep.subr.mxu0 0.0
    %4075 = vmatpush1.xpose.msra.mxu0 %v4072
    %4076 = vmatprep.subr.mxu0 0.0
    %4077 = vmatpush1.xpose.msra.mxu0 0.0
    %4078 = vmatprep.subr.mxu0 0.0
    %4079 = vmatpush1.xpose.msra.mxu0 0.0
    %4080 = vmatprep.subr.mxu0 0.0
    %4081 = vmatpush1.xpose.msra.mxu0 0.0
    %4082 = vmatprep.subr.mxu0 0.0
    %4083 = vmatpush1.xpose.msra.mxu0 0.0
    %4084 = vmatprep.subr.mxu0 0.0
    %4085 = vmatpush1.xpose.msra.mxu0 0.0
    %4086 = vmatprep.subr.mxu0 0.0
    %4087 = vmatpush1.xpose.msra.mxu0 0.0
    %4088 = vmatprep.subr.mxu0 0.0
    %4089 = vmatpush1.xpose.msra.mxu0 0.0
    %4090 = vmatprep.subr.mxu0 0.0
    %4091 = vmatpush1.xpose.msra.mxu0 0.0
    %4092 = vmatprep.subr.mxu0 0.0
    %4093 = vmatpush1.xpose.msra.mxu0 0.0
    %4094 = vmatprep.subr.mxu0 0.0
    %4095 = vmatpush1.xpose.msra.mxu0 0.0
    %4096 = vmatprep.subr.mxu0 0.0
    %4097 = vmatpush1.xpose.msra.mxu0 0.0
    %4098 = vmatprep.subr.mxu0 0.0
    %4099 = vmatpush1.xpose.msra.mxu0 0.0
    %4100 = vmatprep.subr.mxu0 0.0
    %4101 = vmatpush1.xpose.msra.mxu0 0.0
    %4102 = vmatprep.subr.mxu0 0.0
    %4103 = vmatpush1.xpose.msra.mxu0 0.0
    %4104 = vmatprep.subr.mxu0 0.0
    %4105 = vmatpush1.xpose.msra.mxu0 0.0
    %4106 = vmatprep.subr.mxu0 0.0
    %4107 = vmatpush1.xpose.msra.mxu0 0.0
    %4108 = vmatprep.subr.mxu0 0.0
    %4109 = vmatpush1.xpose.msra.mxu0 0.0
    %4110 = vmatprep.subr.mxu0 0.0
    %4111 = vmatpush1.xpose.msra.mxu0 0.0
    %4112 = vmatprep.subr.mxu0 0.0
    %4113 = vmatpush1.xpose.msra.mxu0 0.0
    %4114 = vmatprep.subr.mxu0 0.0
    %4115 = vmatpush1.xpose.msra.mxu0 0.0
    %4116 = vmatprep.subr.mxu0 0.0
    %4117 = vmatpush1.xpose.msra.mxu0 0.0
    %4118 = vmatprep.subr.mxu0 0.0
    %4119 = vmatpush1.xpose.msra.mxu0 0.0
    %4120 = vmatprep.subr.mxu0 0.0
    %4121 = vmatpush1.xpose.msra.mxu0 0.0
    %4122 = vmatprep.subr.mxu0 0.0
    %4123 = vmatpush1.xpose.msra.mxu0 0.0
    %4124 = vmatprep.subr.mxu0 0.0
    %4125 = vmatpush1.xpose.msra.mxu0 0.0
    %4126 = vmatprep.subr.mxu0 0.0
    %4127 = vmatpush1.xpose.msra.mxu0 0.0
    %4128 = vmatprep.subr.mxu0 0.0
    %4129 = vmatpush1.xpose.msra.mxu0 0.0
    %4130 = vmatprep.subr.mxu0 0.0
    %4131 = vmatpush1.xpose.msra.mxu0 0.0
    %4132 = vmatprep.subr.mxu0 0.0
    %4133 = vmatpush1.xpose.msra.mxu0 0.0
    %4134 = vmatprep.subr.mxu0 0.0
    %4135 = vmatpush1.xpose.msra.mxu0 0.0
    %4136 = vmatprep.subr.mxu0 0.0
    %4137 = vmatpush1.xpose.msra.mxu0 0.0
    %4138 = vmatprep.mubr.f32.mxu0 0.0
    %4139 = vmatmul.mubr.f32.gmra.mrb[0].mxu0 %v4070
    %v4140 = vpop.f32.mrb[0].mxu0
    %v4141 = vadd.f32 0.0, %v4140
    %v4142 = vpop.f32.mrb[0].mxu0
    %4143 = vdwg.mxu0
    %v4144 = vmul.f32 %v4141, 0.35355338
    %v4145 = vadd.f32 %v4144, %v3969
    %v4146 = vsel %vm3168, %v4145, -inf
    %4147 = vmax.xlane.f32.xlu0 %v4146
    %v4148 = vpop.xlane.xlu0 %4147
    %v4149 = vsub.f32 %v4145, %v4148
    %v4150 = vmul.f32 %v4149, 1.442695
    %v4151 = vpow.pop %v4150
    %v4152 = vsel %vm3168, %v4151, 0.0
    %4153 = vadd.xlane.f32.xlu0 %v4152
    %v4154 = vpop.xlane.xlu0 %4153
    %v4155 = vrcp.pop %v4154
    %v4156 = vmul.f32 %v4151, %v4155
    %v4157 = vadd.f32 %v3982, %v4156
    %4158 = vrot.lane.b32.xlu0 %v3157, 56
    %v4159 = vpop.permute.xlu0 %4158
    %v4162 = vsel %vm3168, %v4156, 0
    %4164 = vmatprep.subr.mxu0 0.0
    %4165 = vmatpush1.msra.mxu0 %v4159
    %4166 = vmatprep.subr.mxu0 0.0
    %4167 = vmatpush1.msra.mxu0 0.0
    %4168 = vmatprep.subr.mxu0 0.0
    %4169 = vmatpush1.msra.mxu0 0.0
    %4170 = vmatprep.subr.mxu0 0.0
    %4171 = vmatpush1.msra.mxu0 0.0
    %4172 = vmatprep.subr.mxu0 0.0
    %4173 = vmatpush1.msra.mxu0 0.0
    %4174 = vmatprep.subr.mxu0 0.0
    %4175 = vmatpush1.msra.mxu0 0.0
    %4176 = vmatprep.subr.mxu0 0.0
    %4177 = vmatpush1.msra.mxu0 0.0
    %4178 = vmatprep.subr.mxu0 0.0
    %4179 = vmatpush1.msra.mxu0 0.0
    %4180 = vmatprep.subr.mxu0 0.0
    %4181 = vmatpush1.msra.mxu0 0.0
    %4182 = vmatprep.subr.mxu0 0.0
    %4183 = vmatpush1.msra.mxu0 0.0
    %4184 = vmatprep.subr.mxu0 0.0
    %4185 = vmatpush1.msra.mxu0 0.0
    %4186 = vmatprep.subr.mxu0 0.0
    %4187 = vmatpush1.msra.mxu0 0.0
    %4188 = vmatprep.subr.mxu0 0.0
    %4189 = vmatpush1.msra.mxu0 0.0
    %4190 = vmatprep.subr.mxu0 0.0
    %4191 = vmatpush1.msra.mxu0 0.0
    %4192 = vmatprep.subr.mxu0 0.0
    %4193 = vmatpush1.msra.mxu0 0.0
    %4194 = vmatprep.subr.mxu0 0.0
    %4195 = vmatpush1.msra.mxu0 0.0
    %4196 = vmatprep.subr.mxu0 0.0
    %4197 = vmatpush1.msra.mxu0 0.0
    %4198 = vmatprep.subr.mxu0 0.0
    %4199 = vmatpush1.msra.mxu0 0.0
    %4200 = vmatprep.subr.mxu0 0.0
    %4201 = vmatpush1.msra.mxu0 0.0
    %4202 = vmatprep.subr.mxu0 0.0
    %4203 = vmatpush1.msra.mxu0 0.0
    %4204 = vmatprep.subr.mxu0 0.0
    %4205 = vmatpush1.msra.mxu0 0.0
    %4206 = vmatprep.subr.mxu0 0.0
    %4207 = vmatpush1.msra.mxu0 0.0
    %4208 = vmatprep.subr.mxu0 0.0
    %4209 = vmatpush1.msra.mxu0 0.0
    %4210 = vmatprep.subr.mxu0 0.0
    %4211 = vmatpush1.msra.mxu0 0.0
    %4212 = vmatprep.subr.mxu0 0.0
    %4213 = vmatpush1.msra.mxu0 0.0
    %4214 = vmatprep.subr.mxu0 0.0
    %4215 = vmatpush1.msra.mxu0 0.0
    %4216 = vmatprep.subr.mxu0 0.0
    %4217 = vmatpush1.msra.mxu0 0.0
    %4218 = vmatprep.subr.mxu0 0.0
    %4219 = vmatpush1.msra.mxu0 0.0
    %4220 = vmatprep.subr.mxu0 0.0
    %4221 = vmatpush1.msra.mxu0 0.0
    %4222 = vmatprep.subr.mxu0 0.0
    %4223 = vmatpush1.msra.mxu0 0.0
    %4224 = vmatprep.subr.mxu0 0.0
    %4225 = vmatpush1.msra.mxu0 0.0
    %4226 = vmatprep.subr.mxu0 0.0
    %4227 = vmatpush1.msra.mxu0 0.0
    %4228 = vmatprep.mubr.f32.mxu0 0.0
    %4229 = vmatmul.mubr.f32.gmra.mrb[0].mxu0 %v4162
    %v4230 = vpop.f32.mrb[0].mxu0
    %v4231 = vadd.f32 0.0, %v4230
    %v4232 = vpop.f32.mrb[0].mxu0
    %4233 = vdwg.mxu0
    %v4234 = vsel %vm3168, %v4231, 0.0
    %v4235 = vrot.slane %v4234, 4
    %v4236 = vadd.f32 %v4234, %v4235
    %v4237 = vrot.slane %v4236, 2
    %v4238 = vadd.f32 %v4236, %v4237
    %v4239 = vrot.slane %v4238, 1
    %v4240 = vadd.f32 %v4238, %v4239
    %4241 = vrot.lane.b32.xlu0 %v3157, 112
    %v4242 = vpop.permute.xlu0 %4241
    %4243 = vrot.lane.b32.xlu0 %v3157, 80
    %v4244 = vpop.permute.xlu0 %4243
    %v4245 = vsel %vm3168, %v4242, 0
    %v4247 = vsel %vm3168, %v4244, 0
    %4249 = vmatprep.subr.mxu0 0.0
    %4250 = vmatpush1.xpose.msra.mxu0 %v4247
    %4251 = vmatprep.subr.mxu0 0.0
    %4252 = vmatpush1.xpose.msra.mxu0 0.0
    %4253 = vmatprep.subr.mxu0 0.0
    %4254 = vmatpush1.xpose.msra.mxu0 0.0
    %4255 = vmatprep.subr.mxu0 0.0
    %4256 = vmatpush1.xpose.msra.mxu0 0.0
    %4257 = vmatprep.subr.mxu0 0.0
    %4258 = vmatpush1.xpose.msra.mxu0 0.0
    %4259 = vmatprep.subr.mxu0 0.0
    %4260 = vmatpush1.xpose.msra.mxu0 0.0
    %4261 = vmatprep.subr.mxu0 0.0
    %4262 = vmatpush1.xpose.msra.mxu0 0.0
    %4263 = vmatprep.subr.mxu0 0.0
    %4264 = vmatpush1.xpose.msra.mxu0 0.0
    %4265 = vmatprep.subr.mxu0 0.0
    %4266 = vmatpush1.xpose.msra.mxu0 0.0
    %4267 = vmatprep.subr.mxu0 0.0
    %4268 = vmatpush1.xpose.msra.mxu0 0.0
    %4269 = vmatprep.subr.mxu0 0.0
    %4270 = vmatpush1.xpose.msra.mxu0 0.0
    %4271 = vmatprep.subr.mxu0 0.0
    %4272 = vmatpush1.xpose.msra.mxu0 0.0
    %4273 = vmatprep.subr.mxu0 0.0
    %4274 = vmatpush1.xpose.msra.mxu0 0.0
    %4275 = vmatprep.subr.mxu0 0.0
    %4276 = vmatpush1.xpose.msra.mxu0 0.0
    %4277 = vmatprep.subr.mxu0 0.0
    %4278 = vmatpush1.xpose.msra.mxu0 0.0
    %4279 = vmatprep.subr.mxu0 0.0
    %4280 = vmatpush1.xpose.msra.mxu0 0.0
    %4281 = vmatprep.subr.mxu0 0.0
    %4282 = vmatpush1.xpose.msra.mxu0 0.0
    %4283 = vmatprep.subr.mxu0 0.0
    %4284 = vmatpush1.xpose.msra.mxu0 0.0
    %4285 = vmatprep.subr.mxu0 0.0
    %4286 = vmatpush1.xpose.msra.mxu0 0.0
    %4287 = vmatprep.subr.mxu0 0.0
    %4288 = vmatpush1.xpose.msra.mxu0 0.0
    %4289 = vmatprep.subr.mxu0 0.0
    %4290 = vmatpush1.xpose.msra.mxu0 0.0
    %4291 = vmatprep.subr.mxu0 0.0
    %4292 = vmatpush1.xpose.msra.mxu0 0.0
    %4293 = vmatprep.subr.mxu0 0.0
    %4294 = vmatpush1.xpose.msra.mxu0 0.0
    %4295 = vmatprep.subr.mxu0 0.0
    %4296 = vmatpush1.xpose.msra.mxu0 0.0
    %4297 = vmatprep.subr.mxu0 0.0
    %4298 = vmatpush1.xpose.msra.mxu0 0.0
    %4299 = vmatprep.subr.mxu0 0.0
    %4300 = vmatpush1.xpose.msra.mxu0 0.0
    %4301 = vmatprep.subr.mxu0 0.0
    %4302 = vmatpush1.xpose.msra.mxu0 0.0
    %4303 = vmatprep.subr.mxu0 0.0
    %4304 = vmatpush1.xpose.msra.mxu0 0.0
    %4305 = vmatprep.subr.mxu0 0.0
    %4306 = vmatpush1.xpose.msra.mxu0 0.0
    %4307 = vmatprep.subr.mxu0 0.0
    %4308 = vmatpush1.xpose.msra.mxu0 0.0
    %4309 = vmatprep.subr.mxu0 0.0
    %4310 = vmatpush1.xpose.msra.mxu0 0.0
    %4311 = vmatprep.subr.mxu0 0.0
    %4312 = vmatpush1.xpose.msra.mxu0 0.0
    %4313 = vmatprep.mubr.f32.mxu0 0.0
    %4314 = vmatmul.mubr.f32.gmra.mrb[0].mxu0 %v4245
    %v4315 = vpop.f32.mrb[0].mxu0
    %v4316 = vadd.f32 0.0, %v4315
    %v4317 = vpop.f32.mrb[0].mxu0
    %4318 = vdwg.mxu0
    %v4319 = vmul.f32 %v4316, 0.35355338
    %v4320 = vadd.f32 %v4319, %v3969
    %v4321 = vsel %vm3168, %v4320, -inf
    %4322 = vmax.xlane.f32.xlu0 %v4321
    %v4323 = vpop.xlane.xlu0 %4322
    %v4324 = vsub.f32 %v4320, %v4323
    %v4325 = vmul.f32 %v4324, 1.442695
    %v4326 = vpow.pop %v4325
    %v4327 = vsel %vm3168, %v4326, 0.0
    %4328 = vadd.xlane.f32.xlu0 %v4327
    %v4329 = vpop.xlane.xlu0 %4328
    %v4330 = vrcp.pop %v4329
    %v4331 = vmul.f32 %v4326, %v4330
    %v4332 = vadd.f32 %v4157, %v4331
    %4333 = vrot.lane.b32.xlu0 %v3157, 48
    %v4334 = vpop.permute.xlu0 %4333
    %v4337 = vsel %vm3168, %v4331, 0
    %4339 = vmatprep.subr.mxu0 0.0
    %4340 = vmatpush1.msra.mxu0 %v4334
    %4341 = vmatprep.subr.mxu0 0.0
    %4342 = vmatpush1.msra.mxu0 0.0
    %4343 = vmatprep.subr.mxu0 0.0
    %4344 = vmatpush1.msra.mxu0 0.0
    %4345 = vmatprep.subr.mxu0 0.0
    %4346 = vmatpush1.msra.mxu0 0.0
    %4347 = vmatprep.subr.mxu0 0.0
    %4348 = vmatpush1.msra.mxu0 0.0
    %4349 = vmatprep.subr.mxu0 0.0
    %4350 = vmatpush1.msra.mxu0 0.0
    %4351 = vmatprep.subr.mxu0 0.0
    %4352 = vmatpush1.msra.mxu0 0.0
    %4353 = vmatprep.subr.mxu0 0.0
    %4354 = vmatpush1.msra.mxu0 0.0
    %4355 = vmatprep.subr.mxu0 0.0
    %4356 = vmatpush1.msra.mxu0 0.0
    %4357 = vmatprep.subr.mxu0 0.0
    %4358 = vmatpush1.msra.mxu0 0.0
    %4359 = vmatprep.subr.mxu0 0.0
    %4360 = vmatpush1.msra.mxu0 0.0
    %4361 = vmatprep.subr.mxu0 0.0
    %4362 = vmatpush1.msra.mxu0 0.0
    %4363 = vmatprep.subr.mxu0 0.0
    %4364 = vmatpush1.msra.mxu0 0.0
    %4365 = vmatprep.subr.mxu0 0.0
    %4366 = vmatpush1.msra.mxu0 0.0
    %4367 = vmatprep.subr.mxu0 0.0
    %4368 = vmatpush1.msra.mxu0 0.0
    %4369 = vmatprep.subr.mxu0 0.0
    %4370 = vmatpush1.msra.mxu0 0.0
    %4371 = vmatprep.subr.mxu0 0.0
    %4372 = vmatpush1.msra.mxu0 0.0
    %4373 = vmatprep.subr.mxu0 0.0
    %4374 = vmatpush1.msra.mxu0 0.0
    %4375 = vmatprep.subr.mxu0 0.0
    %4376 = vmatpush1.msra.mxu0 0.0
    %4377 = vmatprep.subr.mxu0 0.0
    %4378 = vmatpush1.msra.mxu0 0.0
    %4379 = vmatprep.subr.mxu0 0.0
    %4380 = vmatpush1.msra.mxu0 0.0
    %4381 = vmatprep.subr.mxu0 0.0
    %4382 = vmatpush1.msra.mxu0 0.0
    %4383 = vmatprep.subr.mxu0 0.0
    %4384 = vmatpush1.msra.mxu0 0.0
    %4385 = vmatprep.subr.mxu0 0.0
    %4386 = vmatpush1.msra.mxu0 0.0
    %4387 = vmatprep.subr.mxu0 0.0
    %4388 = vmatpush1.msra.mxu0 0.0
    %4389 = vmatprep.subr.mxu0 0.0
    %4390 = vmatpush1.msra.mxu0 0.0
    %4391 = vmatprep.subr.mxu0 0.0
    %4392 = vmatpush1.msra.mxu0 0.0
    %4393 = vmatprep.subr.mxu0 0.0
    %4394 = vmatpush1.msra.mxu0 0.0
    %4395 = vmatprep.subr.mxu0 0.0
    %4396 = vmatpush1.msra.mxu0 0.0
    %4397 = vmatprep.subr.mxu0 0.0
    %4398 = vmatpush1.msra.mxu0 0.0
    %4399 = vmatprep.subr.mxu0 0.0
    %4400 = vmatpush1.msra.mxu0 0.0
    %4401 = vmatprep.subr.mxu0 0.0
    %4402 = vmatpush1.msra.mxu0 0.0
    %4403 = vmatprep.mubr.f32.mxu0 0.0
    %4404 = vmatmul.mubr.f32.gmra.mrb[0].mxu0 %v4337
    %v4405 = vpop.f32.mrb[0].mxu0
    %v4406 = vadd.f32 0.0, %v4405
    %v4407 = vpop.f32.mrb[0].mxu0
    %4408 = vdwg.mxu0
    %v4409 = vsel %vm3168, %v4406, 0.0
    %v4410 = vrot.slane %v4409, 4
    %v4411 = vadd.f32 %v4409, %v4410
    %v4412 = vrot.slane %v4411, 2
    %v4413 = vadd.f32 %v4411, %v4412
    %v4414 = vrot.slane %v4413, 1
    %v4415 = vadd.f32 %v4413, %v4414
    %4416 = vrot.lane.b32.xlu0 %v3157, 104
    %v4417 = vpop.permute.xlu0 %4416
    %4418 = vrot.lane.b32.xlu0 %v3157, 72
    %v4419 = vpop.permute.xlu0 %4418
    %v4420 = vsel %vm3168, %v4417, 0
    %v4422 = vsel %vm3168, %v4419, 0
    %4424 = vmatprep.subr.mxu0 0.0
    %4425 = vmatpush1.xpose.msra.mxu0 %v4422
    %4426 = vmatprep.subr.mxu0 0.0
    %4427 = vmatpush1.xpose.msra.mxu0 0.0
    %4428 = vmatprep.subr.mxu0 0.0
    %4429 = vmatpush1.xpose.msra.mxu0 0.0
    %4430 = vmatprep.subr.mxu0 0.0
    %4431 = vmatpush1.xpose.msra.mxu0 0.0
    %4432 = vmatprep.subr.mxu0 0.0
    %4433 = vmatpush1.xpose.msra.mxu0 0.0
    %4434 = vmatprep.subr.mxu0 0.0
    %4435 = vmatpush1.xpose.msra.mxu0 0.0
    %4436 = vmatprep.subr.mxu0 0.0
    %4437 = vmatpush1.xpose.msra.mxu0 0.0
    %4438 = vmatprep.subr.mxu0 0.0
    %4439 = vmatpush1.xpose.msra.mxu0 0.0
    %4440 = vmatprep.subr.mxu0 0.0
    %4441 = vmatpush1.xpose.msra.mxu0 0.0
    %4442 = vmatprep.subr.mxu0 0.0
    %4443 = vmatpush1.xpose.msra.mxu0 0.0
    %4444 = vmatprep.subr.mxu0 0.0
    %4445 = vmatpush1.xpose.msra.mxu0 0.0
    %4446 = vmatprep.subr.mxu0 0.0
    %4447 = vmatpush1.xpose.msra.mxu0 0.0
    %4448 = vmatprep.subr.mxu0 0.0
    %4449 = vmatpush1.xpose.msra.mxu0 0.0
    %4450 = vmatprep.subr.mxu0 0.0
    %4451 = vmatpush1.xpose.msra.mxu0 0.0
    %4452 = vmatprep.subr.mxu0 0.0
    %4453 = vmatpush1.xpose.msra.mxu0 0.0
    %4454 = vmatprep.subr.mxu0 0.0
    %4455 = vmatpush1.xpose.msra.mxu0 0.0
    %4456 = vmatprep.subr.mxu0 0.0
    %4457 = vmatpush1.xpose.msra.mxu0 0.0
    %4458 = vmatprep.subr.mxu0 0.0
    %4459 = vmatpush1.xpose.msra.mxu0 0.0
    %4460 = vmatprep.subr.mxu0 0.0
    %4461 = vmatpush1.xpose.msra.mxu0 0.0
    %4462 = vmatprep.subr.mxu0 0.0
    %4463 = vmatpush1.xpose.msra.mxu0 0.0
    %4464 = vmatprep.subr.mxu0 0.0
    %4465 = vmatpush1.xpose.msra.mxu0 0.0
    %4466 = vmatprep.subr.mxu0 0.0
    %4467 = vmatpush1.xpose.msra.mxu0 0.0
    %4468 = vmatprep.subr.mxu0 0.0
    %4469 = vmatpush1.xpose.msra.mxu0 0.0
    %4470 = vmatprep.subr.mxu0 0.0
    %4471 = vmatpush1.xpose.msra.mxu0 0.0
    %4472 = vmatprep.subr.mxu0 0.0
    %4473 = vmatpush1.xpose.msra.mxu0 0.0
    %4474 = vmatprep.subr.mxu0 0.0
    %4475 = vmatpush1.xpose.msra.mxu0 0.0
    %4476 = vmatprep.subr.mxu0 0.0
    %4477 = vmatpush1.xpose.msra.mxu0 0.0
    %4478 = vmatprep.subr.mxu0 0.0
    %4479 = vmatpush1.xpose.msra.mxu0 0.0
    %4480 = vmatprep.subr.mxu0 0.0
    %4481 = vmatpush1.xpose.msra.mxu0 0.0
    %4482 = vmatprep.subr.mxu0 0.0
    %4483 = vmatpush1.xpose.msra.mxu0 0.0
    %4484 = vmatprep.subr.mxu0 0.0
    %4485 = vmatpush1.xpose.msra.mxu0 0.0
    %4486 = vmatprep.subr.mxu0 0.0
    %4487 = vmatpush1.xpose.msra.mxu0 0.0
    %4488 = vmatprep.mubr.f32.mxu0 0.0
    %4489 = vmatmul.mubr.f32.gmra.mrb[0].mxu0 %v4420
    %v4490 = vpop.f32.mrb[0].mxu0
    %v4491 = vadd.f32 0.0, %v4490
    %v4492 = vpop.f32.mrb[0].mxu0
    %4493 = vdwg.mxu0
    %v4494 = vmul.f32 %v4491, 0.35355338
    %v4495 = vadd.f32 %v4494, %v3969
    %v4496 = vsel %vm3168, %v4495, -inf
    %4497 = vmax.xlane.f32.xlu0 %v4496
    %v4498 = vpop.xlane.xlu0 %4497
    %v4499 = vsub.f32 %v4495, %v4498
    %v4500 = vmul.f32 %v4499, 1.442695
    %v4501 = vpow.pop %v4500
    %v4502 = vsel %vm3168, %v4501, 0.0
    %4503 = vadd.xlane.f32.xlu0 %v4502
    %v4504 = vpop.xlane.xlu0 %4503
    %v4505 = vrcp.pop %v4504
    %v4506 = vmul.f32 %v4501, %v4505
    %v4507 = vadd.f32 %v4332, %v4506
    %4508 = vrot.lane.b32.xlu0 %v3157, 40
    %v4509 = vpop.permute.xlu0 %4508
    %v4512 = vsel %vm3168, %v4506, 0
    %4514 = vmatprep.subr.mxu0 0.0
    %4515 = vmatpush1.msra.mxu0 %v4509
    %4516 = vmatprep.subr.mxu0 0.0
    %4517 = vmatpush1.msra.mxu0 0.0
    %4518 = vmatprep.subr.mxu0 0.0
    %4519 = vmatpush1.msra.mxu0 0.0
    %4520 = vmatprep.subr.mxu0 0.0
    %4521 = vmatpush1.msra.mxu0 0.0
    %4522 = vmatprep.subr.mxu0 0.0
    %4523 = vmatpush1.msra.mxu0 0.0
    %4524 = vmatprep.subr.mxu0 0.0
    %4525 = vmatpush1.msra.mxu0 0.0
    %4526 = vmatprep.subr.mxu0 0.0
    %4527 = vmatpush1.msra.mxu0 0.0
    %4528 = vmatprep.subr.mxu0 0.0
    %4529 = vmatpush1.msra.mxu0 0.0
    %4530 = vmatprep.subr.mxu0 0.0
    %4531 = vmatpush1.msra.mxu0 0.0
    %4532 = vmatprep.subr.mxu0 0.0
    %4533 = vmatpush1.msra.mxu0 0.0
    %4534 = vmatprep.subr.mxu0 0.0
    %4535 = vmatpush1.msra.mxu0 0.0
    %4536 = vmatprep.subr.mxu0 0.0
    %4537 = vmatpush1.msra.mxu0 0.0
    %4538 = vmatprep.subr.mxu0 0.0
    %4539 = vmatpush1.msra.mxu0 0.0
    %4540 = vmatprep.subr.mxu0 0.0
    %4541 = vmatpush1.msra.mxu0 0.0
    %4542 = vmatprep.subr.mxu0 0.0
    %4543 = vmatpush1.msra.mxu0 0.0
    %4544 = vmatprep.subr.mxu0 0.0
    %4545 = vmatpush1.msra.mxu0 0.0
    %4546 = vmatprep.subr.mxu0 0.0
    %4547 = vmatpush1.msra.mxu0 0.0
    %4548 = vmatprep.subr.mxu0 0.0
    %4549 = vmatpush1.msra.mxu0 0.0
    %4550 = vmatprep.subr.mxu0 0.0
    %4551 = vmatpush1.msra.mxu0 0.0
    %4552 = vmatprep.subr.mxu0 0.0
    %4553 = vmatpush1.msra.mxu0 0.0
    %4554 = vmatprep.subr.mxu0 0.0
    %4555 = vmatpush1.msra.mxu0 0.0
    %4556 = vmatprep.subr.mxu0 0.0
    %4557 = vmatpush1.msra.mxu0 0.0
    %4558 = vmatprep.subr.mxu0 0.0
    %4559 = vmatpush1.msra.mxu0 0.0
    %4560 = vmatprep.subr.mxu0 0.0
    %4561 = vmatpush1.msra.mxu0 0.0
    %4562 = vmatprep.subr.mxu0 0.0
    %4563 = vmatpush1.msra.mxu0 0.0
    %4564 = vmatprep.subr.mxu0 0.0
    %4565 = vmatpush1.msra.mxu0 0.0
    %4566 = vmatprep.subr.mxu0 0.0
    %4567 = vmatpush1.msra.mxu0 0.0
    %4568 = vmatprep.subr.mxu0 0.0
    %4569 = vmatpush1.msra.mxu0 0.0
    %4570 = vmatprep.subr.mxu0 0.0
    %4571 = vmatpush1.msra.mxu0 0.0
    %4572 = vmatprep.subr.mxu0 0.0
    %4573 = vmatpush1.msra.mxu0 0.0
    %4574 = vmatprep.subr.mxu0 0.0
    %4575 = vmatpush1.msra.mxu0 0.0
    %4576 = vmatprep.subr.mxu0 0.0
    %4577 = vmatpush1.msra.mxu0 0.0
    %4578 = vmatprep.mubr.f32.mxu0 0.0
    %4579 = vmatmul.mubr.f32.gmra.mrb[0].mxu0 %v4512
    %v4580 = vpop.f32.mrb[0].mxu0
    %v4581 = vadd.f32 0.0, %v4580
    %v4582 = vpop.f32.mrb[0].mxu0
    %4583 = vdwg.mxu0
    %v4584 = vsel %vm3168, %v4581, 0.0
    %v4585 = vrot.slane %v4584, 4
    %v4586 = vadd.f32 %v4584, %v4585
    %v4587 = vrot.slane %v4586, 2
    %v4588 = vadd.f32 %v4586, %v4587
    %v4589 = vrot.slane %v4588, 1
    %v4590 = vadd.f32 %v4588, %v4589
    %v4591 = vmul.f32 %v4507, 0.25
    %s4592 = scalar_lea.vmem [#allocation4], 8
    %4593 = vst.msk [vmem:[%s4592] sm:$0xff] %vm3168, %v4591
    %4595 = vrot.lane.b32.xlu0 %v4240, 8
    %v4596 = vpop.permute.xlu0 %4595
    %4599 = vrot.lane.b32.xlu0 %v4415, 16
    %v4600 = vpop.permute.xlu0 %4599
    %4603 = vrot.lane.b32.xlu0 %v4590, 24
    %v4604 = vpop.permute.xlu0 %4603
    %v4606 = vsel %vm3168, %v4065, %v4596
    %v4607 = vsel %vm3884, %v4606, %v4600
    %v4608 = vsel %vm3886, %v4607, %v4604
    %v4610 = vrot.slane %v4608, 7
    %v4612 = vsel %vm3043, %v3887, %v4610
    %v4613 = vld [vmem:[%s14] sm:$0x1]
    %v4614 = vmul.f32 %v4613, 8.0
    %v4616 = vlaneseq
    %v4617 = vshrl.u32 %v4616, 7
    %v4618 = vsub.s32 0, %v4617
    %v4619 = vrot.slane %v4614, %v4618
    %v4622 = vsel %vm710, %v4612, 0
    %4624 = vmatprep.subr.mxu0 0.0
    %4625 = vmatpush1.msra.mxu0 %v3160
    %4626 = vmatprep.subr.mxu0 0.0
    %4627 = vmatpush1.msra.mxu0 %v3161
    %4628 = vmatprep.subr.mxu0 0.0
    %4629 = vmatpush1.msra.mxu0 %v3162
    %4630 = vmatprep.subr.mxu0 0.0
    %4631 = vmatpush1.msra.mxu0 %v3163
    %4632 = vmatprep.subr.mxu0 0.0
    %4633 = vmatpush1.msra.mxu0 0.0
    %4634 = vmatprep.subr.mxu0 0.0
    %4635 = vmatpush1.msra.mxu0 0.0
    %4636 = vmatprep.subr.mxu0 0.0
    %4637 = vmatpush1.msra.mxu0 0.0
    %4638 = vmatprep.subr.mxu0 0.0
    %4639 = vmatpush1.msra.mxu0 0.0
    %4640 = vmatprep.subr.mxu0 0.0
    %4641 = vmatpush1.msra.mxu0 0.0
    %4642 = vmatprep.subr.mxu0 0.0
    %4643 = vmatpush1.msra.mxu0 0.0
    %4644 = vmatprep.subr.mxu0 0.0
    %4645 = vmatpush1.msra.mxu0 0.0
    %4646 = vmatprep.subr.mxu0 0.0
    %4647 = vmatpush1.msra.mxu0 0.0
    %4648 = vmatprep.subr.mxu0 0.0
    %4649 = vmatpush1.msra.mxu0 0.0
    %4650 = vmatprep.subr.mxu0 0.0
    %4651 = vmatpush1.msra.mxu0 0.0
    %4652 = vmatprep.subr.mxu0 0.0
    %4653 = vmatpush1.msra.mxu0 0.0
    %4654 = vmatprep.subr.mxu0 0.0
    %4655 = vmatpush1.msra.mxu0 0.0
    %4656 = vmatprep.subr.mxu0 0.0
    %4657 = vmatpush1.msra.mxu0 0.0
    %4658 = vmatprep.subr.mxu0 0.0
    %4659 = vmatpush1.msra.mxu0 0.0
    %4660 = vmatprep.subr.mxu0 0.0
    %4661 = vmatpush1.msra.mxu0 0.0
    %4662 = vmatprep.subr.mxu0 0.0
    %4663 = vmatpush1.msra.mxu0 0.0
    %4664 = vmatprep.subr.mxu0 0.0
    %4665 = vmatpush1.msra.mxu0 0.0
    %4666 = vmatprep.subr.mxu0 0.0
    %4667 = vmatpush1.msra.mxu0 0.0
    %4668 = vmatprep.subr.mxu0 0.0
    %4669 = vmatpush1.msra.mxu0 0.0
    %4670 = vmatprep.subr.mxu0 0.0
    %4671 = vmatpush1.msra.mxu0 0.0
    %4672 = vmatprep.subr.mxu0 0.0
    %4673 = vmatpush1.msra.mxu0 0.0
    %4674 = vmatprep.subr.mxu0 0.0
    %4675 = vmatpush1.msra.mxu0 0.0
    %4676 = vmatprep.subr.mxu0 0.0
    %4677 = vmatpush1.msra.mxu0 0.0
    %4678 = vmatprep.subr.mxu0 0.0
    %4679 = vmatpush1.msra.mxu0 0.0
    %4680 = vmatprep.subr.mxu0 0.0
    %4681 = vmatpush1.msra.mxu0 0.0
    %4682 = vmatprep.subr.mxu0 0.0
    %4683 = vmatpush1.msra.mxu0 0.0
    %4684 = vmatprep.subr.mxu0 0.0
    %4685 = vmatpush1.msra.mxu0 0.0
    %4686 = vmatprep.subr.mxu0 0.0
    %4687 = vmatpush1.msra.mxu0 0.0
    %4688 = vmatprep.mubr.f32.mxu0 0.0
    %4689 = vmatmul.mubr.f32.gmra.mrb[0].mxu0 %v4622
    %v4690 = vpop.f32.mrb[0].mxu0
    %v4691 = vadd.f32 %v4619, %v4690
    %v4692 = vpop.f32.mrb[0].mxu0
    %4693 = vdwg.mxu0
    %v4694 = vmax.f32 %v4691, 0.0
    %vm4695 = vcmask 254976
    %4696 = vst.msk [vmem:[#allocation2] sm:$0x3] %vm4695, %v4694
    // Predicated region
    $region66: #{sk_we_forward.1} parent=1 // pred_check
      _
    $region67: #{sk_we_forward.1} parent=1 // pred_check_branch
      %4698 = sbr.rel (0) target = $region69
    $region68: #{sk_we_forward.1} parent=1 // pred_region
      %s4700 = ssub.s32 32, 32
      %4701 = vsyncadd [#allocation3], %s4700
      %s4703 = sshll.u32 [#allocation2], 4
      %s4704 = int_to_ptr.vmem [resolvable:$true] %s4703
      %4706 = dma.vmem_to_hbm [thread:$0]  %s4704, 32, %s16, [#allocation3]
    $region69: #{sk_we_forward.1} parent=1 // pred_fallthru
      _
    // Predicated region
    $region70: #{sk_we_forward.1} parent=1 // pred_check
      _
    $region71: #{sk_we_forward.1} parent=1 // pred_check_branch
      %4708 = sbr.rel (0) target = $region73
    $region72: #{sk_we_forward.1} parent=1 // pred_region
      %s4710 = ssub.s32 256, 256
      %4711 = vsyncadd [#allocation5], %s4710
      %s4712 = sshll.u32 [#allocation4], 4
      %s4713 = int_to_ptr.vmem [resolvable:$true] %s4712
      %4718 = dma.vmem_to_hbm [thread:$0]  %s4713, 256, %s17, [#allocation5], 128, 128, 8
    $region73: #{sk_we_forward.1} parent=1 // pred_fallthru
      _
    // Predicated region
    $region74: #{sk_we_forward.1} parent=1 // pred_check
      _
    $region75: #{sk_we_forward.1} parent=1 // pred_check_branch
      %4720 = sbr.rel (0) target = $region77
    $region76: #{sk_we_forward.1} parent=1 // pred_region
      %4721 = dma.done [#allocation3], 32
    $region77: #{sk_we_forward.1} parent=1 // pred_fallthru
      _
    // Predicated region
    $region78: #{sk_we_forward.1} parent=1 // pred_check
      _
    $region79: #{sk_we_forward.1} parent=1 // pred_check_branch
      %4723 = sbr.rel (0) target = $region81
    $region80: #{sk_we_forward.1} parent=1 // pred_region
      %4724 = dma.done [#allocation5], 256
    $region81: #{sk_we_forward.1} parent=1 // pred_fallthru
      _
    %4725 = vsyncpa [#allocation3], 1
    %4726 = vsyncpa [#allocation5], 1

</llo_original>
